<compile_context>
chip_gen: v6e
topology: v6e:2x2x1
jax: 0.10.0
libtpu: 0.0.40
codegen_flags: <defaults>
</compile_context>

<pallas_src>
import functools

import jax
import jax.numpy as jnp
from jax.experimental import pallas as pl
from jax.experimental.pallas import tpu as pltpu

# --- model hyper-params (small, deterministic, consistent with the module) ----
GCN_DEPTH = 2
ALPHA = 0.1

BATCH = 2
NODE = 16
IN_CH = 4
TIME_CH = 4
HIDDEN = 32
NUM_FOR_PREDICT = 4        # seq_length
NUM_OF_WEEKS = NUM_OF_DAYS = NUM_OF_HOURS = 1
TIME_LEN = (NUM_OF_WEEKS + NUM_OF_DAYS + NUM_OF_HOURS) * NUM_FOR_PREDICT  # 12


# ----------------------------- Pallas kernel ---------------------------------
def encoder_kernel(x_ref, m1_ref, m2_ref, wx_ref, whzr_ref, wch_ref,
                   bzrc_ref, wobd_ref, bo_ref, out_ref, hid_ref):
    """Single program: full (stacked) batch and the full time recurrence.

    x_ref    : (B*N, seq*Fp)   lane-dense per-step [feat|time] input slab
    m1_ref   : (B*N, B*N)      block-diag  a*I + (1-a)*A
    m2_ref   : (B*N, B*N)      block-diag  a*I + (1-a)*A@M1
    wx_ref   : ((D+1)*Fp, 3H)  fused x-hop -> [z|r|c] projection
    whzr_ref : ((D+1)*H, 2H)   fused h-hop -> [z|r] projection
    wch_ref  : ((D+1)*H, H)    fused (r*h)-hop -> candidate projection
    bzrc_ref : (1, 3H)         [bz|br|bc]
    wobd_ref : (seq*H, seq*H)  block-diag(wo) x seq, bo_ref : (1, seq*H)
    out_ref  : (B*N, seq*H)    relu(h @ wo + bo) slab
    hid_ref  : (B*N, seq*H)    hidden-state slab
    """
    bn = x_ref.shape[0]
    fp = wx_ref.shape[0] // (GCN_DEPTH + 1)
    seq = x_ref.shape[1] // fp
    hdim = wch_ref.shape[1]

    def dot(a, b):                       # MXU matmul, f32 accumulation
        return jnp.dot(a, b, preferred_element_type=jnp.float32)

    x = x_ref[...]
    m1 = m1_ref[...]
    m2 = m2_ref[...]
    wx = wx_ref[...]
    whzr = whzr_ref[...]
    wch = wch_ref[...]
    # bias broadcasts hoisted out of the loops (JAX does not CSE broadcasts)
    bzrc = jnp.broadcast_to(bzrc_ref[...], (bn, 3 * hdim))
    bo = jnp.broadcast_to(bo_ref[...], (bn, seq * hdim))

    # ---- prologue: all x-dependent work, off the serial recurrence chain ----
    # one propagation matmul per hop covers every timestep at once
    x1 = dot(m1, x)                                               # (B*N, seq*Fp)
    x2 = dot(m2, x)
    gx = []
    for t in range(seq):
        lo = t * fp
        xh = jnp.concatenate([x[:, lo:lo + fp], x1[:, lo:lo + fp],
                              x2[:, lo:lo + fp]], axis=1)         # (B*N, 3*Fp)
        gx.append(dot(xh, wx) + bzrc)                             # (B*N, 3H) = [z|r|c]

    # ---- serial recurrence (static trip count, fully unrolled) ---------------
    h = jnp.zeros((bn, hdim), jnp.float32)   # initHidden: zeros, no grad
    hids = []
    for t in range(seq):
        hh = jnp.concatenate([h, dot(m1, h), dot(m2, h)], axis=1)       # (B*N, 3H)
        zr = jax.nn.sigmoid(dot(hh, whzr) + gx[t][:, :2 * hdim])        # (B*N, 2H)
        z = zr[:, :hdim]
        r = zr[:, hdim:]
        rh = r * h
        rhh = jnp.concatenate([rh, dot(m1, rh), dot(m2, rh)], axis=1)   # (B*N, 3H)
        c = jnp.tanh(dot(rhh, wch) + gx[t][:, 2 * hdim:])
        h = z * h + (1.0 - z) * c
        hids.append(h)

    # ---- epilogue: one lane-dense output projection + unmasked stores --------
    hid_slab = jnp.concatenate(hids, axis=1)                      # (B*N, seq*H = 128)
    # the torch Encoder applies F.relu(cur_out, inplace=True) BEFORE appending,
    # so the returned outputs are relu'd
    out = jnp.maximum(dot(hid_slab, wobd_ref[...]) + bo, 0.0)
    out_ref[...] = out.astype(out_ref.dtype)
    hid_ref[...] = hid_slab.astype(hid_ref.dtype)


# ------------------------------- wrapper --------------------------------------
def _per_step_slab(a, seq):
    """[B, N, 3*seq, C] -> [seq, B, N, 3*C] matching the torch.cat of
    week[:,:,i], day[:,:,i], hour[:,:,i] per step i (glue, plain JAX)."""
    b, n, _, c = a.shape
    ar = a.reshape(b, n, 3, seq, c)
    ar = jnp.transpose(ar, (3, 0, 1, 2, 4))
    return ar.reshape(seq, b, n, 3 * c)


def _pack_gate_weights(params, fx, fx_pad):
    """Fuse gates and mix-prop hops into three stacked weight matrices.

    w_x   rows per hop k: [ wzx[k]|wrx[k]|wcx[k] ] (fx rows) + zero pad rows
    w_hzr rows per hop k: [ wzh[k]|wrh[k] ]        (H rows)   -- no dead c block
    w_ch  rows per hop k: [ wch[k] ]               (H rows)
    """
    hdim = params['wo'].shape[0]
    xblocks, hblocks = [], []
    for k in range(GCN_DEPTH + 1):
        bx = jnp.concatenate([params['wzx'][k], params['wrx'][k],
                              params['wcx'][k]], axis=1)                 # (fx, 3H)
        xblocks.append(jnp.pad(bx, ((0, fx_pad - fx), (0, 0))))          # (fx_pad, 3H)
        hblocks.append(jnp.concatenate([params['wzh'][k], params['wrh'][k]],
                                       axis=1))                          # (H, 2H)
    w_x = jnp.concatenate(xblocks, axis=0)                    # ((D+1)*fx_pad, 3H)
    w_hzr = jnp.concatenate(hblocks, axis=0)                  # ((D+1)*H, 2H)
    w_ch = params['wch'].reshape((GCN_DEPTH + 1) * hdim, hdim)
    b_zrc = jnp.concatenate([params['bz'], params['br'], params['bc']], axis=1)
    return w_x, w_hzr, w_ch, b_zrc


def encoder_forward(x, x_time, seq_length, params, adj):
    b, n, _, _ = x.shape
    hidden = params['wo'].shape[0]

    # host-side layout plumbing (free): per-step [week|day|hour] feature+time
    # slices, feature dim zero-padded to a 32-lane multiple, stacked lane-dense
    # as (B*N, seq*fx_pad) so every in-kernel slice sits on 32-lane offsets.
    xs = _per_step_slab(x, seq_length)
    ts = _per_step_slab(x_time, seq_length)
    xt = jnp.concatenate([xs, ts], axis=-1)                    # (seq, B, N, fx)
    fx = xt.shape[-1]
    fx_pad = ((fx + 31) // 32) * 32
    xt = jnp.pad(xt, ((0, 0), (0, 0), (0, 0), (0, fx_pad - fx)))
    x_slab = jnp.transpose(xt, (1, 2, 0, 3)).reshape(b * n, seq_length * fx_pad)

    # precomputed mix-prop propagation matrices, block-diag over the stacked batch
    eye_n = jnp.eye(n, dtype=jnp.float32)
    m1 = ALPHA * eye_n + (1.0 - ALPHA) * adj
    m2 = ALPHA * eye_n + (1.0 - ALPHA) * (adj @ m1)
    eye_b = jnp.eye(b, dtype=jnp.float32)
    m1_bd = jnp.kron(eye_b, m1)                                # (B*N, B*N)
    m2_bd = jnp.kron(eye_b, m2)

    w_x, w_hzr, w_ch, b_zrc = _pack_gate_weights(params, fx, fx_pad)
    wo_bd = jnp.kron(jnp.eye(seq_length, dtype=jnp.float32), params['wo'])
    bo_tiled = jnp.tile(params['bo'], (1, seq_length))         # (1, seq*H)

    out_shapes = (
        jax.ShapeDtypeStruct((b * n, seq_length * hidden), jnp.float32),
        jax.ShapeDtypeStruct((b * n, seq_length * hidden), jnp.float32),
    )
    vmem = pl.BlockSpec(memory_space=pltpu.MemorySpace.VMEM)   # full arrays, VMEM

    out_slab, hid_slab = pl.pallas_call(
        encoder_kernel,
        out_shape=out_shapes,
        in_specs=[vmem] * 9,
        out_specs=(vmem, vmem),
    )(x_slab, m1_bd, m2_bd, w_x, w_hzr, w_ch, b_zrc, wo_bd, bo_tiled)

    # match PyTorch Encoder return shapes:
    #   outputs: [batch, node, num_pred, hidden]
    #   hiddens: [batch, RNN_layer(=1), node, num_pred, hidden]
    outputs = out_slab.reshape(b, n, seq_length, hidden)
    hiddens = hid_slab.reshape(b, n, seq_length, hidden)[:, None]
    return outputs, hiddens


# -------------------------- plain-JAX reference --------------------------------
def encoder_reference(x, x_time, seq_length, params, adj):
    hi = jax.lax.Precision.HIGHEST

    def mm(a, b):
        return jnp.matmul(a, b, precision=hi)

    xt = jnp.concatenate([_per_step_slab(x, seq_length),
                          _per_step_slab(x_time, seq_length)], axis=-1)
    seq, b, n, _ = xt.shape
    hdim = params['wo'].shape[0]

    def mixprop(v, w):
        hk = v
        acc = mm(v, w[0])
        for k in range(1, GCN_DEPTH + 1):
            hk = ALPHA * v + (1.0 - ALPHA) * jnp.einsum('nm,bmd->bnd', adj, hk,
                                                        precision=hi)
            acc = acc + mm(hk, w[k])
        return acc

    h = jnp.zeros((b, n, hdim), jnp.float32)
    outs, hids = [], []
    for t in range(seq):
        xcur = xt[t]
        z = jax.nn.sigmoid(mixprop(xcur, params['wzx']) + mixprop(h, params['wzh']) + params['bz'])
        r = jax.nn.sigmoid(mixprop(xcur, params['wrx']) + mixprop(h, params['wrh']) + params['br'])
        c = jnp.tanh(mixprop(xcur, params['wcx']) + mixprop(r * h, params['wch']) + params['bc'])
        h = z * h + (1.0 - z) * c
        outs.append(jnp.maximum(mm(h, params['wo']) + params['bo'], 0.0))
        hids.append(h)
    outputs = jnp.stack(outs, axis=2)                  # (B, N, seq, H)
    hiddens = jnp.stack(hids, axis=2)[:, None]         # (B, 1, N, seq, H)
    return outputs, hiddens


# ------------------------------ param init -------------------------------------
def init_params(key, in_ch, time_ch, hidden):
    fx = 3 * (in_ch + time_ch)
    k = jax.random.split(key, 12)
    scale = 0.1

    def w(kk, shape):
        return (scale * jax.random.normal(kk, shape)).astype(jnp.float32)

    return {
        'wzx': w(k[0], (GCN_DEPTH + 1, fx, hidden)),
        'wzh': w(k[1], (GCN_DEPTH + 1, hidden, hidden)),
        'bz':  w(k[2], (1, hidden)),
        'wrx': w(k[3], (GCN_DEPTH + 1, fx, hidden)),
        'wrh': w(k[4], (GCN_DEPTH + 1, hidden, hidden)),
        'br':  w(k[5], (1, hidden)),
        'wcx': w(k[6], (GCN_DEPTH + 1, fx, hidden)),
        'wch': w(k[7], (GCN_DEPTH + 1, hidden, hidden)),
        'bc':  w(k[8], (1, hidden)),
        'wo':  w(k[9], (hidden, hidden)),
        'bo':  w(k[10], (1, hidden)),
    }


if __name__ == "__main__":
    key = jax.random.PRNGKey(0)
    k_x, k_t, k_a, k_p = jax.random.split(key, 4)

    x = jax.random.normal(k_x, (BATCH, NODE, TIME_LEN, IN_CH), dtype=jnp.float32)
    x_time = jax.random.normal(k_t, (BATCH, NODE, TIME_LEN, TIME_CH), dtype=jnp.float32)

    # deterministic row-normalised static adjacency (static_norm_adjs[0])
    a_raw = jax.random.uniform(k_a, (NODE, NODE), dtype=jnp.float32) + 0.01
    adj = a_raw / jnp.sum(a_raw, axis=-1, keepdims=True)

    params = init_params(k_p, IN_CH, TIME_CH, HIDDEN)

    fwd = jax.jit(functools.partial(encoder_forward, seq_length=NUM_FOR_PREDICT,
                                    params=params, adj=adj))
    outputs, hiddens = fwd(x, x_time)
    jax.block_until_ready((outputs, hiddens))

    # correctness check against a pure-JAX (HIGHEST-precision) reference of the
    # same cell; 1e-3 tolerance covers MXU multi-pass f32 vs HIGHEST differences
    ref_out, ref_hid = encoder_reference(x, x_time, NUM_FOR_PREDICT, params, adj)
    assert outputs.shape == (BATCH, NODE, NUM_FOR_PREDICT, HIDDEN)
    assert hiddens.shape == (BATCH, 1, NODE, NUM_FOR_PREDICT, HIDDEN)
    assert jnp.allclose(outputs, ref_out, rtol=1e-3, atol=1e-3)
    assert jnp.allclose(hiddens, ref_hid, rtol=1e-3, atol=1e-3)

    print("KERNEL_OK")
</pallas_src>

<mosaic_0001>
module attributes {stable_mosaic.version = 11 : i64} {
  func.func @encoder_kernel(%arg0: memref<32x128xf32, #tpu.memory_space<vmem>>, %arg1: memref<32x32xf32, #tpu.memory_space<vmem>>, %arg2: memref<32x32xf32, #tpu.memory_space<vmem>>, %arg3: memref<96x96xf32, #tpu.memory_space<vmem>>, %arg4: memref<96x64xf32, #tpu.memory_space<vmem>>, %arg5: memref<96x32xf32, #tpu.memory_space<vmem>>, %arg6: memref<1x96xf32, #tpu.memory_space<vmem>>, %arg7: memref<128x128xf32, #tpu.memory_space<vmem>>, %arg8: memref<1x128xf32, #tpu.memory_space<vmem>>, %arg9: memref<32x128xf32, #tpu.memory_space<vmem>>, %arg10: memref<32x128xf32, #tpu.memory_space<vmem>>) attributes {dimension_semantics = [], scalar_prefetch = 0 : i64, scratch_operands = 0 : i64, tpu.core_type = #tpu.core_type<tc>} {
    %c0 = arith.constant 0 : index
    %c0_0 = arith.constant 0 : index
    %0 = vector.load %arg0[%c0, %c0_0] : memref<32x128xf32, #tpu.memory_space<vmem>>, vector<32x128xf32>
    %c0_1 = arith.constant 0 : index
    %c0_2 = arith.constant 0 : index
    %1 = vector.load %arg1[%c0_1, %c0_2] : memref<32x32xf32, #tpu.memory_space<vmem>>, vector<32x32xf32>
    %c0_3 = arith.constant 0 : index
    %c0_4 = arith.constant 0 : index
    %2 = vector.load %arg2[%c0_3, %c0_4] : memref<32x32xf32, #tpu.memory_space<vmem>>, vector<32x32xf32>
    %c0_5 = arith.constant 0 : index
    %c0_6 = arith.constant 0 : index
    %3 = vector.load %arg3[%c0_5, %c0_6] : memref<96x96xf32, #tpu.memory_space<vmem>>, vector<96x96xf32>
    %c0_7 = arith.constant 0 : index
    %c0_8 = arith.constant 0 : index
    %4 = vector.load %arg4[%c0_7, %c0_8] : memref<96x64xf32, #tpu.memory_space<vmem>>, vector<96x64xf32>
    %c0_9 = arith.constant 0 : index
    %c0_10 = arith.constant 0 : index
    %5 = vector.load %arg5[%c0_9, %c0_10] : memref<96x32xf32, #tpu.memory_space<vmem>>, vector<96x32xf32>
    %c0_11 = arith.constant 0 : index
    %c0_12 = arith.constant 0 : index
    %6 = vector.load %arg6[%c0_11, %c0_12] : memref<1x96xf32, #tpu.memory_space<vmem>>, vector<1x96xf32>
    %7 = vector.shape_cast %6 : vector<1x96xf32> to vector<1x96xf32>
    %8 = vector.broadcast %7 : vector<1x96xf32> to vector<32x96xf32>
    %c0_13 = arith.constant 0 : index
    %c0_14 = arith.constant 0 : index
    %9 = vector.load %arg8[%c0_13, %c0_14] : memref<1x128xf32, #tpu.memory_space<vmem>>, vector<1x128xf32>
    %10 = vector.shape_cast %9 : vector<1x128xf32> to vector<1x128xf32>
    %11 = vector.broadcast %10 : vector<1x128xf32> to vector<32x128xf32>
    %cst = arith.constant dense<0.000000e+00> : vector<32x128xf32>
    %12 = tpu.matmul %1, %0, %cst {dimension_numbers = #tpu.dot_dimension_numbers<[1], [0], [0], [1], [0, 0, 1, 1], [], []>} : vector<32x32xf32>, vector<32x128xf32>, vector<32x128xf32> -> vector<32x128xf32>
    %cst_15 = arith.constant dense<0.000000e+00> : vector<32x128xf32>
    %13 = tpu.matmul %2, %0, %cst_15 {dimension_numbers = #tpu.dot_dimension_numbers<[1], [0], [0], [1], [0, 0, 1, 1], [], []>} : vector<32x32xf32>, vector<32x128xf32>, vector<32x128xf32> -> vector<32x128xf32>
    %14 = vector.extract_strided_slice %0 {offsets = [0, 0], sizes = [32, 32], strides = [1, 1]} : vector<32x128xf32> to vector<32x32xf32>
    %15 = vector.extract_strided_slice %12 {offsets = [0, 0], sizes = [32, 32], strides = [1, 1]} : vector<32x128xf32> to vector<32x32xf32>
    %16 = vector.extract_strided_slice %13 {offsets = [0, 0], sizes = [32, 32], strides = [1, 1]} : vector<32x128xf32> to vector<32x32xf32>
    %17 = tpu.concatenate %14, %15, %16 in 1 : vector<32x32xf32>, vector<32x32xf32>, vector<32x32xf32> -> vector<32x96xf32>
    %cst_16 = arith.constant dense<0.000000e+00> : vector<32x96xf32>
    %18 = tpu.matmul %17, %3, %cst_16 {dimension_numbers = #tpu.dot_dimension_numbers<[1], [0], [0], [1], [0, 0, 1, 1], [], []>} : vector<32x96xf32>, vector<96x96xf32>, vector<32x96xf32> -> vector<32x96xf32>
    %19 = arith.addf %18, %8 : vector<32x96xf32>
    %20 = vector.extract_strided_slice %0 {offsets = [0, 32], sizes = [32, 32], strides = [1, 1]} : vector<32x128xf32> to vector<32x32xf32>
    %21 = vector.extract_strided_slice %12 {offsets = [0, 32], sizes = [32, 32], strides = [1, 1]} : vector<32x128xf32> to vector<32x32xf32>
    %22 = vector.extract_strided_slice %13 {offsets = [0, 32], sizes = [32, 32], strides = [1, 1]} : vector<32x128xf32> to vector<32x32xf32>
    %23 = tpu.concatenate %20, %21, %22 in 1 : vector<32x32xf32>, vector<32x32xf32>, vector<32x32xf32> -> vector<32x96xf32>
    %cst_17 = arith.constant dense<0.000000e+00> : vector<32x96xf32>
    %24 = tpu.matmul %23, %3, %cst_17 {dimension_numbers = #tpu.dot_dimension_numbers<[1], [0], [0], [1], [0, 0, 1, 1], [], []>} : vector<32x96xf32>, vector<96x96xf32>, vector<32x96xf32> -> vector<32x96xf32>
    %25 = arith.addf %24, %8 : vector<32x96xf32>
    %26 = vector.extract_strided_slice %0 {offsets = [0, 64], sizes = [32, 32], strides = [1, 1]} : vector<32x128xf32> to vector<32x32xf32>
    %27 = vector.extract_strided_slice %12 {offsets = [0, 64], sizes = [32, 32], strides = [1, 1]} : vector<32x128xf32> to vector<32x32xf32>
    %28 = vector.extract_strided_slice %13 {offsets = [0, 64], sizes = [32, 32], strides = [1, 1]} : vector<32x128xf32> to vector<32x32xf32>
    %29 = tpu.concatenate %26, %27, %28 in 1 : vector<32x32xf32>, vector<32x32xf32>, vector<32x32xf32> -> vector<32x96xf32>
    %cst_18 = arith.constant dense<0.000000e+00> : vector<32x96xf32>
    %30 = tpu.matmul %29, %3, %cst_18 {dimension_numbers = #tpu.dot_dimension_numbers<[1], [0], [0], [1], [0, 0, 1, 1], [], []>} : vector<32x96xf32>, vector<96x96xf32>, vector<32x96xf32> -> vector<32x96xf32>
    %31 = arith.addf %30, %8 : vector<32x96xf32>
    %32 = vector.extract_strided_slice %0 {offsets = [0, 96], sizes = [32, 32], strides = [1, 1]} : vector<32x128xf32> to vector<32x32xf32>
    %33 = vector.extract_strided_slice %12 {offsets = [0, 96], sizes = [32, 32], strides = [1, 1]} : vector<32x128xf32> to vector<32x32xf32>
    %34 = vector.extract_strided_slice %13 {offsets = [0, 96], sizes = [32, 32], strides = [1, 1]} : vector<32x128xf32> to vector<32x32xf32>
    %35 = tpu.concatenate %32, %33, %34 in 1 : vector<32x32xf32>, vector<32x32xf32>, vector<32x32xf32> -> vector<32x96xf32>
    %cst_19 = arith.constant dense<0.000000e+00> : vector<32x96xf32>
    %36 = tpu.matmul %35, %3, %cst_19 {dimension_numbers = #tpu.dot_dimension_numbers<[1], [0], [0], [1], [0, 0, 1, 1], [], []>} : vector<32x96xf32>, vector<96x96xf32>, vector<32x96xf32> -> vector<32x96xf32>
    %37 = arith.addf %36, %8 : vector<32x96xf32>
    %cst_20 = arith.constant 0.000000e+00 : f32
    %38 = vector.broadcast %cst_20 : f32 to vector<32x32xf32>
    %cst_21 = arith.constant dense<0.000000e+00> : vector<32x32xf32>
    %39 = tpu.matmul %1, %38, %cst_21 {dimension_numbers = #tpu.dot_dimension_numbers<[1], [0], [0], [1], [0, 0, 1, 1], [], []>} : vector<32x32xf32>, vector<32x32xf32>, vector<32x32xf32> -> vector<32x32xf32>
    %cst_22 = arith.constant dense<0.000000e+00> : vector<32x32xf32>
    %40 = tpu.matmul %2, %38, %cst_22 {dimension_numbers = #tpu.dot_dimension_numbers<[1], [0], [0], [1], [0, 0, 1, 1], [], []>} : vector<32x32xf32>, vector<32x32xf32>, vector<32x32xf32> -> vector<32x32xf32>
    %41 = tpu.concatenate %38, %39, %40 in 1 : vector<32x32xf32>, vector<32x32xf32>, vector<32x32xf32> -> vector<32x96xf32>
    %cst_23 = arith.constant dense<0.000000e+00> : vector<32x64xf32>
    %42 = tpu.matmul %41, %4, %cst_23 {dimension_numbers = #tpu.dot_dimension_numbers<[1], [0], [0], [1], [0, 0, 1, 1], [], []>} : vector<32x96xf32>, vector<96x64xf32>, vector<32x64xf32> -> vector<32x64xf32>
    %43 = vector.extract_strided_slice %19 {offsets = [0, 0], sizes = [32, 64], strides = [1, 1]} : vector<32x96xf32> to vector<32x64xf32>
    %44 = arith.addf %42, %43 : vector<32x64xf32>
    %45 = arith.negf %44 : vector<32x64xf32>
    %46 = math.exp %45 : vector<32x64xf32>
    %cst_24 = arith.constant 1.000000e+00 : f32
    %47 = vector.broadcast %cst_24 : f32 to vector<32x64xf32>
    %48 = arith.addf %47, %46 : vector<32x64xf32>
    %49 = arith.divf %47, %48 : vector<32x64xf32>
    %50 = vector.extract_strided_slice %49 {offsets = [0, 0], sizes = [32, 32], strides = [1, 1]} : vector<32x64xf32> to vector<32x32xf32>
    %51 = vector.extract_strided_slice %49 {offsets = [0, 32], sizes = [32, 32], strides = [1, 1]} : vector<32x64xf32> to vector<32x32xf32>
    %52 = arith.mulf %51, %38 : vector<32x32xf32>
    %cst_25 = arith.constant dense<0.000000e+00> : vector<32x32xf32>
    %53 = tpu.matmul %1, %52, %cst_25 {dimension_numbers = #tpu.dot_dimension_numbers<[1], [0], [0], [1], [0, 0, 1, 1], [], []>} : vector<32x32xf32>, vector<32x32xf32>, vector<32x32xf32> -> vector<32x32xf32>
    %cst_26 = arith.constant dense<0.000000e+00> : vector<32x32xf32>
    %54 = tpu.matmul %2, %52, %cst_26 {dimension_numbers = #tpu.dot_dimension_numbers<[1], [0], [0], [1], [0, 0, 1, 1], [], []>} : vector<32x32xf32>, vector<32x32xf32>, vector<32x32xf32> -> vector<32x32xf32>
    %55 = tpu.concatenate %52, %53, %54 in 1 : vector<32x32xf32>, vector<32x32xf32>, vector<32x32xf32> -> vector<32x96xf32>
    %cst_27 = arith.constant dense<0.000000e+00> : vector<32x32xf32>
    %56 = tpu.matmul %55, %5, %cst_27 {dimension_numbers = #tpu.dot_dimension_numbers<[1], [0], [0], [1], [0, 0, 1, 1], [], []>} : vector<32x96xf32>, vector<96x32xf32>, vector<32x32xf32> -> vector<32x32xf32>
    %57 = vector.extract_strided_slice %19 {offsets = [0, 64], sizes = [32, 32], strides = [1, 1]} : vector<32x96xf32> to vector<32x32xf32>
    %58 = arith.addf %56, %57 : vector<32x32xf32>
    %59 = math.tanh %58 : vector<32x32xf32>
    %60 = arith.mulf %50, %38 : vector<32x32xf32>
    %cst_28 = arith.constant 1.000000e+00 : f32
    %61 = vector.broadcast %cst_28 : f32 to vector<32x32xf32>
    %62 = arith.subf %61, %50 : vector<32x32xf32>
    %63 = arith.mulf %62, %59 : vector<32x32xf32>
    %64 = arith.addf %60, %63 : vector<32x32xf32>
    %cst_29 = arith.constant dense<0.000000e+00> : vector<32x32xf32>
    %65 = tpu.matmul %1, %64, %cst_29 {dimension_numbers = #tpu.dot_dimension_numbers<[1], [0], [0], [1], [0, 0, 1, 1], [], []>} : vector<32x32xf32>, vector<32x32xf32>, vector<32x32xf32> -> vector<32x32xf32>
    %cst_30 = arith.constant dense<0.000000e+00> : vector<32x32xf32>
    %66 = tpu.matmul %2, %64, %cst_30 {dimension_numbers = #tpu.dot_dimension_numbers<[1], [0], [0], [1], [0, 0, 1, 1], [], []>} : vector<32x32xf32>, vector<32x32xf32>, vector<32x32xf32> -> vector<32x32xf32>
    %67 = tpu.concatenate %64, %65, %66 in 1 : vector<32x32xf32>, vector<32x32xf32>, vector<32x32xf32> -> vector<32x96xf32>
    %cst_31 = arith.constant dense<0.000000e+00> : vector<32x64xf32>
    %68 = tpu.matmul %67, %4, %cst_31 {dimension_numbers = #tpu.dot_dimension_numbers<[1], [0], [0], [1], [0, 0, 1, 1], [], []>} : vector<32x96xf32>, vector<96x64xf32>, vector<32x64xf32> -> vector<32x64xf32>
    %69 = vector.extract_strided_slice %25 {offsets = [0, 0], sizes = [32, 64], strides = [1, 1]} : vector<32x96xf32> to vector<32x64xf32>
    %70 = arith.addf %68, %69 : vector<32x64xf32>
    %71 = arith.negf %70 : vector<32x64xf32>
    %72 = math.exp %71 : vector<32x64xf32>
    %cst_32 = arith.constant 1.000000e+00 : f32
    %73 = vector.broadcast %cst_32 : f32 to vector<32x64xf32>
    %74 = arith.addf %73, %72 : vector<32x64xf32>
    %75 = arith.divf %73, %74 : vector<32x64xf32>
    %76 = vector.extract_strided_slice %75 {offsets = [0, 0], sizes = [32, 32], strides = [1, 1]} : vector<32x64xf32> to vector<32x32xf32>
    %77 = vector.extract_strided_slice %75 {offsets = [0, 32], sizes = [32, 32], strides = [1, 1]} : vector<32x64xf32> to vector<32x32xf32>
    %78 = arith.mulf %77, %64 : vector<32x32xf32>
    %cst_33 = arith.constant dense<0.000000e+00> : vector<32x32xf32>
    %79 = tpu.matmul %1, %78, %cst_33 {dimension_numbers = #tpu.dot_dimension_numbers<[1], [0], [0], [1], [0, 0, 1, 1], [], []>} : vector<32x32xf32>, vector<32x32xf32>, vector<32x32xf32> -> vector<32x32xf32>
    %cst_34 = arith.constant dense<0.000000e+00> : vector<32x32xf32>
    %80 = tpu.matmul %2, %78, %cst_34 {dimension_numbers = #tpu.dot_dimension_numbers<[1], [0], [0], [1], [0, 0, 1, 1], [], []>} : vector<32x32xf32>, vector<32x32xf32>, vector<32x32xf32> -> vector<32x32xf32>
    %81 = tpu.concatenate %78, %79, %80 in 1 : vector<32x32xf32>, vector<32x32xf32>, vector<32x32xf32> -> vector<32x96xf32>
    %cst_35 = arith.constant dense<0.000000e+00> : vector<32x32xf32>
    %82 = tpu.matmul %81, %5, %cst_35 {dimension_numbers = #tpu.dot_dimension_numbers<[1], [0], [0], [1], [0, 0, 1, 1], [], []>} : vector<32x96xf32>, vector<96x32xf32>, vector<32x32xf32> -> vector<32x32xf32>
    %83 = vector.extract_strided_slice %25 {offsets = [0, 64], sizes = [32, 32], strides = [1, 1]} : vector<32x96xf32> to vector<32x32xf32>
    %84 = arith.addf %82, %83 : vector<32x32xf32>
    %85 = math.tanh %84 : vector<32x32xf32>
    %86 = arith.mulf %76, %64 : vector<32x32xf32>
    %cst_36 = arith.constant 1.000000e+00 : f32
    %87 = vector.broadcast %cst_36 : f32 to vector<32x32xf32>
    %88 = arith.subf %87, %76 : vector<32x32xf32>
    %89 = arith.mulf %88, %85 : vector<32x32xf32>
    %90 = arith.addf %86, %89 : vector<32x32xf32>
    %cst_37 = arith.constant dense<0.000000e+00> : vector<32x32xf32>
    %91 = tpu.matmul %1, %90, %cst_37 {dimension_numbers = #tpu.dot_dimension_numbers<[1], [0], [0], [1], [0, 0, 1, 1], [], []>} : vector<32x32xf32>, vector<32x32xf32>, vector<32x32xf32> -> vector<32x32xf32>
    %cst_38 = arith.constant dense<0.000000e+00> : vector<32x32xf32>
    %92 = tpu.matmul %2, %90, %cst_38 {dimension_numbers = #tpu.dot_dimension_numbers<[1], [0], [0], [1], [0, 0, 1, 1], [], []>} : vector<32x32xf32>, vector<32x32xf32>, vector<32x32xf32> -> vector<32x32xf32>
    %93 = tpu.concatenate %90, %91, %92 in 1 : vector<32x32xf32>, vector<32x32xf32>, vector<32x32xf32> -> vector<32x96xf32>
    %cst_39 = arith.constant dense<0.000000e+00> : vector<32x64xf32>
    %94 = tpu.matmul %93, %4, %cst_39 {dimension_numbers = #tpu.dot_dimension_numbers<[1], [0], [0], [1], [0, 0, 1, 1], [], []>} : vector<32x96xf32>, vector<96x64xf32>, vector<32x64xf32> -> vector<32x64xf32>
    %95 = vector.extract_strided_slice %31 {offsets = [0, 0], sizes = [32, 64], strides = [1, 1]} : vector<32x96xf32> to vector<32x64xf32>
    %96 = arith.addf %94, %95 : vector<32x64xf32>
    %97 = arith.negf %96 : vector<32x64xf32>
    %98 = math.exp %97 : vector<32x64xf32>
    %cst_40 = arith.constant 1.000000e+00 : f32
    %99 = vector.broadcast %cst_40 : f32 to vector<32x64xf32>
    %100 = arith.addf %99, %98 : vector<32x64xf32>
    %101 = arith.divf %99, %100 : vector<32x64xf32>
    %102 = vector.extract_strided_slice %101 {offsets = [0, 0], sizes = [32, 32], strides = [1, 1]} : vector<32x64xf32> to vector<32x32xf32>
    %103 = vector.extract_strided_slice %101 {offsets = [0, 32], sizes = [32, 32], strides = [1, 1]} : vector<32x64xf32> to vector<32x32xf32>
    %104 = arith.mulf %103, %90 : vector<32x32xf32>
    %cst_41 = arith.constant dense<0.000000e+00> : vector<32x32xf32>
    %105 = tpu.matmul %1, %104, %cst_41 {dimension_numbers = #tpu.dot_dimension_numbers<[1], [0], [0], [1], [0, 0, 1, 1], [], []>} : vector<32x32xf32>, vector<32x32xf32>, vector<32x32xf32> -> vector<32x32xf32>
    %cst_42 = arith.constant dense<0.000000e+00> : vector<32x32xf32>
    %106 = tpu.matmul %2, %104, %cst_42 {dimension_numbers = #tpu.dot_dimension_numbers<[1], [0], [0], [1], [0, 0, 1, 1], [], []>} : vector<32x32xf32>, vector<32x32xf32>, vector<32x32xf32> -> vector<32x32xf32>
    %107 = tpu.concatenate %104, %105, %106 in 1 : vector<32x32xf32>, vector<32x32xf32>, vector<32x32xf32> -> vector<32x96xf32>
    %cst_43 = arith.constant dense<0.000000e+00> : vector<32x32xf32>
    %108 = tpu.matmul %107, %5, %cst_43 {dimension_numbers = #tpu.dot_dimension_numbers<[1], [0], [0], [1], [0, 0, 1, 1], [], []>} : vector<32x96xf32>, vector<96x32xf32>, vector<32x32xf32> -> vector<32x32xf32>
    %109 = vector.extract_strided_slice %31 {offsets = [0, 64], sizes = [32, 32], strides = [1, 1]} : vector<32x96xf32> to vector<32x32xf32>
    %110 = arith.addf %108, %109 : vector<32x32xf32>
    %111 = math.tanh %110 : vector<32x32xf32>
    %112 = arith.mulf %102, %90 : vector<32x32xf32>
    %cst_44 = arith.constant 1.000000e+00 : f32
    %113 = vector.broadcast %cst_44 : f32 to vector<32x32xf32>
    %114 = arith.subf %113, %102 : vector<32x32xf32>
    %115 = arith.mulf %114, %111 : vector<32x32xf32>
    %116 = arith.addf %112, %115 : vector<32x32xf32>
    %cst_45 = arith.constant dense<0.000000e+00> : vector<32x32xf32>
    %117 = tpu.matmul %1, %116, %cst_45 {dimension_numbers = #tpu.dot_dimension_numbers<[1], [0], [0], [1], [0, 0, 1, 1], [], []>} : vector<32x32xf32>, vector<32x32xf32>, vector<32x32xf32> -> vector<32x32xf32>
    %cst_46 = arith.constant dense<0.000000e+00> : vector<32x32xf32>
    %118 = tpu.matmul %2, %116, %cst_46 {dimension_numbers = #tpu.dot_dimension_numbers<[1], [0], [0], [1], [0, 0, 1, 1], [], []>} : vector<32x32xf32>, vector<32x32xf32>, vector<32x32xf32> -> vector<32x32xf32>
    %119 = tpu.concatenate %116, %117, %118 in 1 : vector<32x32xf32>, vector<32x32xf32>, vector<32x32xf32> -> vector<32x96xf32>
    %cst_47 = arith.constant dense<0.000000e+00> : vector<32x64xf32>
    %120 = tpu.matmul %119, %4, %cst_47 {dimension_numbers = #tpu.dot_dimension_numbers<[1], [0], [0], [1], [0, 0, 1, 1], [], []>} : vector<32x96xf32>, vector<96x64xf32>, vector<32x64xf32> -> vector<32x64xf32>
    %121 = vector.extract_strided_slice %37 {offsets = [0, 0], sizes = [32, 64], strides = [1, 1]} : vector<32x96xf32> to vector<32x64xf32>
    %122 = arith.addf %120, %121 : vector<32x64xf32>
    %123 = arith.negf %122 : vector<32x64xf32>
    %124 = math.exp %123 : vector<32x64xf32>
    %cst_48 = arith.constant 1.000000e+00 : f32
    %125 = vector.broadcast %cst_48 : f32 to vector<32x64xf32>
    %126 = arith.addf %125, %124 : vector<32x64xf32>
    %127 = arith.divf %125, %126 : vector<32x64xf32>
    %128 = vector.extract_strided_slice %127 {offsets = [0, 0], sizes = [32, 32], strides = [1, 1]} : vector<32x64xf32> to vector<32x32xf32>
    %129 = vector.extract_strided_slice %127 {offsets = [0, 32], sizes = [32, 32], strides = [1, 1]} : vector<32x64xf32> to vector<32x32xf32>
    %130 = arith.mulf %129, %116 : vector<32x32xf32>
    %cst_49 = arith.constant dense<0.000000e+00> : vector<32x32xf32>
    %131 = tpu.matmul %1, %130, %cst_49 {dimension_numbers = #tpu.dot_dimension_numbers<[1], [0], [0], [1], [0, 0, 1, 1], [], []>} : vector<32x32xf32>, vector<32x32xf32>, vector<32x32xf32> -> vector<32x32xf32>
    %cst_50 = arith.constant dense<0.000000e+00> : vector<32x32xf32>
    %132 = tpu.matmul %2, %130, %cst_50 {dimension_numbers = #tpu.dot_dimension_numbers<[1], [0], [0], [1], [0, 0, 1, 1], [], []>} : vector<32x32xf32>, vector<32x32xf32>, vector<32x32xf32> -> vector<32x32xf32>
    %133 = tpu.concatenate %130, %131, %132 in 1 : vector<32x32xf32>, vector<32x32xf32>, vector<32x32xf32> -> vector<32x96xf32>
    %cst_51 = arith.constant dense<0.000000e+00> : vector<32x32xf32>
    %134 = tpu.matmul %133, %5, %cst_51 {dimension_numbers = #tpu.dot_dimension_numbers<[1], [0], [0], [1], [0, 0, 1, 1], [], []>} : vector<32x96xf32>, vector<96x32xf32>, vector<32x32xf32> -> vector<32x32xf32>
    %135 = vector.extract_strided_slice %37 {offsets = [0, 64], sizes = [32, 32], strides = [1, 1]} : vector<32x96xf32> to vector<32x32xf32>
    %136 = arith.addf %134, %135 : vector<32x32xf32>
    %137 = math.tanh %136 : vector<32x32xf32>
    %138 = arith.mulf %128, %116 : vector<32x32xf32>
    %cst_52 = arith.constant 1.000000e+00 : f32
    %139 = vector.broadcast %cst_52 : f32 to vector<32x32xf32>
    %140 = arith.subf %139, %128 : vector<32x32xf32>
    %141 = arith.mulf %140, %137 : vector<32x32xf32>
    %142 = arith.addf %138, %141 : vector<32x32xf32>
    %143 = tpu.concatenate %64, %90, %116, %142 in 1 : vector<32x32xf32>, vector<32x32xf32>, vector<32x32xf32>, vector<32x32xf32> -> vector<32x128xf32>
    %c0_53 = arith.constant 0 : index
    %c0_54 = arith.constant 0 : index
    %144 = vector.load %arg7[%c0_53, %c0_54] : memref<128x128xf32, #tpu.memory_space<vmem>>, vector<128x128xf32>
    %cst_55 = arith.constant dense<0.000000e+00> : vector<32x128xf32>
    %145 = tpu.matmul %143, %144, %cst_55 {dimension_numbers = #tpu.dot_dimension_numbers<[1], [0], [0], [1], [0, 0, 1, 1], [], []>} : vector<32x128xf32>, vector<128x128xf32>, vector<32x128xf32> -> vector<32x128xf32>
    %146 = arith.addf %145, %11 : vector<32x128xf32>
    %cst_56 = arith.constant 0.000000e+00 : f32
    %147 = vector.broadcast %cst_56 : f32 to vector<32x128xf32>
    %148 = arith.maximumf %146, %147 : vector<32x128xf32>
    %c0_57 = arith.constant 0 : index
    %c0_58 = arith.constant 0 : index
    %149 = vector.load %arg9[%c0_57, %c0_58] : memref<32x128xf32, #tpu.memory_space<vmem>>, vector<32x128xf32>
    tpu.vector_store %arg9[%c0_57, %c0_58], %148 {strides = array<i32>} : memref<32x128xf32, #tpu.memory_space<vmem>>, vector<32x128xf32>,
    %c0_59 = arith.constant 0 : index
    %c0_60 = arith.constant 0 : index
    %150 = vector.load %arg10[%c0_59, %c0_60] : memref<32x128xf32, #tpu.memory_space<vmem>>, vector<32x128xf32>
    tpu.vector_store %arg10[%c0_59, %c0_60], %143 {strides = array<i32>} : memref<32x128xf32, #tpu.memory_space<vmem>>, vector<32x128xf32>,
    return
  }
}

</mosaic_0001>

<llo_original>
// kernel: encoder_forward.1
$region0: #{encoder_forward.1}
  #allocation0 [shape = 'u32[]', space=smem, size = 0x4, offset = 0x4, fixed_abs, tag = 'smem constant byte address 0x4 - core index']
  #allocation1 [shape = 'u32[144,128]{1,0:T(1,128)}', space=vmem, size = 0x12000, scoped, tag = 'internal scratch']
  %s0 = inlined_call_operand.vmem [shape: f32[32,128], index: 0, kind: input, shape index: {}]
  %s1 = inlined_call_operand.vmem [shape: f32[32,32], index: 1, kind: input, shape index: {}]
  %s2 = inlined_call_operand.vmem [shape: f32[32,32], index: 2, kind: input, shape index: {}]
  %s3 = inlined_call_operand.vmem [shape: f32[96,96], index: 3, kind: input, shape index: {}]
  %s4 = inlined_call_operand.vmem [shape: f32[96,64], index: 4, kind: input, shape index: {}]
  %s5 = inlined_call_operand.vmem [shape: f32[96,32], index: 5, kind: input, shape index: {}]
  %s6 = inlined_call_operand.vmem [shape: f32[1,96], index: 6, kind: input, shape index: {}]
  %s7 = inlined_call_operand.vmem [shape: f32[128,128], index: 7, kind: input, shape index: {}]
  %s8 = inlined_call_operand.vmem [shape: f32[1,128], index: 8, kind: input, shape index: {}]
  %s9 = inlined_call_operand.vmem [shape: f32[32,128], index: 9, kind: output, shape index: {0}]
  %s10 = inlined_call_operand.vmem [shape: f32[32,128], index: 10, kind: output, shape index: {1}]
  %11 = xla_tuple %s9, %s10
  %s12 = sld [smem:[#allocation0]]
  $region54: #{encoder_forward.1} parent=0
    _
  %s14 = ssub.s32 1, %s12
  %s15 = scalar_select 0, %s14, %s12
  // Predicated region
  $region2: #{encoder_forward.1} parent=0 // pred_check
    _
  $region3: #{encoder_forward.1} parent=0 // pred_check_branch
    %17 = sbr.rel (0) target = $region5
  $region4: #{encoder_forward.1} parent=0 // pred_region
    _
  $region5: #{encoder_forward.1} parent=0 // pred_fallthru
    _
  // Predicated region
  $region6: #{encoder_forward.1} parent=0 // pred_check
    _
  $region7: #{encoder_forward.1} parent=0 // pred_check_branch
    %19 = sbr.rel (0) target = $region9
  $region8: #{encoder_forward.1} parent=0 // pred_region
    _
  $region9: #{encoder_forward.1} parent=0 // pred_fallthru
    _
  // Predicated region
  $region10: #{encoder_forward.1} parent=0 // pred_check
    _
  $region11: #{encoder_forward.1} parent=0 // pred_check_branch
    %21 = sbr.rel (0) target = $region13
  $region12: #{encoder_forward.1} parent=0 // pred_region
    _
  $region13: #{encoder_forward.1} parent=0 // pred_fallthru
    _
  // Predicated region
  $region14: #{encoder_forward.1} parent=0 // pred_check
    _
  $region15: #{encoder_forward.1} parent=0 // pred_check_branch
    %23 = sbr.rel (0) target = $region17
  $region16: #{encoder_forward.1} parent=0 // pred_region
    _
  $region17: #{encoder_forward.1} parent=0 // pred_fallthru
    _
  // Predicated region
  $region18: #{encoder_forward.1} parent=0 // pred_check
    _
  $region19: #{encoder_forward.1} parent=0 // pred_check_branch
    %25 = sbr.rel (0) target = $region21
  $region20: #{encoder_forward.1} parent=0 // pred_region
    _
  $region21: #{encoder_forward.1} parent=0 // pred_fallthru
    _
  // Predicated region
  $region22: #{encoder_forward.1} parent=0 // pred_check
    _
  $region23: #{encoder_forward.1} parent=0 // pred_check_branch
    %27 = sbr.rel (0) target = $region25
  $region24: #{encoder_forward.1} parent=0 // pred_region
    _
  $region25: #{encoder_forward.1} parent=0 // pred_fallthru
    _
  // Predicated region
  $region26: #{encoder_forward.1} parent=0 // pred_check
    _
  $region27: #{encoder_forward.1} parent=0 // pred_check_branch
    %29 = sbr.rel (0) target = $region29
  $region28: #{encoder_forward.1} parent=0 // pred_region
    _
  $region29: #{encoder_forward.1} parent=0 // pred_fallthru
    _
  // Predicated region
  $region30: #{encoder_forward.1} parent=0 // pred_check
    _
  $region31: #{encoder_forward.1} parent=0 // pred_check_branch
    %31 = sbr.rel (0) target = $region33
  $region32: #{encoder_forward.1} parent=0 // pred_region
    _
  $region33: #{encoder_forward.1} parent=0 // pred_fallthru
    _
  // Predicated region
  $region34: #{encoder_forward.1} parent=0 // pred_check
    _
  $region35: #{encoder_forward.1} parent=0 // pred_check_branch
    %33 = sbr.rel (0) target = $region37
  $region36: #{encoder_forward.1} parent=0 // pred_region
    _
  $region37: #{encoder_forward.1} parent=0 // pred_fallthru
    _
  %v34 = vld [vmem:[%s0] sm:$0xff]
  %v35 = vld [vmem:[%s0 + $0x8] sm:$0xff]
  %v36 = vld [vmem:[%s0 + $0x10] sm:$0xff]
  %v37 = vld [vmem:[%s0 + $0x18] sm:$0xff]
  %v38 = vld [vmem:[%s1] sm:$0xff]
  %v39 = vld [vmem:[%s1 + $0x8] sm:$0xff]
  %v40 = vld [vmem:[%s1 + $0x10] sm:$0xff]
  %v41 = vld [vmem:[%s1 + $0x18] sm:$0xff]
  %v42 = vld [vmem:[%s2] sm:$0xff]
  %v43 = vld [vmem:[%s2 + $0x8] sm:$0xff]
  %v44 = vld [vmem:[%s2 + $0x10] sm:$0xff]
  %v45 = vld [vmem:[%s2 + $0x18] sm:$0xff]
  %v46 = vld [vmem:[%s3] sm:$0xff]
  %v47 = vld [vmem:[%s3 + $0x8] sm:$0xff]
  %v48 = vld [vmem:[%s3 + $0x10] sm:$0xff]
  %v49 = vld [vmem:[%s3 + $0x18] sm:$0xff]
  %v50 = vld [vmem:[%s3 + $0x20] sm:$0xff]
  %v51 = vld [vmem:[%s3 + $0x28] sm:$0xff]
  %v52 = vld [vmem:[%s3 + $0x30] sm:$0xff]
  %v53 = vld [vmem:[%s3 + $0x38] sm:$0xff]
  %v54 = vld [vmem:[%s3 + $0x40] sm:$0xff]
  %v55 = vld [vmem:[%s3 + $0x48] sm:$0xff]
  %v56 = vld [vmem:[%s3 + $0x50] sm:$0xff]
  %v57 = vld [vmem:[%s3 + $0x58] sm:$0xff]
  %v58 = vld [vmem:[%s4] sm:$0xff]
  %v59 = vld [vmem:[%s4 + $0x8] sm:$0xff]
  %v60 = vld [vmem:[%s4 + $0x10] sm:$0xff]
  %v61 = vld [vmem:[%s4 + $0x18] sm:$0xff]
  %v62 = vld [vmem:[%s4 + $0x20] sm:$0xff]
  %v63 = vld [vmem:[%s4 + $0x28] sm:$0xff]
  %v64 = vld [vmem:[%s4 + $0x30] sm:$0xff]
  %v65 = vld [vmem:[%s4 + $0x38] sm:$0xff]
  %v66 = vld [vmem:[%s4 + $0x40] sm:$0xff]
  %v67 = vld [vmem:[%s4 + $0x48] sm:$0xff]
  %v68 = vld [vmem:[%s4 + $0x50] sm:$0xff]
  %v69 = vld [vmem:[%s4 + $0x58] sm:$0xff]
  %v70 = vld [vmem:[%s5] sm:$0xff]
  %v71 = vld [vmem:[%s5 + $0x8] sm:$0xff]
  %v72 = vld [vmem:[%s5 + $0x10] sm:$0xff]
  %v73 = vld [vmem:[%s5 + $0x18] sm:$0xff]
  %v74 = vld [vmem:[%s5 + $0x20] sm:$0xff]
  %v75 = vld [vmem:[%s5 + $0x28] sm:$0xff]
  %v76 = vld [vmem:[%s5 + $0x30] sm:$0xff]
  %v77 = vld [vmem:[%s5 + $0x38] sm:$0xff]
  %v78 = vld [vmem:[%s5 + $0x40] sm:$0xff]
  %v79 = vld [vmem:[%s5 + $0x48] sm:$0xff]
  %v80 = vld [vmem:[%s5 + $0x50] sm:$0xff]
  %v81 = vld [vmem:[%s5 + $0x58] sm:$0xff]
  %v82 = vld [vmem:[%s6] sm:$0x1]
  %v84 = vlaneseq
  %v85 = vshrl.u32 %v84, 7
  %v86 = vsub.s32 0, %v85
  %v87 = vrot.slane %v82, %v86
  %v89 = vld [vmem:[%s8] sm:$0x1]
  %v91 = vlaneseq
  %v92 = vshrl.u32 %v91, 7
  %v93 = vsub.s32 0, %v92
  %v94 = vrot.slane %v89, %v93
  %vm96 = vcmask 261120
  %v98 = vsel %vm96, %v38, 0
  %v101 = vsel %vm96, %v39, 0
  %v104 = vsel %vm96, %v40, 0
  %v107 = vsel %vm96, %v41, 0
  %109 = vmatprep.subr.mxu0 0.0
  %110 = vmatpush1.msra.mxu0 0.0
  %111 = vmatprep.subr.mxu0 0.0
  %112 = vmatpush1.msra.mxu0 0.0
  %113 = vmatprep.subr.mxu0 0.0
  %114 = vmatpush1.msra.mxu0 0.0
  %115 = vmatprep.subr.mxu0 0.0
  %116 = vmatpush1.msra.mxu0 0.0
  %117 = vmatprep.subr.mxu0 0.0
  %118 = vmatpush1.msra.mxu0 0.0
  %119 = vmatprep.subr.mxu0 0.0
  %120 = vmatpush1.msra.mxu0 0.0
  %121 = vmatprep.subr.mxu0 0.0
  %122 = vmatpush1.msra.mxu0 0.0
  %123 = vmatprep.subr.mxu0 0.0
  %124 = vmatpush1.msra.mxu0 0.0
  %125 = vmatprep.subr.mxu0 0.0
  %126 = vmatpush1.msra.mxu0 0.0
  %127 = vmatprep.subr.mxu0 0.0
  %128 = vmatpush1.msra.mxu0 0.0
  %129 = vmatprep.subr.mxu0 0.0
  %130 = vmatpush1.msra.mxu0 0.0
  %131 = vmatprep.subr.mxu0 0.0
  %132 = vmatpush1.msra.mxu0 0.0
  %133 = vmatprep.subr.mxu0 0.0
  %134 = vmatpush1.msra.mxu0 %v37
  %135 = vmatprep.subr.mxu0 0.0
  %136 = vmatpush1.msra.mxu0 %v36
  %137 = vmatprep.subr.mxu0 0.0
  %138 = vmatpush1.msra.mxu0 %v35
  %139 = vmatprep.subr.mxu0 0.0
  %140 = vmatpush1.msra.mxu0 %v34
  %141 = vmatprep.subr.mxu0 0.0
  %142 = vmatpush2.msra.mxu0 0.0
  %143 = vmatprep.subr.mxu0 0.0
  %144 = vmatpush2.msra.mxu0 0.0
  %145 = vmatprep.subr.mxu0 0.0
  %146 = vmatpush2.msra.mxu0 0.0
  %147 = vmatprep.subr.mxu0 0.0
  %148 = vmatpush2.msra.mxu0 0.0
  %149 = vmatprep.subr.mxu0 0.0
  %150 = vmatpush2.msra.mxu0 0.0
  %151 = vmatprep.subr.mxu0 0.0
  %152 = vmatpush2.msra.mxu0 0.0
  %153 = vmatprep.subr.mxu0 0.0
  %154 = vmatpush2.msra.mxu0 0.0
  %155 = vmatprep.subr.mxu0 0.0
  %156 = vmatpush2.msra.mxu0 0.0
  %157 = vmatprep.subr.mxu0 0.0
  %158 = vmatpush2.msra.mxu0 0.0
  %159 = vmatprep.subr.mxu0 0.0
  %160 = vmatpush2.msra.mxu0 0.0
  %161 = vmatprep.subr.mxu0 0.0
  %162 = vmatpush2.msra.mxu0 0.0
  %163 = vmatprep.subr.mxu0 0.0
  %164 = vmatpush2.msra.mxu0 0.0
  %165 = vmatprep.subr.mxu0 0.0
  %166 = vmatpush2.msra.mxu0 0.0
  %167 = vmatprep.subr.mxu0 0.0
  %168 = vmatpush2.msra.mxu0 0.0
  %169 = vmatprep.subr.mxu0 0.0
  %170 = vmatpush2.msra.mxu0 0.0
  %171 = vmatprep.subr.mxu0 0.0
  %172 = vmatpush2.msra.mxu0 0.0
  %173 = vmatprep.mubr.f32.mxu0 0.0
  %174 = vmatmul.mubr.f32.gmra.mxu0 %v98
  %v175 = vpop.f32.mrf.mxu0
  %v176 = vadd.f32 0.0, %v175
  %v177 = vpop.f32.mrf.mxu0
  %178 = vmatprep.mubr.f32.mxu0 0.0
  %179 = vmatmul.mubr.f32.gmra.mxu0 %v101
  %v180 = vpop.f32.mrf.mxu0
  %v181 = vadd.f32 0.0, %v180
  %v182 = vpop.f32.mrf.mxu0
  %183 = vmatprep.mubr.f32.mxu0 0.0
  %184 = vmatmul.mubr.f32.gmra.mxu0 %v104
  %v185 = vpop.f32.mrf.mxu0
  %v186 = vadd.f32 0.0, %v185
  %v187 = vpop.f32.mrf.mxu0
  %188 = vmatprep.mubr.f32.mxu0 0.0
  %189 = vmatmul.mubr.f32.gmra.mxu0 %v107
  %v190 = vpop.f32.mrf.mxu0
  %v191 = vadd.f32 0.0, %v190
  %v192 = vpop.f32.mrf.mxu0
  %193 = vdwg.mxu0
  %v195 = vsel %vm96, %v42, 0
  %v198 = vsel %vm96, %v43, 0
  %v201 = vsel %vm96, %v44, 0
  %v204 = vsel %vm96, %v45, 0
  %206 = vmatprep.subr.mxu0 0.0
  %207 = vmatpush1.msra.mxu0 0.0
  %208 = vmatprep.subr.mxu0 0.0
  %209 = vmatpush1.msra.mxu0 0.0
  %210 = vmatprep.subr.mxu0 0.0
  %211 = vmatpush1.msra.mxu0 0.0
  %212 = vmatprep.subr.mxu0 0.0
  %213 = vmatpush1.msra.mxu0 0.0
  %214 = vmatprep.subr.mxu0 0.0
  %215 = vmatpush1.msra.mxu0 0.0
  %216 = vmatprep.subr.mxu0 0.0
  %217 = vmatpush1.msra.mxu0 0.0
  %218 = vmatprep.subr.mxu0 0.0
  %219 = vmatpush1.msra.mxu0 0.0
  %220 = vmatprep.subr.mxu0 0.0
  %221 = vmatpush1.msra.mxu0 0.0
  %222 = vmatprep.subr.mxu0 0.0
  %223 = vmatpush1.msra.mxu0 0.0
  %224 = vmatprep.subr.mxu0 0.0
  %225 = vmatpush1.msra.mxu0 0.0
  %226 = vmatprep.subr.mxu0 0.0
  %227 = vmatpush1.msra.mxu0 0.0
  %228 = vmatprep.subr.mxu0 0.0
  %229 = vmatpush1.msra.mxu0 0.0
  %230 = vmatprep.subr.mxu0 0.0
  %231 = vmatpush1.msra.mxu0 %v37
  %232 = vmatprep.subr.mxu0 0.0
  %233 = vmatpush1.msra.mxu0 %v36
  %234 = vmatprep.subr.mxu0 0.0
  %235 = vmatpush1.msra.mxu0 %v35
  %236 = vmatprep.subr.mxu0 0.0
  %237 = vmatpush1.msra.mxu0 %v34
  %238 = vmatprep.subr.mxu0 0.0
  %239 = vmatpush2.msra.mxu0 0.0
  %240 = vmatprep.subr.mxu0 0.0
  %241 = vmatpush2.msra.mxu0 0.0
  %242 = vmatprep.subr.mxu0 0.0
  %243 = vmatpush2.msra.mxu0 0.0
  %244 = vmatprep.subr.mxu0 0.0
  %245 = vmatpush2.msra.mxu0 0.0
  %246 = vmatprep.subr.mxu0 0.0
  %247 = vmatpush2.msra.mxu0 0.0
  %248 = vmatprep.subr.mxu0 0.0
  %249 = vmatpush2.msra.mxu0 0.0
  %250 = vmatprep.subr.mxu0 0.0
  %251 = vmatpush2.msra.mxu0 0.0
  %252 = vmatprep.subr.mxu0 0.0
  %253 = vmatpush2.msra.mxu0 0.0
  %254 = vmatprep.subr.mxu0 0.0
  %255 = vmatpush2.msra.mxu0 0.0
  %256 = vmatprep.subr.mxu0 0.0
  %257 = vmatpush2.msra.mxu0 0.0
  %258 = vmatprep.subr.mxu0 0.0
  %259 = vmatpush2.msra.mxu0 0.0
  %260 = vmatprep.subr.mxu0 0.0
  %261 = vmatpush2.msra.mxu0 0.0
  %262 = vmatprep.subr.mxu0 0.0
  %263 = vmatpush2.msra.mxu0 0.0
  %264 = vmatprep.subr.mxu0 0.0
  %265 = vmatpush2.msra.mxu0 0.0
  %266 = vmatprep.subr.mxu0 0.0
  %267 = vmatpush2.msra.mxu0 0.0
  %268 = vmatprep.subr.mxu0 0.0
  %269 = vmatpush2.msra.mxu0 0.0
  %270 = vmatprep.mubr.f32.mxu0 0.0
  %271 = vmatmul.mubr.f32.gmra.mxu0 %v195
  %v272 = vpop.f32.mrf.mxu0
  %v273 = vadd.f32 0.0, %v272
  %v274 = vpop.f32.mrf.mxu0
  %275 = vmatprep.mubr.f32.mxu0 0.0
  %276 = vmatmul.mubr.f32.gmra.mxu0 %v198
  %v277 = vpop.f32.mrf.mxu0
  %v278 = vadd.f32 0.0, %v277
  %v279 = vpop.f32.mrf.mxu0
  %280 = vmatprep.mubr.f32.mxu0 0.0
  %281 = vmatmul.mubr.f32.gmra.mxu0 %v201
  %v282 = vpop.f32.mrf.mxu0
  %v283 = vadd.f32 0.0, %v282
  %v284 = vpop.f32.mrf.mxu0
  %285 = vmatprep.mubr.f32.mxu0 0.0
  %286 = vmatmul.mubr.f32.gmra.mxu0 %v204
  %v287 = vpop.f32.mrf.mxu0
  %v288 = vadd.f32 0.0, %v287
  %v289 = vpop.f32.mrf.mxu0
  %290 = vdwg.mxu0
  %295 = vrot.lane.b32.xlu0 %v176, 32
  %v296 = vpop.permute.xlu0 %295
  %297 = vrot.lane.b32.xlu0 %v181, 32
  %v298 = vpop.permute.xlu0 %297
  %299 = vrot.lane.b32.xlu0 %v186, 32
  %v300 = vpop.permute.xlu0 %299
  %301 = vrot.lane.b32.xlu0 %v191, 32
  %v302 = vpop.permute.xlu0 %301
  %311 = vrot.lane.b32.xlu0 %v273, 64
  %v312 = vpop.permute.xlu0 %311
  %313 = vrot.lane.b32.xlu0 %v278, 64
  %v314 = vpop.permute.xlu0 %313
  %315 = vrot.lane.b32.xlu0 %v283, 64
  %v316 = vpop.permute.xlu0 %315
  %317 = vrot.lane.b32.xlu0 %v288, 64
  %v318 = vpop.permute.xlu0 %317
  %v323 = vsel %vm96, %v34, %v296
  %v324 = vsel %vm96, %v35, %v298
  %v325 = vsel %vm96, %v36, %v300
  %v326 = vsel %vm96, %v37, %v302
  %vm327 = vcmask 523264
  %v328 = vsel %vm327, %v323, %v312
  %v329 = vsel %vm327, %v324, %v314
  %v330 = vsel %vm327, %v325, %v316
  %v331 = vsel %vm327, %v326, %v318
  %vm332 = vcmask 785408
  %v334 = vsel %vm332, %v328, 0
  %v337 = vsel %vm332, %v329, 0
  %v340 = vsel %vm332, %v330, 0
  %v343 = vsel %vm332, %v331, 0
  %345 = vmatprep.subr.mxu0 0.0
  %346 = vmatpush1.msra.mxu0 0.0
  %347 = vmatprep.subr.mxu0 0.0
  %348 = vmatpush1.msra.mxu0 0.0
  %349 = vmatprep.subr.mxu0 0.0
  %350 = vmatpush1.msra.mxu0 0.0
  %351 = vmatprep.subr.mxu0 0.0
  %352 = vmatpush1.msra.mxu0 0.0
  %353 = vmatprep.subr.mxu0 0.0
  %354 = vmatpush1.msra.mxu0 %v57
  %355 = vmatprep.subr.mxu0 0.0
  %356 = vmatpush1.msra.mxu0 %v56
  %357 = vmatprep.subr.mxu0 0.0
  %358 = vmatpush1.msra.mxu0 %v55
  %359 = vmatprep.subr.mxu0 0.0
  %360 = vmatpush1.msra.mxu0 %v54
  %361 = vmatprep.subr.mxu0 0.0
  %362 = vmatpush1.msra.mxu0 %v53
  %363 = vmatprep.subr.mxu0 0.0
  %364 = vmatpush1.msra.mxu0 %v52
  %365 = vmatprep.subr.mxu0 0.0
  %366 = vmatpush1.msra.mxu0 %v51
  %367 = vmatprep.subr.mxu0 0.0
  %368 = vmatpush1.msra.mxu0 %v50
  %369 = vmatprep.subr.mxu0 0.0
  %370 = vmatpush1.msra.mxu0 %v49
  %371 = vmatprep.subr.mxu0 0.0
  %372 = vmatpush1.msra.mxu0 %v48
  %373 = vmatprep.subr.mxu0 0.0
  %374 = vmatpush1.msra.mxu0 %v47
  %375 = vmatprep.subr.mxu0 0.0
  %376 = vmatpush1.msra.mxu0 %v46
  %377 = vmatprep.subr.mxu0 0.0
  %378 = vmatpush2.msra.mxu0 0.0
  %379 = vmatprep.subr.mxu0 0.0
  %380 = vmatpush2.msra.mxu0 0.0
  %381 = vmatprep.subr.mxu0 0.0
  %382 = vmatpush2.msra.mxu0 0.0
  %383 = vmatprep.subr.mxu0 0.0
  %384 = vmatpush2.msra.mxu0 0.0
  %385 = vmatprep.subr.mxu0 0.0
  %386 = vmatpush2.msra.mxu0 0.0
  %387 = vmatprep.subr.mxu0 0.0
  %388 = vmatpush2.msra.mxu0 0.0
  %389 = vmatprep.subr.mxu0 0.0
  %390 = vmatpush2.msra.mxu0 0.0
  %391 = vmatprep.subr.mxu0 0.0
  %392 = vmatpush2.msra.mxu0 0.0
  %393 = vmatprep.subr.mxu0 0.0
  %394 = vmatpush2.msra.mxu0 0.0
  %395 = vmatprep.subr.mxu0 0.0
  %396 = vmatpush2.msra.mxu0 0.0
  %397 = vmatprep.subr.mxu0 0.0
  %398 = vmatpush2.msra.mxu0 0.0
  %399 = vmatprep.subr.mxu0 0.0
  %400 = vmatpush2.msra.mxu0 0.0
  %401 = vmatprep.subr.mxu0 0.0
  %402 = vmatpush2.msra.mxu0 0.0
  %403 = vmatprep.subr.mxu0 0.0
  %404 = vmatpush2.msra.mxu0 0.0
  %405 = vmatprep.subr.mxu0 0.0
  %406 = vmatpush2.msra.mxu0 0.0
  %407 = vmatprep.subr.mxu0 0.0
  %408 = vmatpush2.msra.mxu0 0.0
  %409 = vmatprep.mubr.f32.mxu0 0.0
  %410 = vmatmul.mubr.f32.gmra.mxu0 %v334
  %v411 = vpop.f32.mrf.mxu0
  %v412 = vadd.f32 %v87, %v411
  %v413 = vpop.f32.mrf.mxu0
  %414 = vmatprep.mubr.f32.mxu0 0.0
  %415 = vmatmul.mubr.f32.gmra.mxu0 %v337
  %v416 = vpop.f32.mrf.mxu0
  %v417 = vadd.f32 %v87, %v416
  %v418 = vpop.f32.mrf.mxu0
  %419 = vmatprep.mubr.f32.mxu0 0.0
  %420 = vmatmul.mubr.f32.gmra.mxu0 %v340
  %v421 = vpop.f32.mrf.mxu0
  %v422 = vadd.f32 %v87, %v421
  %v423 = vpop.f32.mrf.mxu0
  %424 = vmatprep.mubr.f32.mxu0 0.0
  %425 = vmatmul.mubr.f32.gmra.mxu0 %v343
  %v426 = vpop.f32.mrf.mxu0
  %v427 = vadd.f32 %v87, %v426
  %v428 = vpop.f32.mrf.mxu0
  %429 = vdwg.mxu0
  %434 = vrot.lane.b32.xlu0 %v34, 96
  %v435 = vpop.permute.xlu0 %434
  %436 = vrot.lane.b32.xlu0 %v35, 96
  %v437 = vpop.permute.xlu0 %436
  %438 = vrot.lane.b32.xlu0 %v36, 96
  %v439 = vpop.permute.xlu0 %438
  %440 = vrot.lane.b32.xlu0 %v37, 96
  %v441 = vpop.permute.xlu0 %440
  %446 = vrot.lane.b32.xlu0 %v273, 32
  %v447 = vpop.permute.xlu0 %446
  %448 = vrot.lane.b32.xlu0 %v278, 32
  %v449 = vpop.permute.xlu0 %448
  %450 = vrot.lane.b32.xlu0 %v283, 32
  %v451 = vpop.permute.xlu0 %450
  %452 = vrot.lane.b32.xlu0 %v288, 32
  %v453 = vpop.permute.xlu0 %452
  %v458 = vsel %vm96, %v435, %v176
  %v459 = vsel %vm96, %v437, %v181
  %v460 = vsel %vm96, %v439, %v186
  %v461 = vsel %vm96, %v441, %v191
  %v462 = vsel %vm327, %v458, %v447
  %v463 = vsel %vm327, %v459, %v449
  %v464 = vsel %vm327, %v460, %v451
  %v465 = vsel %vm327, %v461, %v453
  %v467 = vsel %vm332, %v462, 0
  %v470 = vsel %vm332, %v463, 0
  %v473 = vsel %vm332, %v464, 0
  %v476 = vsel %vm332, %v465, 0
  %478 = vmatprep.subr.mxu0 0.0
  %479 = vmatpush1.msra.mxu0 0.0
  %480 = vmatprep.subr.mxu0 0.0
  %481 = vmatpush1.msra.mxu0 0.0
  %482 = vmatprep.subr.mxu0 0.0
  %483 = vmatpush1.msra.mxu0 0.0
  %484 = vmatprep.subr.mxu0 0.0
  %485 = vmatpush1.msra.mxu0 0.0
  %486 = vmatprep.subr.mxu0 0.0
  %487 = vmatpush1.msra.mxu0 %v57
  %488 = vmatprep.subr.mxu0 0.0
  %489 = vmatpush1.msra.mxu0 %v56
  %490 = vmatprep.subr.mxu0 0.0
  %491 = vmatpush1.msra.mxu0 %v55
  %492 = vmatprep.subr.mxu0 0.0
  %493 = vmatpush1.msra.mxu0 %v54
  %494 = vmatprep.subr.mxu0 0.0
  %495 = vmatpush1.msra.mxu0 %v53
  %496 = vmatprep.subr.mxu0 0.0
  %497 = vmatpush1.msra.mxu0 %v52
  %498 = vmatprep.subr.mxu0 0.0
  %499 = vmatpush1.msra.mxu0 %v51
  %500 = vmatprep.subr.mxu0 0.0
  %501 = vmatpush1.msra.mxu0 %v50
  %502 = vmatprep.subr.mxu0 0.0
  %503 = vmatpush1.msra.mxu0 %v49
  %504 = vmatprep.subr.mxu0 0.0
  %505 = vmatpush1.msra.mxu0 %v48
  %506 = vmatprep.subr.mxu0 0.0
  %507 = vmatpush1.msra.mxu0 %v47
  %508 = vmatprep.subr.mxu0 0.0
  %509 = vmatpush1.msra.mxu0 %v46
  %510 = vmatprep.subr.mxu0 0.0
  %511 = vmatpush2.msra.mxu0 0.0
  %512 = vmatprep.subr.mxu0 0.0
  %513 = vmatpush2.msra.mxu0 0.0
  %514 = vmatprep.subr.mxu0 0.0
  %515 = vmatpush2.msra.mxu0 0.0
  %516 = vmatprep.subr.mxu0 0.0
  %517 = vmatpush2.msra.mxu0 0.0
  %518 = vmatprep.subr.mxu0 0.0
  %519 = vmatpush2.msra.mxu0 0.0
  %520 = vmatprep.subr.mxu0 0.0
  %521 = vmatpush2.msra.mxu0 0.0
  %522 = vmatprep.subr.mxu0 0.0
  %523 = vmatpush2.msra.mxu0 0.0
  %524 = vmatprep.subr.mxu0 0.0
  %525 = vmatpush2.msra.mxu0 0.0
  %526 = vmatprep.subr.mxu0 0.0
  %527 = vmatpush2.msra.mxu0 0.0
  %528 = vmatprep.subr.mxu0 0.0
  %529 = vmatpush2.msra.mxu0 0.0
  %530 = vmatprep.subr.mxu0 0.0
  %531 = vmatpush2.msra.mxu0 0.0
  %532 = vmatprep.subr.mxu0 0.0
  %533 = vmatpush2.msra.mxu0 0.0
  %534 = vmatprep.subr.mxu0 0.0
  %535 = vmatpush2.msra.mxu0 0.0
  %536 = vmatprep.subr.mxu0 0.0
  %537 = vmatpush2.msra.mxu0 0.0
  %538 = vmatprep.subr.mxu0 0.0
  %539 = vmatpush2.msra.mxu0 0.0
  %540 = vmatprep.subr.mxu0 0.0
  %541 = vmatpush2.msra.mxu0 0.0
  %542 = vmatprep.mubr.f32.mxu0 0.0
  %543 = vmatmul.mubr.f32.gmra.mxu0 %v467
  %v544 = vpop.f32.mrf.mxu0
  %v545 = vadd.f32 %v87, %v544
  %v546 = vpop.f32.mrf.mxu0
  %547 = vmatprep.mubr.f32.mxu0 0.0
  %548 = vmatmul.mubr.f32.gmra.mxu0 %v470
  %v549 = vpop.f32.mrf.mxu0
  %v550 = vadd.f32 %v87, %v549
  %v551 = vpop.f32.mrf.mxu0
  %552 = vmatprep.mubr.f32.mxu0 0.0
  %553 = vmatmul.mubr.f32.gmra.mxu0 %v473
  %v554 = vpop.f32.mrf.mxu0
  %v555 = vadd.f32 %v87, %v554
  %v556 = vpop.f32.mrf.mxu0
  %557 = vmatprep.mubr.f32.mxu0 0.0
  %558 = vmatmul.mubr.f32.gmra.mxu0 %v476
  %v559 = vpop.f32.mrf.mxu0
  %v560 = vadd.f32 %v87, %v559
  %v561 = vpop.f32.mrf.mxu0
  %562 = vdwg.mxu0
  %563 = vrot.lane.b32.xlu0 %v34, 64
  %v564 = vpop.permute.xlu0 %563
  %565 = vrot.lane.b32.xlu0 %v35, 64
  %v566 = vpop.permute.xlu0 %565
  %567 = vrot.lane.b32.xlu0 %v36, 64
  %v568 = vpop.permute.xlu0 %567
  %569 = vrot.lane.b32.xlu0 %v37, 64
  %v570 = vpop.permute.xlu0 %569
  %575 = vrot.lane.b32.xlu0 %v176, 96
  %v576 = vpop.permute.xlu0 %575
  %577 = vrot.lane.b32.xlu0 %v181, 96
  %v578 = vpop.permute.xlu0 %577
  %579 = vrot.lane.b32.xlu0 %v186, 96
  %v580 = vpop.permute.xlu0 %579
  %581 = vrot.lane.b32.xlu0 %v191, 96
  %v582 = vpop.permute.xlu0 %581
  %v587 = vsel %vm96, %v564, %v576
  %v588 = vsel %vm96, %v566, %v578
  %v589 = vsel %vm96, %v568, %v580
  %v590 = vsel %vm96, %v570, %v582
  %v591 = vsel %vm327, %v587, %v273
  %v592 = vsel %vm327, %v588, %v278
  %v593 = vsel %vm327, %v589, %v283
  %v594 = vsel %vm327, %v590, %v288
  %v596 = vsel %vm332, %v591, 0
  %v599 = vsel %vm332, %v592, 0
  %v602 = vsel %vm332, %v593, 0
  %v605 = vsel %vm332, %v594, 0
  %607 = vmatprep.subr.mxu0 0.0
  %608 = vmatpush1.msra.mxu0 0.0
  %609 = vmatprep.subr.mxu0 0.0
  %610 = vmatpush1.msra.mxu0 0.0
  %611 = vmatprep.subr.mxu0 0.0
  %612 = vmatpush1.msra.mxu0 0.0
  %613 = vmatprep.subr.mxu0 0.0
  %614 = vmatpush1.msra.mxu0 0.0
  %615 = vmatprep.subr.mxu0 0.0
  %616 = vmatpush1.msra.mxu0 %v57
  %617 = vmatprep.subr.mxu0 0.0
  %618 = vmatpush1.msra.mxu0 %v56
  %619 = vmatprep.subr.mxu0 0.0
  %620 = vmatpush1.msra.mxu0 %v55
  %621 = vmatprep.subr.mxu0 0.0
  %622 = vmatpush1.msra.mxu0 %v54
  %623 = vmatprep.subr.mxu0 0.0
  %624 = vmatpush1.msra.mxu0 %v53
  %625 = vmatprep.subr.mxu0 0.0
  %626 = vmatpush1.msra.mxu0 %v52
  %627 = vmatprep.subr.mxu0 0.0
  %628 = vmatpush1.msra.mxu0 %v51
  %629 = vmatprep.subr.mxu0 0.0
  %630 = vmatpush1.msra.mxu0 %v50
  %631 = vmatprep.subr.mxu0 0.0
  %632 = vmatpush1.msra.mxu0 %v49
  %633 = vmatprep.subr.mxu0 0.0
  %634 = vmatpush1.msra.mxu0 %v48
  %635 = vmatprep.subr.mxu0 0.0
  %636 = vmatpush1.msra.mxu0 %v47
  %637 = vmatprep.subr.mxu0 0.0
  %638 = vmatpush1.msra.mxu0 %v46
  %639 = vmatprep.subr.mxu0 0.0
  %640 = vmatpush2.msra.mxu0 0.0
  %641 = vmatprep.subr.mxu0 0.0
  %642 = vmatpush2.msra.mxu0 0.0
  %643 = vmatprep.subr.mxu0 0.0
  %644 = vmatpush2.msra.mxu0 0.0
  %645 = vmatprep.subr.mxu0 0.0
  %646 = vmatpush2.msra.mxu0 0.0
  %647 = vmatprep.subr.mxu0 0.0
  %648 = vmatpush2.msra.mxu0 0.0
  %649 = vmatprep.subr.mxu0 0.0
  %650 = vmatpush2.msra.mxu0 0.0
  %651 = vmatprep.subr.mxu0 0.0
  %652 = vmatpush2.msra.mxu0 0.0
  %653 = vmatprep.subr.mxu0 0.0
  %654 = vmatpush2.msra.mxu0 0.0
  %655 = vmatprep.subr.mxu0 0.0
  %656 = vmatpush2.msra.mxu0 0.0
  %657 = vmatprep.subr.mxu0 0.0
  %658 = vmatpush2.msra.mxu0 0.0
  %659 = vmatprep.subr.mxu0 0.0
  %660 = vmatpush2.msra.mxu0 0.0
  %661 = vmatprep.subr.mxu0 0.0
  %662 = vmatpush2.msra.mxu0 0.0
  %663 = vmatprep.subr.mxu0 0.0
  %664 = vmatpush2.msra.mxu0 0.0
  %665 = vmatprep.subr.mxu0 0.0
  %666 = vmatpush2.msra.mxu0 0.0
  %667 = vmatprep.subr.mxu0 0.0
  %668 = vmatpush2.msra.mxu0 0.0
  %669 = vmatprep.subr.mxu0 0.0
  %670 = vmatpush2.msra.mxu0 0.0
  %671 = vmatprep.mubr.f32.mxu0 0.0
  %672 = vmatmul.mubr.f32.gmra.mxu0 %v596
  %v673 = vpop.f32.mrf.mxu0
  %v674 = vadd.f32 %v87, %v673
  %v675 = vpop.f32.mrf.mxu0
  %676 = vmatprep.mubr.f32.mxu0 0.0
  %677 = vmatmul.mubr.f32.gmra.mxu0 %v599
  %v678 = vpop.f32.mrf.mxu0
  %v679 = vadd.f32 %v87, %v678
  %v680 = vpop.f32.mrf.mxu0
  %681 = vmatprep.mubr.f32.mxu0 0.0
  %682 = vmatmul.mubr.f32.gmra.mxu0 %v602
  %v683 = vpop.f32.mrf.mxu0
  %v684 = vadd.f32 %v87, %v683
  %v685 = vpop.f32.mrf.mxu0
  %686 = vmatprep.mubr.f32.mxu0 0.0
  %687 = vmatmul.mubr.f32.gmra.mxu0 %v605
  %v688 = vpop.f32.mrf.mxu0
  %v689 = vadd.f32 %v87, %v688
  %v690 = vpop.f32.mrf.mxu0
  %691 = vdwg.mxu0
  %692 = vrot.lane.b32.xlu0 %v34, 32
  %v693 = vpop.permute.xlu0 %692
  %694 = vrot.lane.b32.xlu0 %v35, 32
  %v695 = vpop.permute.xlu0 %694
  %696 = vrot.lane.b32.xlu0 %v36, 32
  %v697 = vpop.permute.xlu0 %696
  %698 = vrot.lane.b32.xlu0 %v37, 32
  %v699 = vpop.permute.xlu0 %698
  %704 = vrot.lane.b32.xlu0 %v176, 64
  %v705 = vpop.permute.xlu0 %704
  %706 = vrot.lane.b32.xlu0 %v181, 64
  %v707 = vpop.permute.xlu0 %706
  %708 = vrot.lane.b32.xlu0 %v186, 64
  %v709 = vpop.permute.xlu0 %708
  %710 = vrot.lane.b32.xlu0 %v191, 64
  %v711 = vpop.permute.xlu0 %710
  %716 = vrot.lane.b32.xlu0 %v273, 96
  %v717 = vpop.permute.xlu0 %716
  %718 = vrot.lane.b32.xlu0 %v278, 96
  %v719 = vpop.permute.xlu0 %718
  %720 = vrot.lane.b32.xlu0 %v283, 96
  %v721 = vpop.permute.xlu0 %720
  %722 = vrot.lane.b32.xlu0 %v288, 96
  %v723 = vpop.permute.xlu0 %722
  %v728 = vsel %vm96, %v693, %v705
  %v729 = vsel %vm96, %v695, %v707
  %v730 = vsel %vm96, %v697, %v709
  %v731 = vsel %vm96, %v699, %v711
  %v732 = vsel %vm327, %v728, %v717
  %v733 = vsel %vm327, %v729, %v719
  %v734 = vsel %vm327, %v730, %v721
  %v735 = vsel %vm327, %v731, %v723
  %v737 = vsel %vm332, %v732, 0
  %v740 = vsel %vm332, %v733, 0
  %v743 = vsel %vm332, %v734, 0
  %v746 = vsel %vm332, %v735, 0
  %748 = vmatprep.subr.mxu0 0.0
  %749 = vmatpush1.msra.mxu0 0.0
  %750 = vmatprep.subr.mxu0 0.0
  %751 = vmatpush1.msra.mxu0 0.0
  %752 = vmatprep.subr.mxu0 0.0
  %753 = vmatpush1.msra.mxu0 0.0
  %754 = vmatprep.subr.mxu0 0.0
  %755 = vmatpush1.msra.mxu0 0.0
  %756 = vmatprep.subr.mxu0 0.0
  %757 = vmatpush1.msra.mxu0 %v57
  %758 = vmatprep.subr.mxu0 0.0
  %759 = vmatpush1.msra.mxu0 %v56
  %760 = vmatprep.subr.mxu0 0.0
  %761 = vmatpush1.msra.mxu0 %v55
  %762 = vmatprep.subr.mxu0 0.0
  %763 = vmatpush1.msra.mxu0 %v54
  %764 = vmatprep.subr.mxu0 0.0
  %765 = vmatpush1.msra.mxu0 %v53
  %766 = vmatprep.subr.mxu0 0.0
  %767 = vmatpush1.msra.mxu0 %v52
  %768 = vmatprep.subr.mxu0 0.0
  %769 = vmatpush1.msra.mxu0 %v51
  %770 = vmatprep.subr.mxu0 0.0
  %771 = vmatpush1.msra.mxu0 %v50
  %772 = vmatprep.subr.mxu0 0.0
  %773 = vmatpush1.msra.mxu0 %v49
  %774 = vmatprep.subr.mxu0 0.0
  %775 = vmatpush1.msra.mxu0 %v48
  %776 = vmatprep.subr.mxu0 0.0
  %777 = vmatpush1.msra.mxu0 %v47
  %778 = vmatprep.subr.mxu0 0.0
  %779 = vmatpush1.msra.mxu0 %v46
  %780 = vmatprep.subr.mxu0 0.0
  %781 = vmatpush2.msra.mxu0 0.0
  %782 = vmatprep.subr.mxu0 0.0
  %783 = vmatpush2.msra.mxu0 0.0
  %784 = vmatprep.subr.mxu0 0.0
  %785 = vmatpush2.msra.mxu0 0.0
  %786 = vmatprep.subr.mxu0 0.0
  %787 = vmatpush2.msra.mxu0 0.0
  %788 = vmatprep.subr.mxu0 0.0
  %789 = vmatpush2.msra.mxu0 0.0
  %790 = vmatprep.subr.mxu0 0.0
  %791 = vmatpush2.msra.mxu0 0.0
  %792 = vmatprep.subr.mxu0 0.0
  %793 = vmatpush2.msra.mxu0 0.0
  %794 = vmatprep.subr.mxu0 0.0
  %795 = vmatpush2.msra.mxu0 0.0
  %796 = vmatprep.subr.mxu0 0.0
  %797 = vmatpush2.msra.mxu0 0.0
  %798 = vmatprep.subr.mxu0 0.0
  %799 = vmatpush2.msra.mxu0 0.0
  %800 = vmatprep.subr.mxu0 0.0
  %801 = vmatpush2.msra.mxu0 0.0
  %802 = vmatprep.subr.mxu0 0.0
  %803 = vmatpush2.msra.mxu0 0.0
  %804 = vmatprep.subr.mxu0 0.0
  %805 = vmatpush2.msra.mxu0 0.0
  %806 = vmatprep.subr.mxu0 0.0
  %807 = vmatpush2.msra.mxu0 0.0
  %808 = vmatprep.subr.mxu0 0.0
  %809 = vmatpush2.msra.mxu0 0.0
  %810 = vmatprep.subr.mxu0 0.0
  %811 = vmatpush2.msra.mxu0 0.0
  %812 = vmatprep.mubr.f32.mxu0 0.0
  %813 = vmatmul.mubr.f32.gmra.mxu0 %v737
  %v814 = vpop.f32.mrf.mxu0
  %v815 = vadd.f32 %v87, %v814
  %v816 = vpop.f32.mrf.mxu0
  %817 = vmatprep.mubr.f32.mxu0 0.0
  %818 = vmatmul.mubr.f32.gmra.mxu0 %v740
  %v819 = vpop.f32.mrf.mxu0
  %v820 = vadd.f32 %v87, %v819
  %v821 = vpop.f32.mrf.mxu0
  %822 = vmatprep.mubr.f32.mxu0 0.0
  %823 = vmatmul.mubr.f32.gmra.mxu0 %v743
  %v824 = vpop.f32.mrf.mxu0
  %v825 = vadd.f32 %v87, %v824
  %v826 = vpop.f32.mrf.mxu0
  %827 = vmatprep.mubr.f32.mxu0 0.0
  %828 = vmatmul.mubr.f32.gmra.mxu0 %v746
  %v829 = vpop.f32.mrf.mxu0
  %v830 = vadd.f32 %v87, %v829
  %v831 = vpop.f32.mrf.mxu0
  %832 = vdwg.mxu0
  %833 = vmatprep.subr.mxu0 0.0
  %834 = vmatpush1.msra.mxu0 0.0
  %835 = vmatprep.subr.mxu0 0.0
  %836 = vmatpush1.msra.mxu0 0.0
  %837 = vmatprep.subr.mxu0 0.0
  %838 = vmatpush1.msra.mxu0 0.0
  %839 = vmatprep.subr.mxu0 0.0
  %840 = vmatpush1.msra.mxu0 0.0
  %841 = vmatprep.subr.mxu0 0.0
  %842 = vmatpush1.msra.mxu0 0.0
  %843 = vmatprep.subr.mxu0 0.0
  %844 = vmatpush1.msra.mxu0 0.0
  %845 = vmatprep.subr.mxu0 0.0
  %846 = vmatpush1.msra.mxu0 0.0
  %847 = vmatprep.subr.mxu0 0.0
  %848 = vmatpush1.msra.mxu0 0.0
  %849 = vmatprep.subr.mxu0 0.0
  %850 = vmatpush1.msra.mxu0 0.0
  %851 = vmatprep.subr.mxu0 0.0
  %852 = vmatpush1.msra.mxu0 0.0
  %853 = vmatprep.subr.mxu0 0.0
  %854 = vmatpush1.msra.mxu0 0.0
  %855 = vmatprep.subr.mxu0 0.0
  %856 = vmatpush1.msra.mxu0 0.0
  %857 = vmatprep.subr.mxu0 0.0
  %858 = vmatpush1.msra.mxu0 0.0
  %859 = vmatprep.subr.mxu0 0.0
  %860 = vmatpush1.msra.mxu0 0.0
  %861 = vmatprep.subr.mxu0 0.0
  %862 = vmatpush1.msra.mxu0 0.0
  %863 = vmatprep.subr.mxu0 0.0
  %864 = vmatpush1.msra.mxu0 0.0
  %865 = vmatprep.subr.mxu0 0.0
  %866 = vmatpush2.msra.mxu0 0.0
  %867 = vmatprep.subr.mxu0 0.0
  %868 = vmatpush2.msra.mxu0 0.0
  %869 = vmatprep.subr.mxu0 0.0
  %870 = vmatpush2.msra.mxu0 0.0
  %871 = vmatprep.subr.mxu0 0.0
  %872 = vmatpush2.msra.mxu0 0.0
  %873 = vmatprep.subr.mxu0 0.0
  %874 = vmatpush2.msra.mxu0 0.0
  %875 = vmatprep.subr.mxu0 0.0
  %876 = vmatpush2.msra.mxu0 0.0
  %877 = vmatprep.subr.mxu0 0.0
  %878 = vmatpush2.msra.mxu0 0.0
  %879 = vmatprep.subr.mxu0 0.0
  %880 = vmatpush2.msra.mxu0 0.0
  %881 = vmatprep.subr.mxu0 0.0
  %882 = vmatpush2.msra.mxu0 0.0
  %883 = vmatprep.subr.mxu0 0.0
  %884 = vmatpush2.msra.mxu0 0.0
  %885 = vmatprep.subr.mxu0 0.0
  %886 = vmatpush2.msra.mxu0 0.0
  %887 = vmatprep.subr.mxu0 0.0
  %888 = vmatpush2.msra.mxu0 0.0
  %889 = vmatprep.subr.mxu0 0.0
  %890 = vmatpush2.msra.mxu0 0.0
  %891 = vmatprep.subr.mxu0 0.0
  %892 = vmatpush2.msra.mxu0 0.0
  %893 = vmatprep.subr.mxu0 0.0
  %894 = vmatpush2.msra.mxu0 0.0
  %895 = vmatprep.subr.mxu0 0.0
  %896 = vmatpush2.msra.mxu0 0.0
  %897 = vmatprep.mubr.f32.mxu0 0.0
  %898 = vmatmul.mubr.f32.gmra.mxu0 %v98
  %v899 = vpop.f32.mrf.mxu0
  %v900 = vadd.f32 0.0, %v899
  %v901 = vpop.f32.mrf.mxu0
  %902 = vmatprep.mubr.f32.mxu0 0.0
  %903 = vmatmul.mubr.f32.gmra.mxu0 %v101
  %v904 = vpop.f32.mrf.mxu0
  %v905 = vadd.f32 0.0, %v904
  %v906 = vpop.f32.mrf.mxu0
  %907 = vmatprep.mubr.f32.mxu0 0.0
  %908 = vmatmul.mubr.f32.gmra.mxu0 %v104
  %v909 = vpop.f32.mrf.mxu0
  %v910 = vadd.f32 0.0, %v909
  %v911 = vpop.f32.mrf.mxu0
  %912 = vmatprep.mubr.f32.mxu0 0.0
  %913 = vmatmul.mubr.f32.gmra.mxu0 %v107
  %v914 = vpop.f32.mrf.mxu0
  %v915 = vadd.f32 0.0, %v914
  %v916 = vpop.f32.mrf.mxu0
  %917 = vdwg.mxu0
  %918 = vmatprep.subr.mxu0 0.0
  %919 = vmatpush1.msra.mxu0 0.0
  %920 = vmatprep.subr.mxu0 0.0
  %921 = vmatpush1.msra.mxu0 0.0
  %922 = vmatprep.subr.mxu0 0.0
  %923 = vmatpush1.msra.mxu0 0.0
  %924 = vmatprep.subr.mxu0 0.0
  %925 = vmatpush1.msra.mxu0 0.0
  %926 = vmatprep.subr.mxu0 0.0
  %927 = vmatpush1.msra.mxu0 0.0
  %928 = vmatprep.subr.mxu0 0.0
  %929 = vmatpush1.msra.mxu0 0.0
  %930 = vmatprep.subr.mxu0 0.0
  %931 = vmatpush1.msra.mxu0 0.0
  %932 = vmatprep.subr.mxu0 0.0
  %933 = vmatpush1.msra.mxu0 0.0
  %934 = vmatprep.subr.mxu0 0.0
  %935 = vmatpush1.msra.mxu0 0.0
  %936 = vmatprep.subr.mxu0 0.0
  %937 = vmatpush1.msra.mxu0 0.0
  %938 = vmatprep.subr.mxu0 0.0
  %939 = vmatpush1.msra.mxu0 0.0
  %940 = vmatprep.subr.mxu0 0.0
  %941 = vmatpush1.msra.mxu0 0.0
  %942 = vmatprep.subr.mxu0 0.0
  %943 = vmatpush1.msra.mxu0 0.0
  %944 = vmatprep.subr.mxu0 0.0
  %945 = vmatpush1.msra.mxu0 0.0
  %946 = vmatprep.subr.mxu0 0.0
  %947 = vmatpush1.msra.mxu0 0.0
  %948 = vmatprep.subr.mxu0 0.0
  %949 = vmatpush1.msra.mxu0 0.0
  %950 = vmatprep.subr.mxu0 0.0
  %951 = vmatpush2.msra.mxu0 0.0
  %952 = vmatprep.subr.mxu0 0.0
  %953 = vmatpush2.msra.mxu0 0.0
  %954 = vmatprep.subr.mxu0 0.0
  %955 = vmatpush2.msra.mxu0 0.0
  %956 = vmatprep.subr.mxu0 0.0
  %957 = vmatpush2.msra.mxu0 0.0
  %958 = vmatprep.subr.mxu0 0.0
  %959 = vmatpush2.msra.mxu0 0.0
  %960 = vmatprep.subr.mxu0 0.0
  %961 = vmatpush2.msra.mxu0 0.0
  %962 = vmatprep.subr.mxu0 0.0
  %963 = vmatpush2.msra.mxu0 0.0
  %964 = vmatprep.subr.mxu0 0.0
  %965 = vmatpush2.msra.mxu0 0.0
  %966 = vmatprep.subr.mxu0 0.0
  %967 = vmatpush2.msra.mxu0 0.0
  %968 = vmatprep.subr.mxu0 0.0
  %969 = vmatpush2.msra.mxu0 0.0
  %970 = vmatprep.subr.mxu0 0.0
  %971 = vmatpush2.msra.mxu0 0.0
  %972 = vmatprep.subr.mxu0 0.0
  %973 = vmatpush2.msra.mxu0 0.0
  %974 = vmatprep.subr.mxu0 0.0
  %975 = vmatpush2.msra.mxu0 0.0
  %976 = vmatprep.subr.mxu0 0.0
  %977 = vmatpush2.msra.mxu0 0.0
  %978 = vmatprep.subr.mxu0 0.0
  %979 = vmatpush2.msra.mxu0 0.0
  %980 = vmatprep.subr.mxu0 0.0
  %981 = vmatpush2.msra.mxu0 0.0
  %982 = vmatprep.mubr.f32.mxu0 0.0
  %983 = vmatmul.mubr.f32.gmra.mxu0 %v195
  %v984 = vpop.f32.mrf.mxu0
  %v985 = vadd.f32 0.0, %v984
  %v986 = vpop.f32.mrf.mxu0
  %987 = vmatprep.mubr.f32.mxu0 0.0
  %988 = vmatmul.mubr.f32.gmra.mxu0 %v198
  %v989 = vpop.f32.mrf.mxu0
  %v990 = vadd.f32 0.0, %v989
  %v991 = vpop.f32.mrf.mxu0
  %992 = vmatprep.mubr.f32.mxu0 0.0
  %993 = vmatmul.mubr.f32.gmra.mxu0 %v201
  %v994 = vpop.f32.mrf.mxu0
  %v995 = vadd.f32 0.0, %v994
  %v996 = vpop.f32.mrf.mxu0
  %997 = vmatprep.mubr.f32.mxu0 0.0
  %998 = vmatmul.mubr.f32.gmra.mxu0 %v204
  %v999 = vpop.f32.mrf.mxu0
  %v1000 = vadd.f32 0.0, %v999
  %v1001 = vpop.f32.mrf.mxu0
  %1002 = vdwg.mxu0
  %1007 = vrot.lane.b32.xlu0 %v900, 32
  %v1008 = vpop.permute.xlu0 %1007
  %1009 = vrot.lane.b32.xlu0 %v905, 32
  %v1010 = vpop.permute.xlu0 %1009
  %1011 = vrot.lane.b32.xlu0 %v910, 32
  %v1012 = vpop.permute.xlu0 %1011
  %1013 = vrot.lane.b32.xlu0 %v915, 32
  %v1014 = vpop.permute.xlu0 %1013
  %1023 = vrot.lane.b32.xlu0 %v985, 64
  %v1024 = vpop.permute.xlu0 %1023
  %1025 = vrot.lane.b32.xlu0 %v990, 64
  %v1026 = vpop.permute.xlu0 %1025
  %1027 = vrot.lane.b32.xlu0 %v995, 64
  %v1028 = vpop.permute.xlu0 %1027
  %1029 = vrot.lane.b32.xlu0 %v1000, 64
  %v1030 = vpop.permute.xlu0 %1029
  %v1035 = vsel %vm96, 0.0, %v1008
  %v1036 = vsel %vm96, 0.0, %v1010
  %v1037 = vsel %vm96, 0.0, %v1012
  %v1038 = vsel %vm96, 0.0, %v1014
  %v1039 = vsel %vm327, %v1035, %v1024
  %v1040 = vsel %vm327, %v1036, %v1026
  %v1041 = vsel %vm327, %v1037, %v1028
  %v1042 = vsel %vm327, %v1038, %v1030
  %v1044 = vsel %vm332, %v1039, 0
  %v1047 = vsel %vm332, %v1040, 0
  %v1050 = vsel %vm332, %v1041, 0
  %v1053 = vsel %vm332, %v1042, 0
  %1055 = vmatprep.subr.mxu0 0.0
  %1056 = vmatpush1.msra.mxu0 0.0
  %1057 = vmatprep.subr.mxu0 0.0
  %1058 = vmatpush1.msra.mxu0 0.0
  %1059 = vmatprep.subr.mxu0 0.0
  %1060 = vmatpush1.msra.mxu0 0.0
  %1061 = vmatprep.subr.mxu0 0.0
  %1062 = vmatpush1.msra.mxu0 0.0
  %1063 = vmatprep.subr.mxu0 0.0
  %1064 = vmatpush1.msra.mxu0 %v69
  %1065 = vmatprep.subr.mxu0 0.0
  %1066 = vmatpush1.msra.mxu0 %v68
  %1067 = vmatprep.subr.mxu0 0.0
  %1068 = vmatpush1.msra.mxu0 %v67
  %1069 = vmatprep.subr.mxu0 0.0
  %1070 = vmatpush1.msra.mxu0 %v66
  %1071 = vmatprep.subr.mxu0 0.0
  %1072 = vmatpush1.msra.mxu0 %v65
  %1073 = vmatprep.subr.mxu0 0.0
  %1074 = vmatpush1.msra.mxu0 %v64
  %1075 = vmatprep.subr.mxu0 0.0
  %1076 = vmatpush1.msra.mxu0 %v63
  %1077 = vmatprep.subr.mxu0 0.0
  %1078 = vmatpush1.msra.mxu0 %v62
  %1079 = vmatprep.subr.mxu0 0.0
  %1080 = vmatpush1.msra.mxu0 %v61
  %1081 = vmatprep.subr.mxu0 0.0
  %1082 = vmatpush1.msra.mxu0 %v60
  %1083 = vmatprep.subr.mxu0 0.0
  %1084 = vmatpush1.msra.mxu0 %v59
  %1085 = vmatprep.subr.mxu0 0.0
  %1086 = vmatpush1.msra.mxu0 %v58
  %1087 = vmatprep.subr.mxu0 0.0
  %1088 = vmatpush2.msra.mxu0 0.0
  %1089 = vmatprep.subr.mxu0 0.0
  %1090 = vmatpush2.msra.mxu0 0.0
  %1091 = vmatprep.subr.mxu0 0.0
  %1092 = vmatpush2.msra.mxu0 0.0
  %1093 = vmatprep.subr.mxu0 0.0
  %1094 = vmatpush2.msra.mxu0 0.0
  %1095 = vmatprep.subr.mxu0 0.0
  %1096 = vmatpush2.msra.mxu0 0.0
  %1097 = vmatprep.subr.mxu0 0.0
  %1098 = vmatpush2.msra.mxu0 0.0
  %1099 = vmatprep.subr.mxu0 0.0
  %1100 = vmatpush2.msra.mxu0 0.0
  %1101 = vmatprep.subr.mxu0 0.0
  %1102 = vmatpush2.msra.mxu0 0.0
  %1103 = vmatprep.subr.mxu0 0.0
  %1104 = vmatpush2.msra.mxu0 0.0
  %1105 = vmatprep.subr.mxu0 0.0
  %1106 = vmatpush2.msra.mxu0 0.0
  %1107 = vmatprep.subr.mxu0 0.0
  %1108 = vmatpush2.msra.mxu0 0.0
  %1109 = vmatprep.subr.mxu0 0.0
  %1110 = vmatpush2.msra.mxu0 0.0
  %1111 = vmatprep.subr.mxu0 0.0
  %1112 = vmatpush2.msra.mxu0 0.0
  %1113 = vmatprep.subr.mxu0 0.0
  %1114 = vmatpush2.msra.mxu0 0.0
  %1115 = vmatprep.subr.mxu0 0.0
  %1116 = vmatpush2.msra.mxu0 0.0
  %1117 = vmatprep.subr.mxu0 0.0
  %1118 = vmatpush2.msra.mxu0 0.0
  %1119 = vmatprep.mubr.f32.mxu0 0.0
  %1120 = vmatmul.mubr.f32.gmra.mxu0 %v1044
  %v1121 = vpop.f32.mrf.mxu0
  %v1122 = vadd.f32 %v412, %v1121
  %v1123 = vpop.f32.mrf.mxu0
  %1124 = vmatprep.mubr.f32.mxu0 0.0
  %1125 = vmatmul.mubr.f32.gmra.mxu0 %v1047
  %v1126 = vpop.f32.mrf.mxu0
  %v1127 = vadd.f32 %v417, %v1126
  %v1128 = vpop.f32.mrf.mxu0
  %1129 = vmatprep.mubr.f32.mxu0 0.0
  %1130 = vmatmul.mubr.f32.gmra.mxu0 %v1050
  %v1131 = vpop.f32.mrf.mxu0
  %v1132 = vadd.f32 %v422, %v1131
  %v1133 = vpop.f32.mrf.mxu0
  %1134 = vmatprep.mubr.f32.mxu0 0.0
  %1135 = vmatmul.mubr.f32.gmra.mxu0 %v1053
  %v1136 = vpop.f32.mrf.mxu0
  %v1137 = vadd.f32 %v427, %v1136
  %v1138 = vpop.f32.mrf.mxu0
  %1139 = vdwg.mxu0
  %v1140 = vxor.u32 %v1122, 2147483648
  %v1141 = vxor.u32 %v1127, 2147483648
  %v1142 = vxor.u32 %v1132, 2147483648
  %v1143 = vxor.u32 %v1137, 2147483648
  %v1144 = vmul.f32 %v1140, 1.442695
  %v1145 = vpow.pop %v1144
  %v1146 = vmul.f32 %v1141, 1.442695
  %v1147 = vpow.pop %v1146
  %v1148 = vmul.f32 %v1142, 1.442695
  %v1149 = vpow.pop %v1148
  %v1150 = vmul.f32 %v1143, 1.442695
  %v1151 = vpow.pop %v1150
  %v1152 = vadd.f32 %v1145, 1.0
  %v1153 = vadd.f32 %v1147, 1.0
  %v1154 = vadd.f32 %v1149, 1.0
  %v1155 = vadd.f32 %v1151, 1.0
  %v1156 = vrcp.pop %v1152
  %v1157 = vmul.f32 1.0, %v1156
  %v1158 = vrcp.pop %v1153
  %v1159 = vmul.f32 1.0, %v1158
  %v1160 = vrcp.pop %v1154
  %v1161 = vmul.f32 1.0, %v1160
  %v1162 = vrcp.pop %v1155
  %v1163 = vmul.f32 1.0, %v1162
  %v1164 = vmul.f32 %v1157, 0.0
  %v1165 = vmul.f32 %v1159, 0.0
  %v1166 = vmul.f32 %v1161, 0.0
  %v1167 = vmul.f32 %v1163, 0.0
  %1172 = vrot.lane.b32.xlu0 %v1164, 96
  %v1173 = vpop.permute.xlu0 %1172
  %1174 = vrot.lane.b32.xlu0 %v1165, 96
  %v1175 = vpop.permute.xlu0 %1174
  %1176 = vrot.lane.b32.xlu0 %v1166, 96
  %v1177 = vpop.permute.xlu0 %1176
  %1178 = vrot.lane.b32.xlu0 %v1167, 96
  %v1179 = vpop.permute.xlu0 %1178
  %1184 = vmatprep.subr.mxu0 0.0
  %1185 = vmatpush1.msra.mxu0 0.0
  %1186 = vmatprep.subr.mxu0 0.0
  %1187 = vmatpush1.msra.mxu0 0.0
  %1188 = vmatprep.subr.mxu0 0.0
  %1189 = vmatpush1.msra.mxu0 0.0
  %1190 = vmatprep.subr.mxu0 0.0
  %1191 = vmatpush1.msra.mxu0 0.0
  %1192 = vmatprep.subr.mxu0 0.0
  %1193 = vmatpush1.msra.mxu0 0.0
  %1194 = vmatprep.subr.mxu0 0.0
  %1195 = vmatpush1.msra.mxu0 0.0
  %1196 = vmatprep.subr.mxu0 0.0
  %1197 = vmatpush1.msra.mxu0 0.0
  %1198 = vmatprep.subr.mxu0 0.0
  %1199 = vmatpush1.msra.mxu0 0.0
  %1200 = vmatprep.subr.mxu0 0.0
  %1201 = vmatpush1.msra.mxu0 0.0
  %1202 = vmatprep.subr.mxu0 0.0
  %1203 = vmatpush1.msra.mxu0 0.0
  %1204 = vmatprep.subr.mxu0 0.0
  %1205 = vmatpush1.msra.mxu0 0.0
  %1206 = vmatprep.subr.mxu0 0.0
  %1207 = vmatpush1.msra.mxu0 0.0
  %1208 = vmatprep.subr.mxu0 0.0
  %1209 = vmatpush1.msra.mxu0 %v1179
  %1210 = vmatprep.subr.mxu0 0.0
  %1211 = vmatpush1.msra.mxu0 %v1177
  %1212 = vmatprep.subr.mxu0 0.0
  %1213 = vmatpush1.msra.mxu0 %v1175
  %1214 = vmatprep.subr.mxu0 0.0
  %1215 = vmatpush1.msra.mxu0 %v1173
  %1216 = vmatprep.subr.mxu0 0.0
  %1217 = vmatpush2.msra.mxu0 0.0
  %1218 = vmatprep.subr.mxu0 0.0
  %1219 = vmatpush2.msra.mxu0 0.0
  %1220 = vmatprep.subr.mxu0 0.0
  %1221 = vmatpush2.msra.mxu0 0.0
  %1222 = vmatprep.subr.mxu0 0.0
  %1223 = vmatpush2.msra.mxu0 0.0
  %1224 = vmatprep.subr.mxu0 0.0
  %1225 = vmatpush2.msra.mxu0 0.0
  %1226 = vmatprep.subr.mxu0 0.0
  %1227 = vmatpush2.msra.mxu0 0.0
  %1228 = vmatprep.subr.mxu0 0.0
  %1229 = vmatpush2.msra.mxu0 0.0
  %1230 = vmatprep.subr.mxu0 0.0
  %1231 = vmatpush2.msra.mxu0 0.0
  %1232 = vmatprep.subr.mxu0 0.0
  %1233 = vmatpush2.msra.mxu0 0.0
  %1234 = vmatprep.subr.mxu0 0.0
  %1235 = vmatpush2.msra.mxu0 0.0
  %1236 = vmatprep.subr.mxu0 0.0
  %1237 = vmatpush2.msra.mxu0 0.0
  %1238 = vmatprep.subr.mxu0 0.0
  %1239 = vmatpush2.msra.mxu0 0.0
  %1240 = vmatprep.subr.mxu0 0.0
  %1241 = vmatpush2.msra.mxu0 0.0
  %1242 = vmatprep.subr.mxu0 0.0
  %1243 = vmatpush2.msra.mxu0 0.0
  %1244 = vmatprep.subr.mxu0 0.0
  %1245 = vmatpush2.msra.mxu0 0.0
  %1246 = vmatprep.subr.mxu0 0.0
  %1247 = vmatpush2.msra.mxu0 0.0
  %1248 = vmatprep.mubr.f32.mxu0 0.0
  %1249 = vmatmul.mubr.f32.gmra.mxu0 %v98
  %v1250 = vpop.f32.mrf.mxu0
  %v1251 = vadd.f32 0.0, %v1250
  %v1252 = vpop.f32.mrf.mxu0
  %1253 = vmatprep.mubr.f32.mxu0 0.0
  %1254 = vmatmul.mubr.f32.gmra.mxu0 %v101
  %v1255 = vpop.f32.mrf.mxu0
  %v1256 = vadd.f32 0.0, %v1255
  %v1257 = vpop.f32.mrf.mxu0
  %1258 = vmatprep.mubr.f32.mxu0 0.0
  %1259 = vmatmul.mubr.f32.gmra.mxu0 %v104
  %v1260 = vpop.f32.mrf.mxu0
  %v1261 = vadd.f32 0.0, %v1260
  %v1262 = vpop.f32.mrf.mxu0
  %1263 = vmatprep.mubr.f32.mxu0 0.0
  %1264 = vmatmul.mubr.f32.gmra.mxu0 %v107
  %v1265 = vpop.f32.mrf.mxu0
  %v1266 = vadd.f32 0.0, %v1265
  %v1267 = vpop.f32.mrf.mxu0
  %1268 = vdwg.mxu0
  %1269 = vmatprep.subr.mxu0 0.0
  %1270 = vmatpush1.msra.mxu0 0.0
  %1271 = vmatprep.subr.mxu0 0.0
  %1272 = vmatpush1.msra.mxu0 0.0
  %1273 = vmatprep.subr.mxu0 0.0
  %1274 = vmatpush1.msra.mxu0 0.0
  %1275 = vmatprep.subr.mxu0 0.0
  %1276 = vmatpush1.msra.mxu0 0.0
  %1277 = vmatprep.subr.mxu0 0.0
  %1278 = vmatpush1.msra.mxu0 0.0
  %1279 = vmatprep.subr.mxu0 0.0
  %1280 = vmatpush1.msra.mxu0 0.0
  %1281 = vmatprep.subr.mxu0 0.0
  %1282 = vmatpush1.msra.mxu0 0.0
  %1283 = vmatprep.subr.mxu0 0.0
  %1284 = vmatpush1.msra.mxu0 0.0
  %1285 = vmatprep.subr.mxu0 0.0
  %1286 = vmatpush1.msra.mxu0 0.0
  %1287 = vmatprep.subr.mxu0 0.0
  %1288 = vmatpush1.msra.mxu0 0.0
  %1289 = vmatprep.subr.mxu0 0.0
  %1290 = vmatpush1.msra.mxu0 0.0
  %1291 = vmatprep.subr.mxu0 0.0
  %1292 = vmatpush1.msra.mxu0 0.0
  %1293 = vmatprep.subr.mxu0 0.0
  %1294 = vmatpush1.msra.mxu0 %v1179
  %1295 = vmatprep.subr.mxu0 0.0
  %1296 = vmatpush1.msra.mxu0 %v1177
  %1297 = vmatprep.subr.mxu0 0.0
  %1298 = vmatpush1.msra.mxu0 %v1175
  %1299 = vmatprep.subr.mxu0 0.0
  %1300 = vmatpush1.msra.mxu0 %v1173
  %1301 = vmatprep.subr.mxu0 0.0
  %1302 = vmatpush2.msra.mxu0 0.0
  %1303 = vmatprep.subr.mxu0 0.0
  %1304 = vmatpush2.msra.mxu0 0.0
  %1305 = vmatprep.subr.mxu0 0.0
  %1306 = vmatpush2.msra.mxu0 0.0
  %1307 = vmatprep.subr.mxu0 0.0
  %1308 = vmatpush2.msra.mxu0 0.0
  %1309 = vmatprep.subr.mxu0 0.0
  %1310 = vmatpush2.msra.mxu0 0.0
  %1311 = vmatprep.subr.mxu0 0.0
  %1312 = vmatpush2.msra.mxu0 0.0
  %1313 = vmatprep.subr.mxu0 0.0
  %1314 = vmatpush2.msra.mxu0 0.0
  %1315 = vmatprep.subr.mxu0 0.0
  %1316 = vmatpush2.msra.mxu0 0.0
  %1317 = vmatprep.subr.mxu0 0.0
  %1318 = vmatpush2.msra.mxu0 0.0
  %1319 = vmatprep.subr.mxu0 0.0
  %1320 = vmatpush2.msra.mxu0 0.0
  %1321 = vmatprep.subr.mxu0 0.0
  %1322 = vmatpush2.msra.mxu0 0.0
  %1323 = vmatprep.subr.mxu0 0.0
  %1324 = vmatpush2.msra.mxu0 0.0
  %1325 = vmatprep.subr.mxu0 0.0
  %1326 = vmatpush2.msra.mxu0 0.0
  %1327 = vmatprep.subr.mxu0 0.0
  %1328 = vmatpush2.msra.mxu0 0.0
  %1329 = vmatprep.subr.mxu0 0.0
  %1330 = vmatpush2.msra.mxu0 0.0
  %1331 = vmatprep.subr.mxu0 0.0
  %1332 = vmatpush2.msra.mxu0 0.0
  %1333 = vmatprep.mubr.f32.mxu0 0.0
  %1334 = vmatmul.mubr.f32.gmra.mxu0 %v195
  %v1335 = vpop.f32.mrf.mxu0
  %v1336 = vadd.f32 0.0, %v1335
  %v1337 = vpop.f32.mrf.mxu0
  %1338 = vmatprep.mubr.f32.mxu0 0.0
  %1339 = vmatmul.mubr.f32.gmra.mxu0 %v198
  %v1340 = vpop.f32.mrf.mxu0
  %v1341 = vadd.f32 0.0, %v1340
  %v1342 = vpop.f32.mrf.mxu0
  %1343 = vmatprep.mubr.f32.mxu0 0.0
  %1344 = vmatmul.mubr.f32.gmra.mxu0 %v201
  %v1345 = vpop.f32.mrf.mxu0
  %v1346 = vadd.f32 0.0, %v1345
  %v1347 = vpop.f32.mrf.mxu0
  %1348 = vmatprep.mubr.f32.mxu0 0.0
  %1349 = vmatmul.mubr.f32.gmra.mxu0 %v204
  %v1350 = vpop.f32.mrf.mxu0
  %v1351 = vadd.f32 0.0, %v1350
  %v1352 = vpop.f32.mrf.mxu0
  %1353 = vdwg.mxu0
  %1358 = vrot.lane.b32.xlu0 %v1251, 32
  %v1359 = vpop.permute.xlu0 %1358
  %1360 = vrot.lane.b32.xlu0 %v1256, 32
  %v1361 = vpop.permute.xlu0 %1360
  %1362 = vrot.lane.b32.xlu0 %v1261, 32
  %v1363 = vpop.permute.xlu0 %1362
  %1364 = vrot.lane.b32.xlu0 %v1266, 32
  %v1365 = vpop.permute.xlu0 %1364
  %1374 = vrot.lane.b32.xlu0 %v1336, 64
  %v1375 = vpop.permute.xlu0 %1374
  %1376 = vrot.lane.b32.xlu0 %v1341, 64
  %v1377 = vpop.permute.xlu0 %1376
  %1378 = vrot.lane.b32.xlu0 %v1346, 64
  %v1379 = vpop.permute.xlu0 %1378
  %1380 = vrot.lane.b32.xlu0 %v1351, 64
  %v1381 = vpop.permute.xlu0 %1380
  %v1386 = vsel %vm96, %v1173, %v1359
  %v1387 = vsel %vm96, %v1175, %v1361
  %v1388 = vsel %vm96, %v1177, %v1363
  %v1389 = vsel %vm96, %v1179, %v1365
  %v1390 = vsel %vm327, %v1386, %v1375
  %v1391 = vsel %vm327, %v1387, %v1377
  %v1392 = vsel %vm327, %v1388, %v1379
  %v1393 = vsel %vm327, %v1389, %v1381
  %1398 = vrot.lane.b32.xlu0 %v412, 64
  %v1399 = vpop.permute.xlu0 %1398
  %1400 = vrot.lane.b32.xlu0 %v417, 64
  %v1401 = vpop.permute.xlu0 %1400
  %1402 = vrot.lane.b32.xlu0 %v422, 64
  %v1403 = vpop.permute.xlu0 %1402
  %1404 = vrot.lane.b32.xlu0 %v427, 64
  %v1405 = vpop.permute.xlu0 %1404
  %v1411 = vsel %vm332, %v1390, 0
  %v1414 = vsel %vm332, %v1391, 0
  %v1417 = vsel %vm332, %v1392, 0
  %v1420 = vsel %vm332, %v1393, 0
  %1422 = vmatprep.subr.mxu0 0.0
  %1423 = vmatpush1.msra.mxu0 0.0
  %1424 = vmatprep.subr.mxu0 0.0
  %1425 = vmatpush1.msra.mxu0 0.0
  %1426 = vmatprep.subr.mxu0 0.0
  %1427 = vmatpush1.msra.mxu0 0.0
  %1428 = vmatprep.subr.mxu0 0.0
  %1429 = vmatpush1.msra.mxu0 0.0
  %1430 = vmatprep.subr.mxu0 0.0
  %1431 = vmatpush1.msra.mxu0 %v81
  %1432 = vmatprep.subr.mxu0 0.0
  %1433 = vmatpush1.msra.mxu0 %v80
  %1434 = vmatprep.subr.mxu0 0.0
  %1435 = vmatpush1.msra.mxu0 %v79
  %1436 = vmatprep.subr.mxu0 0.0
  %1437 = vmatpush1.msra.mxu0 %v78
  %1438 = vmatprep.subr.mxu0 0.0
  %1439 = vmatpush1.msra.mxu0 %v77
  %1440 = vmatprep.subr.mxu0 0.0
  %1441 = vmatpush1.msra.mxu0 %v76
  %1442 = vmatprep.subr.mxu0 0.0
  %1443 = vmatpush1.msra.mxu0 %v75
  %1444 = vmatprep.subr.mxu0 0.0
  %1445 = vmatpush1.msra.mxu0 %v74
  %1446 = vmatprep.subr.mxu0 0.0
  %1447 = vmatpush1.msra.mxu0 %v73
  %1448 = vmatprep.subr.mxu0 0.0
  %1449 = vmatpush1.msra.mxu0 %v72
  %1450 = vmatprep.subr.mxu0 0.0
  %1451 = vmatpush1.msra.mxu0 %v71
  %1452 = vmatprep.subr.mxu0 0.0
  %1453 = vmatpush1.msra.mxu0 %v70
  %1454 = vmatprep.subr.mxu0 0.0
  %1455 = vmatpush2.msra.mxu0 0.0
  %1456 = vmatprep.subr.mxu0 0.0
  %1457 = vmatpush2.msra.mxu0 0.0
  %1458 = vmatprep.subr.mxu0 0.0
  %1459 = vmatpush2.msra.mxu0 0.0
  %1460 = vmatprep.subr.mxu0 0.0
  %1461 = vmatpush2.msra.mxu0 0.0
  %1462 = vmatprep.subr.mxu0 0.0
  %1463 = vmatpush2.msra.mxu0 0.0
  %1464 = vmatprep.subr.mxu0 0.0
  %1465 = vmatpush2.msra.mxu0 0.0
  %1466 = vmatprep.subr.mxu0 0.0
  %1467 = vmatpush2.msra.mxu0 0.0
  %1468 = vmatprep.subr.mxu0 0.0
  %1469 = vmatpush2.msra.mxu0 0.0
  %1470 = vmatprep.subr.mxu0 0.0
  %1471 = vmatpush2.msra.mxu0 0.0
  %1472 = vmatprep.subr.mxu0 0.0
  %1473 = vmatpush2.msra.mxu0 0.0
  %1474 = vmatprep.subr.mxu0 0.0
  %1475 = vmatpush2.msra.mxu0 0.0
  %1476 = vmatprep.subr.mxu0 0.0
  %1477 = vmatpush2.msra.mxu0 0.0
  %1478 = vmatprep.subr.mxu0 0.0
  %1479 = vmatpush2.msra.mxu0 0.0
  %1480 = vmatprep.subr.mxu0 0.0
  %1481 = vmatpush2.msra.mxu0 0.0
  %1482 = vmatprep.subr.mxu0 0.0
  %1483 = vmatpush2.msra.mxu0 0.0
  %1484 = vmatprep.subr.mxu0 0.0
  %1485 = vmatpush2.msra.mxu0 0.0
  %1486 = vmatprep.mubr.f32.mxu0 0.0
  %1487 = vmatmul.mubr.f32.gmra.mxu0 %v1411
  %v1488 = vpop.f32.mrf.mxu0
  %v1489 = vadd.f32 %v1399, %v1488
  %v1490 = vpop.f32.mrf.mxu0
  %1491 = vmatprep.mubr.f32.mxu0 0.0
  %1492 = vmatmul.mubr.f32.gmra.mxu0 %v1414
  %v1493 = vpop.f32.mrf.mxu0
  %v1494 = vadd.f32 %v1401, %v1493
  %v1495 = vpop.f32.mrf.mxu0
  %1496 = vmatprep.mubr.f32.mxu0 0.0
  %1497 = vmatmul.mubr.f32.gmra.mxu0 %v1417
  %v1498 = vpop.f32.mrf.mxu0
  %v1499 = vadd.f32 %v1403, %v1498
  %v1500 = vpop.f32.mrf.mxu0
  %1501 = vmatprep.mubr.f32.mxu0 0.0
  %1502 = vmatmul.mubr.f32.gmra.mxu0 %v1420
  %v1503 = vpop.f32.mrf.mxu0
  %v1504 = vadd.f32 %v1405, %v1503
  %v1505 = vpop.f32.mrf.mxu0
  %1506 = vdwg.mxu0
  %v1507 = vtanh.pop %v1489
  %v1508 = vtanh.pop %v1494
  %v1509 = vtanh.pop %v1499
  %v1510 = vtanh.pop %v1504
  %v1511 = vsub.f32 1.0, %v1157
  %v1512 = vsub.f32 1.0, %v1159
  %v1513 = vsub.f32 1.0, %v1161
  %v1514 = vsub.f32 1.0, %v1163
  %v1515 = vmul.f32 %v1511, %v1507
  %v1516 = vmul.f32 %v1512, %v1508
  %v1517 = vmul.f32 %v1513, %v1509
  %v1518 = vmul.f32 %v1514, %v1510
  %v1519 = vadd.f32 %v1164, %v1515
  %v1520 = vadd.f32 %v1165, %v1516
  %v1521 = vadd.f32 %v1166, %v1517
  %v1522 = vadd.f32 %v1167, %v1518
  %1523 = vmatprep.subr.mxu0 0.0
  %1524 = vmatpush1.msra.mxu0 0.0
  %1525 = vmatprep.subr.mxu0 0.0
  %1526 = vmatpush1.msra.mxu0 0.0
  %1527 = vmatprep.subr.mxu0 0.0
  %1528 = vmatpush1.msra.mxu0 0.0
  %1529 = vmatprep.subr.mxu0 0.0
  %1530 = vmatpush1.msra.mxu0 0.0
  %1531 = vmatprep.subr.mxu0 0.0
  %1532 = vmatpush1.msra.mxu0 0.0
  %1533 = vmatprep.subr.mxu0 0.0
  %1534 = vmatpush1.msra.mxu0 0.0
  %1535 = vmatprep.subr.mxu0 0.0
  %1536 = vmatpush1.msra.mxu0 0.0
  %1537 = vmatprep.subr.mxu0 0.0
  %1538 = vmatpush1.msra.mxu0 0.0
  %1539 = vmatprep.subr.mxu0 0.0
  %1540 = vmatpush1.msra.mxu0 0.0
  %1541 = vmatprep.subr.mxu0 0.0
  %1542 = vmatpush1.msra.mxu0 0.0
  %1543 = vmatprep.subr.mxu0 0.0
  %1544 = vmatpush1.msra.mxu0 0.0
  %1545 = vmatprep.subr.mxu0 0.0
  %1546 = vmatpush1.msra.mxu0 0.0
  %1547 = vmatprep.subr.mxu0 0.0
  %1548 = vmatpush1.msra.mxu0 %v1522
  %1549 = vmatprep.subr.mxu0 0.0
  %1550 = vmatpush1.msra.mxu0 %v1521
  %1551 = vmatprep.subr.mxu0 0.0
  %1552 = vmatpush1.msra.mxu0 %v1520
  %1553 = vmatprep.subr.mxu0 0.0
  %1554 = vmatpush1.msra.mxu0 %v1519
  %1555 = vmatprep.subr.mxu0 0.0
  %1556 = vmatpush2.msra.mxu0 0.0
  %1557 = vmatprep.subr.mxu0 0.0
  %1558 = vmatpush2.msra.mxu0 0.0
  %1559 = vmatprep.subr.mxu0 0.0
  %1560 = vmatpush2.msra.mxu0 0.0
  %1561 = vmatprep.subr.mxu0 0.0
  %1562 = vmatpush2.msra.mxu0 0.0
  %1563 = vmatprep.subr.mxu0 0.0
  %1564 = vmatpush2.msra.mxu0 0.0
  %1565 = vmatprep.subr.mxu0 0.0
  %1566 = vmatpush2.msra.mxu0 0.0
  %1567 = vmatprep.subr.mxu0 0.0
  %1568 = vmatpush2.msra.mxu0 0.0
  %1569 = vmatprep.subr.mxu0 0.0
  %1570 = vmatpush2.msra.mxu0 0.0
  %1571 = vmatprep.subr.mxu0 0.0
  %1572 = vmatpush2.msra.mxu0 0.0
  %1573 = vmatprep.subr.mxu0 0.0
  %1574 = vmatpush2.msra.mxu0 0.0
  %1575 = vmatprep.subr.mxu0 0.0
  %1576 = vmatpush2.msra.mxu0 0.0
  %1577 = vmatprep.subr.mxu0 0.0
  %1578 = vmatpush2.msra.mxu0 0.0
  %1579 = vmatprep.subr.mxu0 0.0
  %1580 = vmatpush2.msra.mxu0 0.0
  %1581 = vmatprep.subr.mxu0 0.0
  %1582 = vmatpush2.msra.mxu0 0.0
  %1583 = vmatprep.subr.mxu0 0.0
  %1584 = vmatpush2.msra.mxu0 0.0
  %1585 = vmatprep.subr.mxu0 0.0
  %1586 = vmatpush2.msra.mxu0 0.0
  %1587 = vmatprep.mubr.f32.mxu0 0.0
  %1588 = vmatmul.mubr.f32.gmra.mxu0 %v98
  %v1589 = vpop.f32.mrf.mxu0
  %v1590 = vadd.f32 0.0, %v1589
  %v1591 = vpop.f32.mrf.mxu0
  %1592 = vmatprep.mubr.f32.mxu0 0.0
  %1593 = vmatmul.mubr.f32.gmra.mxu0 %v101
  %v1594 = vpop.f32.mrf.mxu0
  %v1595 = vadd.f32 0.0, %v1594
  %v1596 = vpop.f32.mrf.mxu0
  %1597 = vmatprep.mubr.f32.mxu0 0.0
  %1598 = vmatmul.mubr.f32.gmra.mxu0 %v104
  %v1599 = vpop.f32.mrf.mxu0
  %v1600 = vadd.f32 0.0, %v1599
  %v1601 = vpop.f32.mrf.mxu0
  %1602 = vmatprep.mubr.f32.mxu0 0.0
  %1603 = vmatmul.mubr.f32.gmra.mxu0 %v107
  %v1604 = vpop.f32.mrf.mxu0
  %v1605 = vadd.f32 0.0, %v1604
  %v1606 = vpop.f32.mrf.mxu0
  %1607 = vdwg.mxu0
  %1608 = vmatprep.subr.mxu0 0.0
  %1609 = vmatpush1.msra.mxu0 0.0
  %1610 = vmatprep.subr.mxu0 0.0
  %1611 = vmatpush1.msra.mxu0 0.0
  %1612 = vmatprep.subr.mxu0 0.0
  %1613 = vmatpush1.msra.mxu0 0.0
  %1614 = vmatprep.subr.mxu0 0.0
  %1615 = vmatpush1.msra.mxu0 0.0
  %1616 = vmatprep.subr.mxu0 0.0
  %1617 = vmatpush1.msra.mxu0 0.0
  %1618 = vmatprep.subr.mxu0 0.0
  %1619 = vmatpush1.msra.mxu0 0.0
  %1620 = vmatprep.subr.mxu0 0.0
  %1621 = vmatpush1.msra.mxu0 0.0
  %1622 = vmatprep.subr.mxu0 0.0
  %1623 = vmatpush1.msra.mxu0 0.0
  %1624 = vmatprep.subr.mxu0 0.0
  %1625 = vmatpush1.msra.mxu0 0.0
  %1626 = vmatprep.subr.mxu0 0.0
  %1627 = vmatpush1.msra.mxu0 0.0
  %1628 = vmatprep.subr.mxu0 0.0
  %1629 = vmatpush1.msra.mxu0 0.0
  %1630 = vmatprep.subr.mxu0 0.0
  %1631 = vmatpush1.msra.mxu0 0.0
  %1632 = vmatprep.subr.mxu0 0.0
  %1633 = vmatpush1.msra.mxu0 %v1522
  %1634 = vmatprep.subr.mxu0 0.0
  %1635 = vmatpush1.msra.mxu0 %v1521
  %1636 = vmatprep.subr.mxu0 0.0
  %1637 = vmatpush1.msra.mxu0 %v1520
  %1638 = vmatprep.subr.mxu0 0.0
  %1639 = vmatpush1.msra.mxu0 %v1519
  %1640 = vmatprep.subr.mxu0 0.0
  %1641 = vmatpush2.msra.mxu0 0.0
  %1642 = vmatprep.subr.mxu0 0.0
  %1643 = vmatpush2.msra.mxu0 0.0
  %1644 = vmatprep.subr.mxu0 0.0
  %1645 = vmatpush2.msra.mxu0 0.0
  %1646 = vmatprep.subr.mxu0 0.0
  %1647 = vmatpush2.msra.mxu0 0.0
  %1648 = vmatprep.subr.mxu0 0.0
  %1649 = vmatpush2.msra.mxu0 0.0
  %1650 = vmatprep.subr.mxu0 0.0
  %1651 = vmatpush2.msra.mxu0 0.0
  %1652 = vmatprep.subr.mxu0 0.0
  %1653 = vmatpush2.msra.mxu0 0.0
  %1654 = vmatprep.subr.mxu0 0.0
  %1655 = vmatpush2.msra.mxu0 0.0
  %1656 = vmatprep.subr.mxu0 0.0
  %1657 = vmatpush2.msra.mxu0 0.0
  %1658 = vmatprep.subr.mxu0 0.0
  %1659 = vmatpush2.msra.mxu0 0.0
  %1660 = vmatprep.subr.mxu0 0.0
  %1661 = vmatpush2.msra.mxu0 0.0
  %1662 = vmatprep.subr.mxu0 0.0
  %1663 = vmatpush2.msra.mxu0 0.0
  %1664 = vmatprep.subr.mxu0 0.0
  %1665 = vmatpush2.msra.mxu0 0.0
  %1666 = vmatprep.subr.mxu0 0.0
  %1667 = vmatpush2.msra.mxu0 0.0
  %1668 = vmatprep.subr.mxu0 0.0
  %1669 = vmatpush2.msra.mxu0 0.0
  %1670 = vmatprep.subr.mxu0 0.0
  %1671 = vmatpush2.msra.mxu0 0.0
  %1672 = vmatprep.mubr.f32.mxu0 0.0
  %1673 = vmatmul.mubr.f32.gmra.mxu0 %v195
  %v1674 = vpop.f32.mrf.mxu0
  %v1675 = vadd.f32 0.0, %v1674
  %v1676 = vpop.f32.mrf.mxu0
  %1677 = vmatprep.mubr.f32.mxu0 0.0
  %1678 = vmatmul.mubr.f32.gmra.mxu0 %v198
  %v1679 = vpop.f32.mrf.mxu0
  %v1680 = vadd.f32 0.0, %v1679
  %v1681 = vpop.f32.mrf.mxu0
  %1682 = vmatprep.mubr.f32.mxu0 0.0
  %1683 = vmatmul.mubr.f32.gmra.mxu0 %v201
  %v1684 = vpop.f32.mrf.mxu0
  %v1685 = vadd.f32 0.0, %v1684
  %v1686 = vpop.f32.mrf.mxu0
  %1687 = vmatprep.mubr.f32.mxu0 0.0
  %1688 = vmatmul.mubr.f32.gmra.mxu0 %v204
  %v1689 = vpop.f32.mrf.mxu0
  %v1690 = vadd.f32 0.0, %v1689
  %v1691 = vpop.f32.mrf.mxu0
  %1692 = vdwg.mxu0
  %1697 = vrot.lane.b32.xlu0 %v1590, 32
  %v1698 = vpop.permute.xlu0 %1697
  %1699 = vrot.lane.b32.xlu0 %v1595, 32
  %v1700 = vpop.permute.xlu0 %1699
  %1701 = vrot.lane.b32.xlu0 %v1600, 32
  %v1702 = vpop.permute.xlu0 %1701
  %1703 = vrot.lane.b32.xlu0 %v1605, 32
  %v1704 = vpop.permute.xlu0 %1703
  %1713 = vrot.lane.b32.xlu0 %v1675, 64
  %v1714 = vpop.permute.xlu0 %1713
  %1715 = vrot.lane.b32.xlu0 %v1680, 64
  %v1716 = vpop.permute.xlu0 %1715
  %1717 = vrot.lane.b32.xlu0 %v1685, 64
  %v1718 = vpop.permute.xlu0 %1717
  %1719 = vrot.lane.b32.xlu0 %v1690, 64
  %v1720 = vpop.permute.xlu0 %1719
  %v1725 = vsel %vm96, %v1519, %v1698
  %v1726 = vsel %vm96, %v1520, %v1700
  %v1727 = vsel %vm96, %v1521, %v1702
  %v1728 = vsel %vm96, %v1522, %v1704
  %v1729 = vsel %vm327, %v1725, %v1714
  %v1730 = vsel %vm327, %v1726, %v1716
  %v1731 = vsel %vm327, %v1727, %v1718
  %v1732 = vsel %vm327, %v1728, %v1720
  %v1734 = vsel %vm332, %v1729, 0
  %v1737 = vsel %vm332, %v1730, 0
  %v1740 = vsel %vm332, %v1731, 0
  %v1743 = vsel %vm332, %v1732, 0
  %1745 = vmatprep.subr.mxu0 0.0
  %1746 = vmatpush1.msra.mxu0 0.0
  %1747 = vmatprep.subr.mxu0 0.0
  %1748 = vmatpush1.msra.mxu0 0.0
  %1749 = vmatprep.subr.mxu0 0.0
  %1750 = vmatpush1.msra.mxu0 0.0
  %1751 = vmatprep.subr.mxu0 0.0
  %1752 = vmatpush1.msra.mxu0 0.0
  %1753 = vmatprep.subr.mxu0 0.0
  %1754 = vmatpush1.msra.mxu0 %v69
  %1755 = vmatprep.subr.mxu0 0.0
  %1756 = vmatpush1.msra.mxu0 %v68
  %1757 = vmatprep.subr.mxu0 0.0
  %1758 = vmatpush1.msra.mxu0 %v67
  %1759 = vmatprep.subr.mxu0 0.0
  %1760 = vmatpush1.msra.mxu0 %v66
  %1761 = vmatprep.subr.mxu0 0.0
  %1762 = vmatpush1.msra.mxu0 %v65
  %1763 = vmatprep.subr.mxu0 0.0
  %1764 = vmatpush1.msra.mxu0 %v64
  %1765 = vmatprep.subr.mxu0 0.0
  %1766 = vmatpush1.msra.mxu0 %v63
  %1767 = vmatprep.subr.mxu0 0.0
  %1768 = vmatpush1.msra.mxu0 %v62
  %1769 = vmatprep.subr.mxu0 0.0
  %1770 = vmatpush1.msra.mxu0 %v61
  %1771 = vmatprep.subr.mxu0 0.0
  %1772 = vmatpush1.msra.mxu0 %v60
  %1773 = vmatprep.subr.mxu0 0.0
  %1774 = vmatpush1.msra.mxu0 %v59
  %1775 = vmatprep.subr.mxu0 0.0
  %1776 = vmatpush1.msra.mxu0 %v58
  %1777 = vmatprep.subr.mxu0 0.0
  %1778 = vmatpush2.msra.mxu0 0.0
  %1779 = vmatprep.subr.mxu0 0.0
  %1780 = vmatpush2.msra.mxu0 0.0
  %1781 = vmatprep.subr.mxu0 0.0
  %1782 = vmatpush2.msra.mxu0 0.0
  %1783 = vmatprep.subr.mxu0 0.0
  %1784 = vmatpush2.msra.mxu0 0.0
  %1785 = vmatprep.subr.mxu0 0.0
  %1786 = vmatpush2.msra.mxu0 0.0
  %1787 = vmatprep.subr.mxu0 0.0
  %1788 = vmatpush2.msra.mxu0 0.0
  %1789 = vmatprep.subr.mxu0 0.0
  %1790 = vmatpush2.msra.mxu0 0.0
  %1791 = vmatprep.subr.mxu0 0.0
  %1792 = vmatpush2.msra.mxu0 0.0
  %1793 = vmatprep.subr.mxu0 0.0
  %1794 = vmatpush2.msra.mxu0 0.0
  %1795 = vmatprep.subr.mxu0 0.0
  %1796 = vmatpush2.msra.mxu0 0.0
  %1797 = vmatprep.subr.mxu0 0.0
  %1798 = vmatpush2.msra.mxu0 0.0
  %1799 = vmatprep.subr.mxu0 0.0
  %1800 = vmatpush2.msra.mxu0 0.0
  %1801 = vmatprep.subr.mxu0 0.0
  %1802 = vmatpush2.msra.mxu0 0.0
  %1803 = vmatprep.subr.mxu0 0.0
  %1804 = vmatpush2.msra.mxu0 0.0
  %1805 = vmatprep.subr.mxu0 0.0
  %1806 = vmatpush2.msra.mxu0 0.0
  %1807 = vmatprep.subr.mxu0 0.0
  %1808 = vmatpush2.msra.mxu0 0.0
  %1809 = vmatprep.mubr.f32.mxu0 0.0
  %1810 = vmatmul.mubr.f32.gmra.mxu0 %v1734
  %v1811 = vpop.f32.mrf.mxu0
  %v1812 = vadd.f32 %v545, %v1811
  %v1813 = vpop.f32.mrf.mxu0
  %1814 = vmatprep.mubr.f32.mxu0 0.0
  %1815 = vmatmul.mubr.f32.gmra.mxu0 %v1737
  %v1816 = vpop.f32.mrf.mxu0
  %v1817 = vadd.f32 %v550, %v1816
  %v1818 = vpop.f32.mrf.mxu0
  %1819 = vmatprep.mubr.f32.mxu0 0.0
  %1820 = vmatmul.mubr.f32.gmra.mxu0 %v1740
  %v1821 = vpop.f32.mrf.mxu0
  %v1822 = vadd.f32 %v555, %v1821
  %v1823 = vpop.f32.mrf.mxu0
  %1824 = vmatprep.mubr.f32.mxu0 0.0
  %1825 = vmatmul.mubr.f32.gmra.mxu0 %v1743
  %v1826 = vpop.f32.mrf.mxu0
  %v1827 = vadd.f32 %v560, %v1826
  %v1828 = vpop.f32.mrf.mxu0
  %1829 = vdwg.mxu0
  %v1830 = vxor.u32 %v1812, 2147483648
  %v1831 = vxor.u32 %v1817, 2147483648
  %v1832 = vxor.u32 %v1822, 2147483648
  %v1833 = vxor.u32 %v1827, 2147483648
  %v1834 = vmul.f32 %v1830, 1.442695
  %v1835 = vpow.pop %v1834
  %v1836 = vmul.f32 %v1831, 1.442695
  %v1837 = vpow.pop %v1836
  %v1838 = vmul.f32 %v1832, 1.442695
  %v1839 = vpow.pop %v1838
  %v1840 = vmul.f32 %v1833, 1.442695
  %v1841 = vpow.pop %v1840
  %v1842 = vadd.f32 %v1835, 1.0
  %v1843 = vadd.f32 %v1837, 1.0
  %v1844 = vadd.f32 %v1839, 1.0
  %v1845 = vadd.f32 %v1841, 1.0
  %v1846 = vrcp.pop %v1842
  %v1847 = vmul.f32 1.0, %v1846
  %v1848 = vrcp.pop %v1843
  %v1849 = vmul.f32 1.0, %v1848
  %v1850 = vrcp.pop %v1844
  %v1851 = vmul.f32 1.0, %v1850
  %v1852 = vrcp.pop %v1845
  %v1853 = vmul.f32 1.0, %v1852
  %1858 = vrot.lane.b32.xlu0 %v1519, 32
  %v1859 = vpop.permute.xlu0 %1858
  %1860 = vrot.lane.b32.xlu0 %v1520, 32
  %v1861 = vpop.permute.xlu0 %1860
  %1862 = vrot.lane.b32.xlu0 %v1521, 32
  %v1863 = vpop.permute.xlu0 %1862
  %1864 = vrot.lane.b32.xlu0 %v1522, 32
  %v1865 = vpop.permute.xlu0 %1864
  %v1870 = vmul.f32 %v1847, %v1859
  %v1871 = vmul.f32 %v1849, %v1861
  %v1872 = vmul.f32 %v1851, %v1863
  %v1873 = vmul.f32 %v1853, %v1865
  %1878 = vrot.lane.b32.xlu0 %v1870, 96
  %v1879 = vpop.permute.xlu0 %1878
  %1880 = vrot.lane.b32.xlu0 %v1871, 96
  %v1881 = vpop.permute.xlu0 %1880
  %1882 = vrot.lane.b32.xlu0 %v1872, 96
  %v1883 = vpop.permute.xlu0 %1882
  %1884 = vrot.lane.b32.xlu0 %v1873, 96
  %v1885 = vpop.permute.xlu0 %1884
  %1890 = vmatprep.subr.mxu0 0.0
  %1891 = vmatpush1.msra.mxu0 0.0
  %1892 = vmatprep.subr.mxu0 0.0
  %1893 = vmatpush1.msra.mxu0 0.0
  %1894 = vmatprep.subr.mxu0 0.0
  %1895 = vmatpush1.msra.mxu0 0.0
  %1896 = vmatprep.subr.mxu0 0.0
  %1897 = vmatpush1.msra.mxu0 0.0
  %1898 = vmatprep.subr.mxu0 0.0
  %1899 = vmatpush1.msra.mxu0 0.0
  %1900 = vmatprep.subr.mxu0 0.0
  %1901 = vmatpush1.msra.mxu0 0.0
  %1902 = vmatprep.subr.mxu0 0.0
  %1903 = vmatpush1.msra.mxu0 0.0
  %1904 = vmatprep.subr.mxu0 0.0
  %1905 = vmatpush1.msra.mxu0 0.0
  %1906 = vmatprep.subr.mxu0 0.0
  %1907 = vmatpush1.msra.mxu0 0.0
  %1908 = vmatprep.subr.mxu0 0.0
  %1909 = vmatpush1.msra.mxu0 0.0
  %1910 = vmatprep.subr.mxu0 0.0
  %1911 = vmatpush1.msra.mxu0 0.0
  %1912 = vmatprep.subr.mxu0 0.0
  %1913 = vmatpush1.msra.mxu0 0.0
  %1914 = vmatprep.subr.mxu0 0.0
  %1915 = vmatpush1.msra.mxu0 %v1885
  %1916 = vmatprep.subr.mxu0 0.0
  %1917 = vmatpush1.msra.mxu0 %v1883
  %1918 = vmatprep.subr.mxu0 0.0
  %1919 = vmatpush1.msra.mxu0 %v1881
  %1920 = vmatprep.subr.mxu0 0.0
  %1921 = vmatpush1.msra.mxu0 %v1879
  %1922 = vmatprep.subr.mxu0 0.0
  %1923 = vmatpush2.msra.mxu0 0.0
  %1924 = vmatprep.subr.mxu0 0.0
  %1925 = vmatpush2.msra.mxu0 0.0
  %1926 = vmatprep.subr.mxu0 0.0
  %1927 = vmatpush2.msra.mxu0 0.0
  %1928 = vmatprep.subr.mxu0 0.0
  %1929 = vmatpush2.msra.mxu0 0.0
  %1930 = vmatprep.subr.mxu0 0.0
  %1931 = vmatpush2.msra.mxu0 0.0
  %1932 = vmatprep.subr.mxu0 0.0
  %1933 = vmatpush2.msra.mxu0 0.0
  %1934 = vmatprep.subr.mxu0 0.0
  %1935 = vmatpush2.msra.mxu0 0.0
  %1936 = vmatprep.subr.mxu0 0.0
  %1937 = vmatpush2.msra.mxu0 0.0
  %1938 = vmatprep.subr.mxu0 0.0
  %1939 = vmatpush2.msra.mxu0 0.0
  %1940 = vmatprep.subr.mxu0 0.0
  %1941 = vmatpush2.msra.mxu0 0.0
  %1942 = vmatprep.subr.mxu0 0.0
  %1943 = vmatpush2.msra.mxu0 0.0
  %1944 = vmatprep.subr.mxu0 0.0
  %1945 = vmatpush2.msra.mxu0 0.0
  %1946 = vmatprep.subr.mxu0 0.0
  %1947 = vmatpush2.msra.mxu0 0.0
  %1948 = vmatprep.subr.mxu0 0.0
  %1949 = vmatpush2.msra.mxu0 0.0
  %1950 = vmatprep.subr.mxu0 0.0
  %1951 = vmatpush2.msra.mxu0 0.0
  %1952 = vmatprep.subr.mxu0 0.0
  %1953 = vmatpush2.msra.mxu0 0.0
  %1954 = vmatprep.mubr.f32.mxu0 0.0
  %1955 = vmatmul.mubr.f32.gmra.mxu0 %v98
  %v1956 = vpop.f32.mrf.mxu0
  %v1957 = vadd.f32 0.0, %v1956
  %v1958 = vpop.f32.mrf.mxu0
  %1959 = vmatprep.mubr.f32.mxu0 0.0
  %1960 = vmatmul.mubr.f32.gmra.mxu0 %v101
  %v1961 = vpop.f32.mrf.mxu0
  %v1962 = vadd.f32 0.0, %v1961
  %v1963 = vpop.f32.mrf.mxu0
  %1964 = vmatprep.mubr.f32.mxu0 0.0
  %1965 = vmatmul.mubr.f32.gmra.mxu0 %v104
  %v1966 = vpop.f32.mrf.mxu0
  %v1967 = vadd.f32 0.0, %v1966
  %v1968 = vpop.f32.mrf.mxu0
  %1969 = vmatprep.mubr.f32.mxu0 0.0
  %1970 = vmatmul.mubr.f32.gmra.mxu0 %v107
  %v1971 = vpop.f32.mrf.mxu0
  %v1972 = vadd.f32 0.0, %v1971
  %v1973 = vpop.f32.mrf.mxu0
  %1974 = vdwg.mxu0
  %1975 = vmatprep.subr.mxu0 0.0
  %1976 = vmatpush1.msra.mxu0 0.0
  %1977 = vmatprep.subr.mxu0 0.0
  %1978 = vmatpush1.msra.mxu0 0.0
  %1979 = vmatprep.subr.mxu0 0.0
  %1980 = vmatpush1.msra.mxu0 0.0
  %1981 = vmatprep.subr.mxu0 0.0
  %1982 = vmatpush1.msra.mxu0 0.0
  %1983 = vmatprep.subr.mxu0 0.0
  %1984 = vmatpush1.msra.mxu0 0.0
  %1985 = vmatprep.subr.mxu0 0.0
  %1986 = vmatpush1.msra.mxu0 0.0
  %1987 = vmatprep.subr.mxu0 0.0
  %1988 = vmatpush1.msra.mxu0 0.0
  %1989 = vmatprep.subr.mxu0 0.0
  %1990 = vmatpush1.msra.mxu0 0.0
  %1991 = vmatprep.subr.mxu0 0.0
  %1992 = vmatpush1.msra.mxu0 0.0
  %1993 = vmatprep.subr.mxu0 0.0
  %1994 = vmatpush1.msra.mxu0 0.0
  %1995 = vmatprep.subr.mxu0 0.0
  %1996 = vmatpush1.msra.mxu0 0.0
  %1997 = vmatprep.subr.mxu0 0.0
  %1998 = vmatpush1.msra.mxu0 0.0
  %1999 = vmatprep.subr.mxu0 0.0
  %2000 = vmatpush1.msra.mxu0 %v1885
  %2001 = vmatprep.subr.mxu0 0.0
  %2002 = vmatpush1.msra.mxu0 %v1883
  %2003 = vmatprep.subr.mxu0 0.0
  %2004 = vmatpush1.msra.mxu0 %v1881
  %2005 = vmatprep.subr.mxu0 0.0
  %2006 = vmatpush1.msra.mxu0 %v1879
  %2007 = vmatprep.subr.mxu0 0.0
  %2008 = vmatpush2.msra.mxu0 0.0
  %2009 = vmatprep.subr.mxu0 0.0
  %2010 = vmatpush2.msra.mxu0 0.0
  %2011 = vmatprep.subr.mxu0 0.0
  %2012 = vmatpush2.msra.mxu0 0.0
  %2013 = vmatprep.subr.mxu0 0.0
  %2014 = vmatpush2.msra.mxu0 0.0
  %2015 = vmatprep.subr.mxu0 0.0
  %2016 = vmatpush2.msra.mxu0 0.0
  %2017 = vmatprep.subr.mxu0 0.0
  %2018 = vmatpush2.msra.mxu0 0.0
  %2019 = vmatprep.subr.mxu0 0.0
  %2020 = vmatpush2.msra.mxu0 0.0
  %2021 = vmatprep.subr.mxu0 0.0
  %2022 = vmatpush2.msra.mxu0 0.0
  %2023 = vmatprep.subr.mxu0 0.0
  %2024 = vmatpush2.msra.mxu0 0.0
  %2025 = vmatprep.subr.mxu0 0.0
  %2026 = vmatpush2.msra.mxu0 0.0
  %2027 = vmatprep.subr.mxu0 0.0
  %2028 = vmatpush2.msra.mxu0 0.0
  %2029 = vmatprep.subr.mxu0 0.0
  %2030 = vmatpush2.msra.mxu0 0.0
  %2031 = vmatprep.subr.mxu0 0.0
  %2032 = vmatpush2.msra.mxu0 0.0
  %2033 = vmatprep.subr.mxu0 0.0
  %2034 = vmatpush2.msra.mxu0 0.0
  %2035 = vmatprep.subr.mxu0 0.0
  %2036 = vmatpush2.msra.mxu0 0.0
  %2037 = vmatprep.subr.mxu0 0.0
  %2038 = vmatpush2.msra.mxu0 0.0
  %2039 = vmatprep.mubr.f32.mxu0 0.0
  %2040 = vmatmul.mubr.f32.gmra.mxu0 %v195
  %v2041 = vpop.f32.mrf.mxu0
  %v2042 = vadd.f32 0.0, %v2041
  %v2043 = vpop.f32.mrf.mxu0
  %2044 = vmatprep.mubr.f32.mxu0 0.0
  %2045 = vmatmul.mubr.f32.gmra.mxu0 %v198
  %v2046 = vpop.f32.mrf.mxu0
  %v2047 = vadd.f32 0.0, %v2046
  %v2048 = vpop.f32.mrf.mxu0
  %2049 = vmatprep.mubr.f32.mxu0 0.0
  %2050 = vmatmul.mubr.f32.gmra.mxu0 %v201
  %v2051 = vpop.f32.mrf.mxu0
  %v2052 = vadd.f32 0.0, %v2051
  %v2053 = vpop.f32.mrf.mxu0
  %2054 = vmatprep.mubr.f32.mxu0 0.0
  %2055 = vmatmul.mubr.f32.gmra.mxu0 %v204
  %v2056 = vpop.f32.mrf.mxu0
  %v2057 = vadd.f32 0.0, %v2056
  %v2058 = vpop.f32.mrf.mxu0
  %2059 = vdwg.mxu0
  %2064 = vrot.lane.b32.xlu0 %v1957, 32
  %v2065 = vpop.permute.xlu0 %2064
  %2066 = vrot.lane.b32.xlu0 %v1962, 32
  %v2067 = vpop.permute.xlu0 %2066
  %2068 = vrot.lane.b32.xlu0 %v1967, 32
  %v2069 = vpop.permute.xlu0 %2068
  %2070 = vrot.lane.b32.xlu0 %v1972, 32
  %v2071 = vpop.permute.xlu0 %2070
  %2080 = vrot.lane.b32.xlu0 %v2042, 64
  %v2081 = vpop.permute.xlu0 %2080
  %2082 = vrot.lane.b32.xlu0 %v2047, 64
  %v2083 = vpop.permute.xlu0 %2082
  %2084 = vrot.lane.b32.xlu0 %v2052, 64
  %v2085 = vpop.permute.xlu0 %2084
  %2086 = vrot.lane.b32.xlu0 %v2057, 64
  %v2087 = vpop.permute.xlu0 %2086
  %v2092 = vsel %vm96, %v1879, %v2065
  %v2093 = vsel %vm96, %v1881, %v2067
  %v2094 = vsel %vm96, %v1883, %v2069
  %v2095 = vsel %vm96, %v1885, %v2071
  %v2096 = vsel %vm327, %v2092, %v2081
  %v2097 = vsel %vm327, %v2093, %v2083
  %v2098 = vsel %vm327, %v2094, %v2085
  %v2099 = vsel %vm327, %v2095, %v2087
  %2104 = vrot.lane.b32.xlu0 %v545, 64
  %v2105 = vpop.permute.xlu0 %2104
  %2106 = vrot.lane.b32.xlu0 %v550, 64
  %v2107 = vpop.permute.xlu0 %2106
  %2108 = vrot.lane.b32.xlu0 %v555, 64
  %v2109 = vpop.permute.xlu0 %2108
  %2110 = vrot.lane.b32.xlu0 %v560, 64
  %v2111 = vpop.permute.xlu0 %2110
  %v2117 = vsel %vm332, %v2096, 0
  %v2120 = vsel %vm332, %v2097, 0
  %v2123 = vsel %vm332, %v2098, 0
  %v2126 = vsel %vm332, %v2099, 0
  %2128 = vmatprep.subr.mxu0 0.0
  %2129 = vmatpush1.msra.mxu0 0.0
  %2130 = vmatprep.subr.mxu0 0.0
  %2131 = vmatpush1.msra.mxu0 0.0
  %2132 = vmatprep.subr.mxu0 0.0
  %2133 = vmatpush1.msra.mxu0 0.0
  %2134 = vmatprep.subr.mxu0 0.0
  %2135 = vmatpush1.msra.mxu0 0.0
  %2136 = vmatprep.subr.mxu0 0.0
  %2137 = vmatpush1.msra.mxu0 %v81
  %2138 = vmatprep.subr.mxu0 0.0
  %2139 = vmatpush1.msra.mxu0 %v80
  %2140 = vmatprep.subr.mxu0 0.0
  %2141 = vmatpush1.msra.mxu0 %v79
  %2142 = vmatprep.subr.mxu0 0.0
  %2143 = vmatpush1.msra.mxu0 %v78
  %2144 = vmatprep.subr.mxu0 0.0
  %2145 = vmatpush1.msra.mxu0 %v77
  %2146 = vmatprep.subr.mxu0 0.0
  %2147 = vmatpush1.msra.mxu0 %v76
  %2148 = vmatprep.subr.mxu0 0.0
  %2149 = vmatpush1.msra.mxu0 %v75
  %2150 = vmatprep.subr.mxu0 0.0
  %2151 = vmatpush1.msra.mxu0 %v74
  %2152 = vmatprep.subr.mxu0 0.0
  %2153 = vmatpush1.msra.mxu0 %v73
  %2154 = vmatprep.subr.mxu0 0.0
  %2155 = vmatpush1.msra.mxu0 %v72
  %2156 = vmatprep.subr.mxu0 0.0
  %2157 = vmatpush1.msra.mxu0 %v71
  %2158 = vmatprep.subr.mxu0 0.0
  %2159 = vmatpush1.msra.mxu0 %v70
  %2160 = vmatprep.subr.mxu0 0.0
  %2161 = vmatpush2.msra.mxu0 0.0
  %2162 = vmatprep.subr.mxu0 0.0
  %2163 = vmatpush2.msra.mxu0 0.0
  %2164 = vmatprep.subr.mxu0 0.0
  %2165 = vmatpush2.msra.mxu0 0.0
  %2166 = vmatprep.subr.mxu0 0.0
  %2167 = vmatpush2.msra.mxu0 0.0
  %2168 = vmatprep.subr.mxu0 0.0
  %2169 = vmatpush2.msra.mxu0 0.0
  %2170 = vmatprep.subr.mxu0 0.0
  %2171 = vmatpush2.msra.mxu0 0.0
  %2172 = vmatprep.subr.mxu0 0.0
  %2173 = vmatpush2.msra.mxu0 0.0
  %2174 = vmatprep.subr.mxu0 0.0
  %2175 = vmatpush2.msra.mxu0 0.0
  %2176 = vmatprep.subr.mxu0 0.0
  %2177 = vmatpush2.msra.mxu0 0.0
  %2178 = vmatprep.subr.mxu0 0.0
  %2179 = vmatpush2.msra.mxu0 0.0
  %2180 = vmatprep.subr.mxu0 0.0
  %2181 = vmatpush2.msra.mxu0 0.0
  %2182 = vmatprep.subr.mxu0 0.0
  %2183 = vmatpush2.msra.mxu0 0.0
  %2184 = vmatprep.subr.mxu0 0.0
  %2185 = vmatpush2.msra.mxu0 0.0
  %2186 = vmatprep.subr.mxu0 0.0
  %2187 = vmatpush2.msra.mxu0 0.0
  %2188 = vmatprep.subr.mxu0 0.0
  %2189 = vmatpush2.msra.mxu0 0.0
  %2190 = vmatprep.subr.mxu0 0.0
  %2191 = vmatpush2.msra.mxu0 0.0
  %2192 = vmatprep.mubr.f32.mxu0 0.0
  %2193 = vmatmul.mubr.f32.gmra.mxu0 %v2117
  %v2194 = vpop.f32.mrf.mxu0
  %v2195 = vadd.f32 %v2105, %v2194
  %v2196 = vpop.f32.mrf.mxu0
  %2197 = vmatprep.mubr.f32.mxu0 0.0
  %2198 = vmatmul.mubr.f32.gmra.mxu0 %v2120
  %v2199 = vpop.f32.mrf.mxu0
  %v2200 = vadd.f32 %v2107, %v2199
  %v2201 = vpop.f32.mrf.mxu0
  %2202 = vmatprep.mubr.f32.mxu0 0.0
  %2203 = vmatmul.mubr.f32.gmra.mxu0 %v2123
  %v2204 = vpop.f32.mrf.mxu0
  %v2205 = vadd.f32 %v2109, %v2204
  %v2206 = vpop.f32.mrf.mxu0
  %2207 = vmatprep.mubr.f32.mxu0 0.0
  %2208 = vmatmul.mubr.f32.gmra.mxu0 %v2126
  %v2209 = vpop.f32.mrf.mxu0
  %v2210 = vadd.f32 %v2111, %v2209
  %v2211 = vpop.f32.mrf.mxu0
  %2212 = vdwg.mxu0
  %v2213 = vtanh.pop %v2195
  %v2214 = vtanh.pop %v2200
  %v2215 = vtanh.pop %v2205
  %v2216 = vtanh.pop %v2210
  %v2217 = vmul.f32 %v1847, %v1519
  %v2218 = vmul.f32 %v1849, %v1520
  %v2219 = vmul.f32 %v1851, %v1521
  %v2220 = vmul.f32 %v1853, %v1522
  %v2221 = vsub.f32 1.0, %v1847
  %v2222 = vsub.f32 1.0, %v1849
  %v2223 = vsub.f32 1.0, %v1851
  %v2224 = vsub.f32 1.0, %v1853
  %v2225 = vmul.f32 %v2221, %v2213
  %v2226 = vmul.f32 %v2222, %v2214
  %v2227 = vmul.f32 %v2223, %v2215
  %v2228 = vmul.f32 %v2224, %v2216
  %v2229 = vadd.f32 %v2217, %v2225
  %v2230 = vadd.f32 %v2218, %v2226
  %v2231 = vadd.f32 %v2219, %v2227
  %v2232 = vadd.f32 %v2220, %v2228
  %2233 = vmatprep.subr.mxu0 0.0
  %2234 = vmatpush1.msra.mxu0 0.0
  %2235 = vmatprep.subr.mxu0 0.0
  %2236 = vmatpush1.msra.mxu0 0.0
  %2237 = vmatprep.subr.mxu0 0.0
  %2238 = vmatpush1.msra.mxu0 0.0
  %2239 = vmatprep.subr.mxu0 0.0
  %2240 = vmatpush1.msra.mxu0 0.0
  %2241 = vmatprep.subr.mxu0 0.0
  %2242 = vmatpush1.msra.mxu0 0.0
  %2243 = vmatprep.subr.mxu0 0.0
  %2244 = vmatpush1.msra.mxu0 0.0
  %2245 = vmatprep.subr.mxu0 0.0
  %2246 = vmatpush1.msra.mxu0 0.0
  %2247 = vmatprep.subr.mxu0 0.0
  %2248 = vmatpush1.msra.mxu0 0.0
  %2249 = vmatprep.subr.mxu0 0.0
  %2250 = vmatpush1.msra.mxu0 0.0
  %2251 = vmatprep.subr.mxu0 0.0
  %2252 = vmatpush1.msra.mxu0 0.0
  %2253 = vmatprep.subr.mxu0 0.0
  %2254 = vmatpush1.msra.mxu0 0.0
  %2255 = vmatprep.subr.mxu0 0.0
  %2256 = vmatpush1.msra.mxu0 0.0
  %2257 = vmatprep.subr.mxu0 0.0
  %2258 = vmatpush1.msra.mxu0 %v2232
  %2259 = vmatprep.subr.mxu0 0.0
  %2260 = vmatpush1.msra.mxu0 %v2231
  %2261 = vmatprep.subr.mxu0 0.0
  %2262 = vmatpush1.msra.mxu0 %v2230
  %2263 = vmatprep.subr.mxu0 0.0
  %2264 = vmatpush1.msra.mxu0 %v2229
  %2265 = vmatprep.subr.mxu0 0.0
  %2266 = vmatpush2.msra.mxu0 0.0
  %2267 = vmatprep.subr.mxu0 0.0
  %2268 = vmatpush2.msra.mxu0 0.0
  %2269 = vmatprep.subr.mxu0 0.0
  %2270 = vmatpush2.msra.mxu0 0.0
  %2271 = vmatprep.subr.mxu0 0.0
  %2272 = vmatpush2.msra.mxu0 0.0
  %2273 = vmatprep.subr.mxu0 0.0
  %2274 = vmatpush2.msra.mxu0 0.0
  %2275 = vmatprep.subr.mxu0 0.0
  %2276 = vmatpush2.msra.mxu0 0.0
  %2277 = vmatprep.subr.mxu0 0.0
  %2278 = vmatpush2.msra.mxu0 0.0
  %2279 = vmatprep.subr.mxu0 0.0
  %2280 = vmatpush2.msra.mxu0 0.0
  %2281 = vmatprep.subr.mxu0 0.0
  %2282 = vmatpush2.msra.mxu0 0.0
  %2283 = vmatprep.subr.mxu0 0.0
  %2284 = vmatpush2.msra.mxu0 0.0
  %2285 = vmatprep.subr.mxu0 0.0
  %2286 = vmatpush2.msra.mxu0 0.0
  %2287 = vmatprep.subr.mxu0 0.0
  %2288 = vmatpush2.msra.mxu0 0.0
  %2289 = vmatprep.subr.mxu0 0.0
  %2290 = vmatpush2.msra.mxu0 0.0
  %2291 = vmatprep.subr.mxu0 0.0
  %2292 = vmatpush2.msra.mxu0 0.0
  %2293 = vmatprep.subr.mxu0 0.0
  %2294 = vmatpush2.msra.mxu0 0.0
  %2295 = vmatprep.subr.mxu0 0.0
  %2296 = vmatpush2.msra.mxu0 0.0
  %2297 = vmatprep.mubr.f32.mxu0 0.0
  %2298 = vmatmul.mubr.f32.gmra.mxu0 %v98
  %v2299 = vpop.f32.mrf.mxu0
  %v2300 = vadd.f32 0.0, %v2299
  %v2301 = vpop.f32.mrf.mxu0
  %2302 = vmatprep.mubr.f32.mxu0 0.0
  %2303 = vmatmul.mubr.f32.gmra.mxu0 %v101
  %v2304 = vpop.f32.mrf.mxu0
  %v2305 = vadd.f32 0.0, %v2304
  %v2306 = vpop.f32.mrf.mxu0
  %2307 = vmatprep.mubr.f32.mxu0 0.0
  %2308 = vmatmul.mubr.f32.gmra.mxu0 %v104
  %v2309 = vpop.f32.mrf.mxu0
  %v2310 = vadd.f32 0.0, %v2309
  %v2311 = vpop.f32.mrf.mxu0
  %2312 = vmatprep.mubr.f32.mxu0 0.0
  %2313 = vmatmul.mubr.f32.gmra.mxu0 %v107
  %v2314 = vpop.f32.mrf.mxu0
  %v2315 = vadd.f32 0.0, %v2314
  %v2316 = vpop.f32.mrf.mxu0
  %2317 = vdwg.mxu0
  %2318 = vmatprep.subr.mxu0 0.0
  %2319 = vmatpush1.msra.mxu0 0.0
  %2320 = vmatprep.subr.mxu0 0.0
  %2321 = vmatpush1.msra.mxu0 0.0
  %2322 = vmatprep.subr.mxu0 0.0
  %2323 = vmatpush1.msra.mxu0 0.0
  %2324 = vmatprep.subr.mxu0 0.0
  %2325 = vmatpush1.msra.mxu0 0.0
  %2326 = vmatprep.subr.mxu0 0.0
  %2327 = vmatpush1.msra.mxu0 0.0
  %2328 = vmatprep.subr.mxu0 0.0
  %2329 = vmatpush1.msra.mxu0 0.0
  %2330 = vmatprep.subr.mxu0 0.0
  %2331 = vmatpush1.msra.mxu0 0.0
  %2332 = vmatprep.subr.mxu0 0.0
  %2333 = vmatpush1.msra.mxu0 0.0
  %2334 = vmatprep.subr.mxu0 0.0
  %2335 = vmatpush1.msra.mxu0 0.0
  %2336 = vmatprep.subr.mxu0 0.0
  %2337 = vmatpush1.msra.mxu0 0.0
  %2338 = vmatprep.subr.mxu0 0.0
  %2339 = vmatpush1.msra.mxu0 0.0
  %2340 = vmatprep.subr.mxu0 0.0
  %2341 = vmatpush1.msra.mxu0 0.0
  %2342 = vmatprep.subr.mxu0 0.0
  %2343 = vmatpush1.msra.mxu0 %v2232
  %2344 = vmatprep.subr.mxu0 0.0
  %2345 = vmatpush1.msra.mxu0 %v2231
  %2346 = vmatprep.subr.mxu0 0.0
  %2347 = vmatpush1.msra.mxu0 %v2230
  %2348 = vmatprep.subr.mxu0 0.0
  %2349 = vmatpush1.msra.mxu0 %v2229
  %2350 = vmatprep.subr.mxu0 0.0
  %2351 = vmatpush2.msra.mxu0 0.0
  %2352 = vmatprep.subr.mxu0 0.0
  %2353 = vmatpush2.msra.mxu0 0.0
  %2354 = vmatprep.subr.mxu0 0.0
  %2355 = vmatpush2.msra.mxu0 0.0
  %2356 = vmatprep.subr.mxu0 0.0
  %2357 = vmatpush2.msra.mxu0 0.0
  %2358 = vmatprep.subr.mxu0 0.0
  %2359 = vmatpush2.msra.mxu0 0.0
  %2360 = vmatprep.subr.mxu0 0.0
  %2361 = vmatpush2.msra.mxu0 0.0
  %2362 = vmatprep.subr.mxu0 0.0
  %2363 = vmatpush2.msra.mxu0 0.0
  %2364 = vmatprep.subr.mxu0 0.0
  %2365 = vmatpush2.msra.mxu0 0.0
  %2366 = vmatprep.subr.mxu0 0.0
  %2367 = vmatpush2.msra.mxu0 0.0
  %2368 = vmatprep.subr.mxu0 0.0
  %2369 = vmatpush2.msra.mxu0 0.0
  %2370 = vmatprep.subr.mxu0 0.0
  %2371 = vmatpush2.msra.mxu0 0.0
  %2372 = vmatprep.subr.mxu0 0.0
  %2373 = vmatpush2.msra.mxu0 0.0
  %2374 = vmatprep.subr.mxu0 0.0
  %2375 = vmatpush2.msra.mxu0 0.0
  %2376 = vmatprep.subr.mxu0 0.0
  %2377 = vmatpush2.msra.mxu0 0.0
  %2378 = vmatprep.subr.mxu0 0.0
  %2379 = vmatpush2.msra.mxu0 0.0
  %2380 = vmatprep.subr.mxu0 0.0
  %2381 = vmatpush2.msra.mxu0 0.0
  %2382 = vmatprep.mubr.f32.mxu0 0.0
  %2383 = vmatmul.mubr.f32.gmra.mxu0 %v195
  %v2384 = vpop.f32.mrf.mxu0
  %v2385 = vadd.f32 0.0, %v2384
  %v2386 = vpop.f32.mrf.mxu0
  %2387 = vmatprep.mubr.f32.mxu0 0.0
  %2388 = vmatmul.mubr.f32.gmra.mxu0 %v198
  %v2389 = vpop.f32.mrf.mxu0
  %v2390 = vadd.f32 0.0, %v2389
  %v2391 = vpop.f32.mrf.mxu0
  %2392 = vmatprep.mubr.f32.mxu0 0.0
  %2393 = vmatmul.mubr.f32.gmra.mxu0 %v201
  %v2394 = vpop.f32.mrf.mxu0
  %v2395 = vadd.f32 0.0, %v2394
  %v2396 = vpop.f32.mrf.mxu0
  %2397 = vmatprep.mubr.f32.mxu0 0.0
  %2398 = vmatmul.mubr.f32.gmra.mxu0 %v204
  %v2399 = vpop.f32.mrf.mxu0
  %v2400 = vadd.f32 0.0, %v2399
  %v2401 = vpop.f32.mrf.mxu0
  %2402 = vdwg.mxu0
  %2407 = vrot.lane.b32.xlu0 %v2300, 32
  %v2408 = vpop.permute.xlu0 %2407
  %2409 = vrot.lane.b32.xlu0 %v2305, 32
  %v2410 = vpop.permute.xlu0 %2409
  %2411 = vrot.lane.b32.xlu0 %v2310, 32
  %v2412 = vpop.permute.xlu0 %2411
  %2413 = vrot.lane.b32.xlu0 %v2315, 32
  %v2414 = vpop.permute.xlu0 %2413
  %2423 = vrot.lane.b32.xlu0 %v2385, 64
  %v2424 = vpop.permute.xlu0 %2423
  %2425 = vrot.lane.b32.xlu0 %v2390, 64
  %v2426 = vpop.permute.xlu0 %2425
  %2427 = vrot.lane.b32.xlu0 %v2395, 64
  %v2428 = vpop.permute.xlu0 %2427
  %2429 = vrot.lane.b32.xlu0 %v2400, 64
  %v2430 = vpop.permute.xlu0 %2429
  %v2435 = vsel %vm96, %v2229, %v2408
  %v2436 = vsel %vm96, %v2230, %v2410
  %v2437 = vsel %vm96, %v2231, %v2412
  %v2438 = vsel %vm96, %v2232, %v2414
  %v2439 = vsel %vm327, %v2435, %v2424
  %v2440 = vsel %vm327, %v2436, %v2426
  %v2441 = vsel %vm327, %v2437, %v2428
  %v2442 = vsel %vm327, %v2438, %v2430
  %v2444 = vsel %vm332, %v2439, 0
  %v2447 = vsel %vm332, %v2440, 0
  %v2450 = vsel %vm332, %v2441, 0
  %v2453 = vsel %vm332, %v2442, 0
  %2455 = vmatprep.subr.mxu0 0.0
  %2456 = vmatpush1.msra.mxu0 0.0
  %2457 = vmatprep.subr.mxu0 0.0
  %2458 = vmatpush1.msra.mxu0 0.0
  %2459 = vmatprep.subr.mxu0 0.0
  %2460 = vmatpush1.msra.mxu0 0.0
  %2461 = vmatprep.subr.mxu0 0.0
  %2462 = vmatpush1.msra.mxu0 0.0
  %2463 = vmatprep.subr.mxu0 0.0
  %2464 = vmatpush1.msra.mxu0 %v69
  %2465 = vmatprep.subr.mxu0 0.0
  %2466 = vmatpush1.msra.mxu0 %v68
  %2467 = vmatprep.subr.mxu0 0.0
  %2468 = vmatpush1.msra.mxu0 %v67
  %2469 = vmatprep.subr.mxu0 0.0
  %2470 = vmatpush1.msra.mxu0 %v66
  %2471 = vmatprep.subr.mxu0 0.0
  %2472 = vmatpush1.msra.mxu0 %v65
  %2473 = vmatprep.subr.mxu0 0.0
  %2474 = vmatpush1.msra.mxu0 %v64
  %2475 = vmatprep.subr.mxu0 0.0
  %2476 = vmatpush1.msra.mxu0 %v63
  %2477 = vmatprep.subr.mxu0 0.0
  %2478 = vmatpush1.msra.mxu0 %v62
  %2479 = vmatprep.subr.mxu0 0.0
  %2480 = vmatpush1.msra.mxu0 %v61
  %2481 = vmatprep.subr.mxu0 0.0
  %2482 = vmatpush1.msra.mxu0 %v60
  %2483 = vmatprep.subr.mxu0 0.0
  %2484 = vmatpush1.msra.mxu0 %v59
  %2485 = vmatprep.subr.mxu0 0.0
  %2486 = vmatpush1.msra.mxu0 %v58
  %2487 = vmatprep.subr.mxu0 0.0
  %2488 = vmatpush2.msra.mxu0 0.0
  %2489 = vmatprep.subr.mxu0 0.0
  %2490 = vmatpush2.msra.mxu0 0.0
  %2491 = vmatprep.subr.mxu0 0.0
  %2492 = vmatpush2.msra.mxu0 0.0
  %2493 = vmatprep.subr.mxu0 0.0
  %2494 = vmatpush2.msra.mxu0 0.0
  %2495 = vmatprep.subr.mxu0 0.0
  %2496 = vmatpush2.msra.mxu0 0.0
  %2497 = vmatprep.subr.mxu0 0.0
  %2498 = vmatpush2.msra.mxu0 0.0
  %2499 = vmatprep.subr.mxu0 0.0
  %2500 = vmatpush2.msra.mxu0 0.0
  %2501 = vmatprep.subr.mxu0 0.0
  %2502 = vmatpush2.msra.mxu0 0.0
  %2503 = vmatprep.subr.mxu0 0.0
  %2504 = vmatpush2.msra.mxu0 0.0
  %2505 = vmatprep.subr.mxu0 0.0
  %2506 = vmatpush2.msra.mxu0 0.0
  %2507 = vmatprep.subr.mxu0 0.0
  %2508 = vmatpush2.msra.mxu0 0.0
  %2509 = vmatprep.subr.mxu0 0.0
  %2510 = vmatpush2.msra.mxu0 0.0
  %2511 = vmatprep.subr.mxu0 0.0
  %2512 = vmatpush2.msra.mxu0 0.0
  %2513 = vmatprep.subr.mxu0 0.0
  %2514 = vmatpush2.msra.mxu0 0.0
  %2515 = vmatprep.subr.mxu0 0.0
  %2516 = vmatpush2.msra.mxu0 0.0
  %2517 = vmatprep.subr.mxu0 0.0
  %2518 = vmatpush2.msra.mxu0 0.0
  %2519 = vmatprep.mubr.f32.mxu0 0.0
  %2520 = vmatmul.mubr.f32.gmra.mxu0 %v2444
  %v2521 = vpop.f32.mrf.mxu0
  %v2522 = vadd.f32 %v674, %v2521
  %v2523 = vpop.f32.mrf.mxu0
  %2524 = vmatprep.mubr.f32.mxu0 0.0
  %2525 = vmatmul.mubr.f32.gmra.mxu0 %v2447
  %v2526 = vpop.f32.mrf.mxu0
  %v2527 = vadd.f32 %v679, %v2526
  %v2528 = vpop.f32.mrf.mxu0
  %2529 = vmatprep.mubr.f32.mxu0 0.0
  %2530 = vmatmul.mubr.f32.gmra.mxu0 %v2450
  %v2531 = vpop.f32.mrf.mxu0
  %v2532 = vadd.f32 %v684, %v2531
  %v2533 = vpop.f32.mrf.mxu0
  %2534 = vmatprep.mubr.f32.mxu0 0.0
  %2535 = vmatmul.mubr.f32.gmra.mxu0 %v2453
  %v2536 = vpop.f32.mrf.mxu0
  %v2537 = vadd.f32 %v689, %v2536
  %v2538 = vpop.f32.mrf.mxu0
  %2539 = vdwg.mxu0
  %v2540 = vxor.u32 %v2522, 2147483648
  %v2541 = vxor.u32 %v2527, 2147483648
  %v2542 = vxor.u32 %v2532, 2147483648
  %v2543 = vxor.u32 %v2537, 2147483648
  %v2544 = vmul.f32 %v2540, 1.442695
  %v2545 = vpow.pop %v2544
  %v2546 = vmul.f32 %v2541, 1.442695
  %v2547 = vpow.pop %v2546
  %v2548 = vmul.f32 %v2542, 1.442695
  %v2549 = vpow.pop %v2548
  %v2550 = vmul.f32 %v2543, 1.442695
  %v2551 = vpow.pop %v2550
  %v2552 = vadd.f32 %v2545, 1.0
  %v2553 = vadd.f32 %v2547, 1.0
  %v2554 = vadd.f32 %v2549, 1.0
  %v2555 = vadd.f32 %v2551, 1.0
  %v2556 = vrcp.pop %v2552
  %v2557 = vmul.f32 1.0, %v2556
  %v2558 = vrcp.pop %v2553
  %v2559 = vmul.f32 1.0, %v2558
  %v2560 = vrcp.pop %v2554
  %v2561 = vmul.f32 1.0, %v2560
  %v2562 = vrcp.pop %v2555
  %v2563 = vmul.f32 1.0, %v2562
  %2568 = vrot.lane.b32.xlu0 %v2229, 32
  %v2569 = vpop.permute.xlu0 %2568
  %2570 = vrot.lane.b32.xlu0 %v2230, 32
  %v2571 = vpop.permute.xlu0 %2570
  %2572 = vrot.lane.b32.xlu0 %v2231, 32
  %v2573 = vpop.permute.xlu0 %2572
  %2574 = vrot.lane.b32.xlu0 %v2232, 32
  %v2575 = vpop.permute.xlu0 %2574
  %v2580 = vmul.f32 %v2557, %v2569
  %v2581 = vmul.f32 %v2559, %v2571
  %v2582 = vmul.f32 %v2561, %v2573
  %v2583 = vmul.f32 %v2563, %v2575
  %2588 = vrot.lane.b32.xlu0 %v2580, 96
  %v2589 = vpop.permute.xlu0 %2588
  %2590 = vrot.lane.b32.xlu0 %v2581, 96
  %v2591 = vpop.permute.xlu0 %2590
  %2592 = vrot.lane.b32.xlu0 %v2582, 96
  %v2593 = vpop.permute.xlu0 %2592
  %2594 = vrot.lane.b32.xlu0 %v2583, 96
  %v2595 = vpop.permute.xlu0 %2594
  %2600 = vmatprep.subr.mxu0 0.0
  %2601 = vmatpush1.msra.mxu0 0.0
  %2602 = vmatprep.subr.mxu0 0.0
  %2603 = vmatpush1.msra.mxu0 0.0
  %2604 = vmatprep.subr.mxu0 0.0
  %2605 = vmatpush1.msra.mxu0 0.0
  %2606 = vmatprep.subr.mxu0 0.0
  %2607 = vmatpush1.msra.mxu0 0.0
  %2608 = vmatprep.subr.mxu0 0.0
  %2609 = vmatpush1.msra.mxu0 0.0
  %2610 = vmatprep.subr.mxu0 0.0
  %2611 = vmatpush1.msra.mxu0 0.0
  %2612 = vmatprep.subr.mxu0 0.0
  %2613 = vmatpush1.msra.mxu0 0.0
  %2614 = vmatprep.subr.mxu0 0.0
  %2615 = vmatpush1.msra.mxu0 0.0
  %2616 = vmatprep.subr.mxu0 0.0
  %2617 = vmatpush1.msra.mxu0 0.0
  %2618 = vmatprep.subr.mxu0 0.0
  %2619 = vmatpush1.msra.mxu0 0.0
  %2620 = vmatprep.subr.mxu0 0.0
  %2621 = vmatpush1.msra.mxu0 0.0
  %2622 = vmatprep.subr.mxu0 0.0
  %2623 = vmatpush1.msra.mxu0 0.0
  %2624 = vmatprep.subr.mxu0 0.0
  %2625 = vmatpush1.msra.mxu0 %v2595
  %2626 = vmatprep.subr.mxu0 0.0
  %2627 = vmatpush1.msra.mxu0 %v2593
  %2628 = vmatprep.subr.mxu0 0.0
  %2629 = vmatpush1.msra.mxu0 %v2591
  %2630 = vmatprep.subr.mxu0 0.0
  %2631 = vmatpush1.msra.mxu0 %v2589
  %2632 = vmatprep.subr.mxu0 0.0
  %2633 = vmatpush2.msra.mxu0 0.0
  %2634 = vmatprep.subr.mxu0 0.0
  %2635 = vmatpush2.msra.mxu0 0.0
  %2636 = vmatprep.subr.mxu0 0.0
  %2637 = vmatpush2.msra.mxu0 0.0
  %2638 = vmatprep.subr.mxu0 0.0
  %2639 = vmatpush2.msra.mxu0 0.0
  %2640 = vmatprep.subr.mxu0 0.0
  %2641 = vmatpush2.msra.mxu0 0.0
  %2642 = vmatprep.subr.mxu0 0.0
  %2643 = vmatpush2.msra.mxu0 0.0
  %2644 = vmatprep.subr.mxu0 0.0
  %2645 = vmatpush2.msra.mxu0 0.0
  %2646 = vmatprep.subr.mxu0 0.0
  %2647 = vmatpush2.msra.mxu0 0.0
  %2648 = vmatprep.subr.mxu0 0.0
  %2649 = vmatpush2.msra.mxu0 0.0
  %2650 = vmatprep.subr.mxu0 0.0
  %2651 = vmatpush2.msra.mxu0 0.0
  %2652 = vmatprep.subr.mxu0 0.0
  %2653 = vmatpush2.msra.mxu0 0.0
  %2654 = vmatprep.subr.mxu0 0.0
  %2655 = vmatpush2.msra.mxu0 0.0
  %2656 = vmatprep.subr.mxu0 0.0
  %2657 = vmatpush2.msra.mxu0 0.0
  %2658 = vmatprep.subr.mxu0 0.0
  %2659 = vmatpush2.msra.mxu0 0.0
  %2660 = vmatprep.subr.mxu0 0.0
  %2661 = vmatpush2.msra.mxu0 0.0
  %2662 = vmatprep.subr.mxu0 0.0
  %2663 = vmatpush2.msra.mxu0 0.0
  %2664 = vmatprep.mubr.f32.mxu0 0.0
  %2665 = vmatmul.mubr.f32.gmra.mxu0 %v98
  %v2666 = vpop.f32.mrf.mxu0
  %v2667 = vadd.f32 0.0, %v2666
  %v2668 = vpop.f32.mrf.mxu0
  %2669 = vmatprep.mubr.f32.mxu0 0.0
  %2670 = vmatmul.mubr.f32.gmra.mxu0 %v101
  %v2671 = vpop.f32.mrf.mxu0
  %v2672 = vadd.f32 0.0, %v2671
  %v2673 = vpop.f32.mrf.mxu0
  %2674 = vmatprep.mubr.f32.mxu0 0.0
  %2675 = vmatmul.mubr.f32.gmra.mxu0 %v104
  %v2676 = vpop.f32.mrf.mxu0
  %v2677 = vadd.f32 0.0, %v2676
  %v2678 = vpop.f32.mrf.mxu0
  %2679 = vmatprep.mubr.f32.mxu0 0.0
  %2680 = vmatmul.mubr.f32.gmra.mxu0 %v107
  %v2681 = vpop.f32.mrf.mxu0
  %v2682 = vadd.f32 0.0, %v2681
  %v2683 = vpop.f32.mrf.mxu0
  %2684 = vdwg.mxu0
  %2685 = vmatprep.subr.mxu0 0.0
  %2686 = vmatpush1.msra.mxu0 0.0
  %2687 = vmatprep.subr.mxu0 0.0
  %2688 = vmatpush1.msra.mxu0 0.0
  %2689 = vmatprep.subr.mxu0 0.0
  %2690 = vmatpush1.msra.mxu0 0.0
  %2691 = vmatprep.subr.mxu0 0.0
  %2692 = vmatpush1.msra.mxu0 0.0
  %2693 = vmatprep.subr.mxu0 0.0
  %2694 = vmatpush1.msra.mxu0 0.0
  %2695 = vmatprep.subr.mxu0 0.0
  %2696 = vmatpush1.msra.mxu0 0.0
  %2697 = vmatprep.subr.mxu0 0.0
  %2698 = vmatpush1.msra.mxu0 0.0
  %2699 = vmatprep.subr.mxu0 0.0
  %2700 = vmatpush1.msra.mxu0 0.0
  %2701 = vmatprep.subr.mxu0 0.0
  %2702 = vmatpush1.msra.mxu0 0.0
  %2703 = vmatprep.subr.mxu0 0.0
  %2704 = vmatpush1.msra.mxu0 0.0
  %2705 = vmatprep.subr.mxu0 0.0
  %2706 = vmatpush1.msra.mxu0 0.0
  %2707 = vmatprep.subr.mxu0 0.0
  %2708 = vmatpush1.msra.mxu0 0.0
  %2709 = vmatprep.subr.mxu0 0.0
  %2710 = vmatpush1.msra.mxu0 %v2595
  %2711 = vmatprep.subr.mxu0 0.0
  %2712 = vmatpush1.msra.mxu0 %v2593
  %2713 = vmatprep.subr.mxu0 0.0
  %2714 = vmatpush1.msra.mxu0 %v2591
  %2715 = vmatprep.subr.mxu0 0.0
  %2716 = vmatpush1.msra.mxu0 %v2589
  %2717 = vmatprep.subr.mxu0 0.0
  %2718 = vmatpush2.msra.mxu0 0.0
  %2719 = vmatprep.subr.mxu0 0.0
  %2720 = vmatpush2.msra.mxu0 0.0
  %2721 = vmatprep.subr.mxu0 0.0
  %2722 = vmatpush2.msra.mxu0 0.0
  %2723 = vmatprep.subr.mxu0 0.0
  %2724 = vmatpush2.msra.mxu0 0.0
  %2725 = vmatprep.subr.mxu0 0.0
  %2726 = vmatpush2.msra.mxu0 0.0
  %2727 = vmatprep.subr.mxu0 0.0
  %2728 = vmatpush2.msra.mxu0 0.0
  %2729 = vmatprep.subr.mxu0 0.0
  %2730 = vmatpush2.msra.mxu0 0.0
  %2731 = vmatprep.subr.mxu0 0.0
  %2732 = vmatpush2.msra.mxu0 0.0
  %2733 = vmatprep.subr.mxu0 0.0
  %2734 = vmatpush2.msra.mxu0 0.0
  %2735 = vmatprep.subr.mxu0 0.0
  %2736 = vmatpush2.msra.mxu0 0.0
  %2737 = vmatprep.subr.mxu0 0.0
  %2738 = vmatpush2.msra.mxu0 0.0
  %2739 = vmatprep.subr.mxu0 0.0
  %2740 = vmatpush2.msra.mxu0 0.0
  %2741 = vmatprep.subr.mxu0 0.0
  %2742 = vmatpush2.msra.mxu0 0.0
  %2743 = vmatprep.subr.mxu0 0.0
  %2744 = vmatpush2.msra.mxu0 0.0
  %2745 = vmatprep.subr.mxu0 0.0
  %2746 = vmatpush2.msra.mxu0 0.0
  %2747 = vmatprep.subr.mxu0 0.0
  %2748 = vmatpush2.msra.mxu0 0.0
  %2749 = vmatprep.mubr.f32.mxu0 0.0
  %2750 = vmatmul.mubr.f32.gmra.mxu0 %v195
  %v2751 = vpop.f32.mrf.mxu0
  %v2752 = vadd.f32 0.0, %v2751
  %v2753 = vpop.f32.mrf.mxu0
  %2754 = vmatprep.mubr.f32.mxu0 0.0
  %2755 = vmatmul.mubr.f32.gmra.mxu0 %v198
  %v2756 = vpop.f32.mrf.mxu0
  %v2757 = vadd.f32 0.0, %v2756
  %v2758 = vpop.f32.mrf.mxu0
  %2759 = vmatprep.mubr.f32.mxu0 0.0
  %2760 = vmatmul.mubr.f32.gmra.mxu0 %v201
  %v2761 = vpop.f32.mrf.mxu0
  %v2762 = vadd.f32 0.0, %v2761
  %v2763 = vpop.f32.mrf.mxu0
  %2764 = vmatprep.mubr.f32.mxu0 0.0
  %2765 = vmatmul.mubr.f32.gmra.mxu0 %v204
  %v2766 = vpop.f32.mrf.mxu0
  %v2767 = vadd.f32 0.0, %v2766
  %v2768 = vpop.f32.mrf.mxu0
  %2769 = vdwg.mxu0
  %2774 = vrot.lane.b32.xlu0 %v2667, 32
  %v2775 = vpop.permute.xlu0 %2774
  %2776 = vrot.lane.b32.xlu0 %v2672, 32
  %v2777 = vpop.permute.xlu0 %2776
  %2778 = vrot.lane.b32.xlu0 %v2677, 32
  %v2779 = vpop.permute.xlu0 %2778
  %2780 = vrot.lane.b32.xlu0 %v2682, 32
  %v2781 = vpop.permute.xlu0 %2780
  %2790 = vrot.lane.b32.xlu0 %v2752, 64
  %v2791 = vpop.permute.xlu0 %2790
  %2792 = vrot.lane.b32.xlu0 %v2757, 64
  %v2793 = vpop.permute.xlu0 %2792
  %2794 = vrot.lane.b32.xlu0 %v2762, 64
  %v2795 = vpop.permute.xlu0 %2794
  %2796 = vrot.lane.b32.xlu0 %v2767, 64
  %v2797 = vpop.permute.xlu0 %2796
  %v2802 = vsel %vm96, %v2589, %v2775
  %v2803 = vsel %vm96, %v2591, %v2777
  %v2804 = vsel %vm96, %v2593, %v2779
  %v2805 = vsel %vm96, %v2595, %v2781
  %v2806 = vsel %vm327, %v2802, %v2791
  %v2807 = vsel %vm327, %v2803, %v2793
  %v2808 = vsel %vm327, %v2804, %v2795
  %v2809 = vsel %vm327, %v2805, %v2797
  %2814 = vrot.lane.b32.xlu0 %v674, 64
  %v2815 = vpop.permute.xlu0 %2814
  %2816 = vrot.lane.b32.xlu0 %v679, 64
  %v2817 = vpop.permute.xlu0 %2816
  %2818 = vrot.lane.b32.xlu0 %v684, 64
  %v2819 = vpop.permute.xlu0 %2818
  %2820 = vrot.lane.b32.xlu0 %v689, 64
  %v2821 = vpop.permute.xlu0 %2820
  %v2827 = vsel %vm332, %v2806, 0
  %v2830 = vsel %vm332, %v2807, 0
  %v2833 = vsel %vm332, %v2808, 0
  %v2836 = vsel %vm332, %v2809, 0
  %2838 = vmatprep.subr.mxu0 0.0
  %2839 = vmatpush1.msra.mxu0 0.0
  %2840 = vmatprep.subr.mxu0 0.0
  %2841 = vmatpush1.msra.mxu0 0.0
  %2842 = vmatprep.subr.mxu0 0.0
  %2843 = vmatpush1.msra.mxu0 0.0
  %2844 = vmatprep.subr.mxu0 0.0
  %2845 = vmatpush1.msra.mxu0 0.0
  %2846 = vmatprep.subr.mxu0 0.0
  %2847 = vmatpush1.msra.mxu0 %v81
  %2848 = vmatprep.subr.mxu0 0.0
  %2849 = vmatpush1.msra.mxu0 %v80
  %2850 = vmatprep.subr.mxu0 0.0
  %2851 = vmatpush1.msra.mxu0 %v79
  %2852 = vmatprep.subr.mxu0 0.0
  %2853 = vmatpush1.msra.mxu0 %v78
  %2854 = vmatprep.subr.mxu0 0.0
  %2855 = vmatpush1.msra.mxu0 %v77
  %2856 = vmatprep.subr.mxu0 0.0
  %2857 = vmatpush1.msra.mxu0 %v76
  %2858 = vmatprep.subr.mxu0 0.0
  %2859 = vmatpush1.msra.mxu0 %v75
  %2860 = vmatprep.subr.mxu0 0.0
  %2861 = vmatpush1.msra.mxu0 %v74
  %2862 = vmatprep.subr.mxu0 0.0
  %2863 = vmatpush1.msra.mxu0 %v73
  %2864 = vmatprep.subr.mxu0 0.0
  %2865 = vmatpush1.msra.mxu0 %v72
  %2866 = vmatprep.subr.mxu0 0.0
  %2867 = vmatpush1.msra.mxu0 %v71
  %2868 = vmatprep.subr.mxu0 0.0
  %2869 = vmatpush1.msra.mxu0 %v70
  %2870 = vmatprep.subr.mxu0 0.0
  %2871 = vmatpush2.msra.mxu0 0.0
  %2872 = vmatprep.subr.mxu0 0.0
  %2873 = vmatpush2.msra.mxu0 0.0
  %2874 = vmatprep.subr.mxu0 0.0
  %2875 = vmatpush2.msra.mxu0 0.0
  %2876 = vmatprep.subr.mxu0 0.0
  %2877 = vmatpush2.msra.mxu0 0.0
  %2878 = vmatprep.subr.mxu0 0.0
  %2879 = vmatpush2.msra.mxu0 0.0
  %2880 = vmatprep.subr.mxu0 0.0
  %2881 = vmatpush2.msra.mxu0 0.0
  %2882 = vmatprep.subr.mxu0 0.0
  %2883 = vmatpush2.msra.mxu0 0.0
  %2884 = vmatprep.subr.mxu0 0.0
  %2885 = vmatpush2.msra.mxu0 0.0
  %2886 = vmatprep.subr.mxu0 0.0
  %2887 = vmatpush2.msra.mxu0 0.0
  %2888 = vmatprep.subr.mxu0 0.0
  %2889 = vmatpush2.msra.mxu0 0.0
  %2890 = vmatprep.subr.mxu0 0.0
  %2891 = vmatpush2.msra.mxu0 0.0
  %2892 = vmatprep.subr.mxu0 0.0
  %2893 = vmatpush2.msra.mxu0 0.0
  %2894 = vmatprep.subr.mxu0 0.0
  %2895 = vmatpush2.msra.mxu0 0.0
  %2896 = vmatprep.subr.mxu0 0.0
  %2897 = vmatpush2.msra.mxu0 0.0
  %2898 = vmatprep.subr.mxu0 0.0
  %2899 = vmatpush2.msra.mxu0 0.0
  %2900 = vmatprep.subr.mxu0 0.0
  %2901 = vmatpush2.msra.mxu0 0.0
  %2902 = vmatprep.mubr.f32.mxu0 0.0
  %2903 = vmatmul.mubr.f32.gmra.mxu0 %v2827
  %v2904 = vpop.f32.mrf.mxu0
  %v2905 = vadd.f32 %v2815, %v2904
  %v2906 = vpop.f32.mrf.mxu0
  %2907 = vmatprep.mubr.f32.mxu0 0.0
  %2908 = vmatmul.mubr.f32.gmra.mxu0 %v2830
  %v2909 = vpop.f32.mrf.mxu0
  %v2910 = vadd.f32 %v2817, %v2909
  %v2911 = vpop.f32.mrf.mxu0
  %2912 = vmatprep.mubr.f32.mxu0 0.0
  %2913 = vmatmul.mubr.f32.gmra.mxu0 %v2833
  %v2914 = vpop.f32.mrf.mxu0
  %v2915 = vadd.f32 %v2819, %v2914
  %v2916 = vpop.f32.mrf.mxu0
  %2917 = vmatprep.mubr.f32.mxu0 0.0
  %2918 = vmatmul.mubr.f32.gmra.mxu0 %v2836
  %v2919 = vpop.f32.mrf.mxu0
  %v2920 = vadd.f32 %v2821, %v2919
  %v2921 = vpop.f32.mrf.mxu0
  %2922 = vdwg.mxu0
  %v2923 = vtanh.pop %v2905
  %v2924 = vtanh.pop %v2910
  %v2925 = vtanh.pop %v2915
  %v2926 = vtanh.pop %v2920
  %v2927 = vmul.f32 %v2557, %v2229
  %v2928 = vmul.f32 %v2559, %v2230
  %v2929 = vmul.f32 %v2561, %v2231
  %v2930 = vmul.f32 %v2563, %v2232
  %v2931 = vsub.f32 1.0, %v2557
  %v2932 = vsub.f32 1.0, %v2559
  %v2933 = vsub.f32 1.0, %v2561
  %v2934 = vsub.f32 1.0, %v2563
  %v2935 = vmul.f32 %v2931, %v2923
  %v2936 = vmul.f32 %v2932, %v2924
  %v2937 = vmul.f32 %v2933, %v2925
  %v2938 = vmul.f32 %v2934, %v2926
  %v2939 = vadd.f32 %v2927, %v2935
  %v2940 = vadd.f32 %v2928, %v2936
  %v2941 = vadd.f32 %v2929, %v2937
  %v2942 = vadd.f32 %v2930, %v2938
  %2943 = vmatprep.subr.mxu0 0.0
  %2944 = vmatpush1.msra.mxu0 0.0
  %2945 = vmatprep.subr.mxu0 0.0
  %2946 = vmatpush1.msra.mxu0 0.0
  %2947 = vmatprep.subr.mxu0 0.0
  %2948 = vmatpush1.msra.mxu0 0.0
  %2949 = vmatprep.subr.mxu0 0.0
  %2950 = vmatpush1.msra.mxu0 0.0
  %2951 = vmatprep.subr.mxu0 0.0
  %2952 = vmatpush1.msra.mxu0 0.0
  %2953 = vmatprep.subr.mxu0 0.0
  %2954 = vmatpush1.msra.mxu0 0.0
  %2955 = vmatprep.subr.mxu0 0.0
  %2956 = vmatpush1.msra.mxu0 0.0
  %2957 = vmatprep.subr.mxu0 0.0
  %2958 = vmatpush1.msra.mxu0 0.0
  %2959 = vmatprep.subr.mxu0 0.0
  %2960 = vmatpush1.msra.mxu0 0.0
  %2961 = vmatprep.subr.mxu0 0.0
  %2962 = vmatpush1.msra.mxu0 0.0
  %2963 = vmatprep.subr.mxu0 0.0
  %2964 = vmatpush1.msra.mxu0 0.0
  %2965 = vmatprep.subr.mxu0 0.0
  %2966 = vmatpush1.msra.mxu0 0.0
  %2967 = vmatprep.subr.mxu0 0.0
  %2968 = vmatpush1.msra.mxu0 %v2942
  %2969 = vmatprep.subr.mxu0 0.0
  %2970 = vmatpush1.msra.mxu0 %v2941
  %2971 = vmatprep.subr.mxu0 0.0
  %2972 = vmatpush1.msra.mxu0 %v2940
  %2973 = vmatprep.subr.mxu0 0.0
  %2974 = vmatpush1.msra.mxu0 %v2939
  %2975 = vmatprep.subr.mxu0 0.0
  %2976 = vmatpush2.msra.mxu0 0.0
  %2977 = vmatprep.subr.mxu0 0.0
  %2978 = vmatpush2.msra.mxu0 0.0
  %2979 = vmatprep.subr.mxu0 0.0
  %2980 = vmatpush2.msra.mxu0 0.0
  %2981 = vmatprep.subr.mxu0 0.0
  %2982 = vmatpush2.msra.mxu0 0.0
  %2983 = vmatprep.subr.mxu0 0.0
  %2984 = vmatpush2.msra.mxu0 0.0
  %2985 = vmatprep.subr.mxu0 0.0
  %2986 = vmatpush2.msra.mxu0 0.0
  %2987 = vmatprep.subr.mxu0 0.0
  %2988 = vmatpush2.msra.mxu0 0.0
  %2989 = vmatprep.subr.mxu0 0.0
  %2990 = vmatpush2.msra.mxu0 0.0
  %2991 = vmatprep.subr.mxu0 0.0
  %2992 = vmatpush2.msra.mxu0 0.0
  %2993 = vmatprep.subr.mxu0 0.0
  %2994 = vmatpush2.msra.mxu0 0.0
  %2995 = vmatprep.subr.mxu0 0.0
  %2996 = vmatpush2.msra.mxu0 0.0
  %2997 = vmatprep.subr.mxu0 0.0
  %2998 = vmatpush2.msra.mxu0 0.0
  %2999 = vmatprep.subr.mxu0 0.0
  %3000 = vmatpush2.msra.mxu0 0.0
  %3001 = vmatprep.subr.mxu0 0.0
  %3002 = vmatpush2.msra.mxu0 0.0
  %3003 = vmatprep.subr.mxu0 0.0
  %3004 = vmatpush2.msra.mxu0 0.0
  %3005 = vmatprep.subr.mxu0 0.0
  %3006 = vmatpush2.msra.mxu0 0.0
  %3007 = vmatprep.mubr.f32.mxu0 0.0
  %3008 = vmatmul.mubr.f32.gmra.mxu0 %v98
  %v3009 = vpop.f32.mrf.mxu0
  %v3010 = vadd.f32 0.0, %v3009
  %v3011 = vpop.f32.mrf.mxu0
  %3012 = vmatprep.mubr.f32.mxu0 0.0
  %3013 = vmatmul.mubr.f32.gmra.mxu0 %v101
  %v3014 = vpop.f32.mrf.mxu0
  %v3015 = vadd.f32 0.0, %v3014
  %v3016 = vpop.f32.mrf.mxu0
  %3017 = vmatprep.mubr.f32.mxu0 0.0
  %3018 = vmatmul.mubr.f32.gmra.mxu0 %v104
  %v3019 = vpop.f32.mrf.mxu0
  %v3020 = vadd.f32 0.0, %v3019
  %v3021 = vpop.f32.mrf.mxu0
  %3022 = vmatprep.mubr.f32.mxu0 0.0
  %3023 = vmatmul.mubr.f32.gmra.mxu0 %v107
  %v3024 = vpop.f32.mrf.mxu0
  %v3025 = vadd.f32 0.0, %v3024
  %v3026 = vpop.f32.mrf.mxu0
  %3027 = vdwg.mxu0
  %3028 = vmatprep.subr.mxu0 0.0
  %3029 = vmatpush1.msra.mxu0 0.0
  %3030 = vmatprep.subr.mxu0 0.0
  %3031 = vmatpush1.msra.mxu0 0.0
  %3032 = vmatprep.subr.mxu0 0.0
  %3033 = vmatpush1.msra.mxu0 0.0
  %3034 = vmatprep.subr.mxu0 0.0
  %3035 = vmatpush1.msra.mxu0 0.0
  %3036 = vmatprep.subr.mxu0 0.0
  %3037 = vmatpush1.msra.mxu0 0.0
  %3038 = vmatprep.subr.mxu0 0.0
  %3039 = vmatpush1.msra.mxu0 0.0
  %3040 = vmatprep.subr.mxu0 0.0
  %3041 = vmatpush1.msra.mxu0 0.0
  %3042 = vmatprep.subr.mxu0 0.0
  %3043 = vmatpush1.msra.mxu0 0.0
  %3044 = vmatprep.subr.mxu0 0.0
  %3045 = vmatpush1.msra.mxu0 0.0
  %3046 = vmatprep.subr.mxu0 0.0
  %3047 = vmatpush1.msra.mxu0 0.0
  %3048 = vmatprep.subr.mxu0 0.0
  %3049 = vmatpush1.msra.mxu0 0.0
  %3050 = vmatprep.subr.mxu0 0.0
  %3051 = vmatpush1.msra.mxu0 0.0
  %3052 = vmatprep.subr.mxu0 0.0
  %3053 = vmatpush1.msra.mxu0 %v2942
  %3054 = vmatprep.subr.mxu0 0.0
  %3055 = vmatpush1.msra.mxu0 %v2941
  %3056 = vmatprep.subr.mxu0 0.0
  %3057 = vmatpush1.msra.mxu0 %v2940
  %3058 = vmatprep.subr.mxu0 0.0
  %3059 = vmatpush1.msra.mxu0 %v2939
  %3060 = vmatprep.subr.mxu0 0.0
  %3061 = vmatpush2.msra.mxu0 0.0
  %3062 = vmatprep.subr.mxu0 0.0
  %3063 = vmatpush2.msra.mxu0 0.0
  %3064 = vmatprep.subr.mxu0 0.0
  %3065 = vmatpush2.msra.mxu0 0.0
  %3066 = vmatprep.subr.mxu0 0.0
  %3067 = vmatpush2.msra.mxu0 0.0
  %3068 = vmatprep.subr.mxu0 0.0
  %3069 = vmatpush2.msra.mxu0 0.0
  %3070 = vmatprep.subr.mxu0 0.0
  %3071 = vmatpush2.msra.mxu0 0.0
  %3072 = vmatprep.subr.mxu0 0.0
  %3073 = vmatpush2.msra.mxu0 0.0
  %3074 = vmatprep.subr.mxu0 0.0
  %3075 = vmatpush2.msra.mxu0 0.0
  %3076 = vmatprep.subr.mxu0 0.0
  %3077 = vmatpush2.msra.mxu0 0.0
  %3078 = vmatprep.subr.mxu0 0.0
  %3079 = vmatpush2.msra.mxu0 0.0
  %3080 = vmatprep.subr.mxu0 0.0
  %3081 = vmatpush2.msra.mxu0 0.0
  %3082 = vmatprep.subr.mxu0 0.0
  %3083 = vmatpush2.msra.mxu0 0.0
  %3084 = vmatprep.subr.mxu0 0.0
  %3085 = vmatpush2.msra.mxu0 0.0
  %3086 = vmatprep.subr.mxu0 0.0
  %3087 = vmatpush2.msra.mxu0 0.0
  %3088 = vmatprep.subr.mxu0 0.0
  %3089 = vmatpush2.msra.mxu0 0.0
  %3090 = vmatprep.subr.mxu0 0.0
  %3091 = vmatpush2.msra.mxu0 0.0
  %3092 = vmatprep.mubr.f32.mxu0 0.0
  %3093 = vmatmul.mubr.f32.gmra.mxu0 %v195
  %v3094 = vpop.f32.mrf.mxu0
  %v3095 = vadd.f32 0.0, %v3094
  %v3096 = vpop.f32.mrf.mxu0
  %3097 = vmatprep.mubr.f32.mxu0 0.0
  %3098 = vmatmul.mubr.f32.gmra.mxu0 %v198
  %v3099 = vpop.f32.mrf.mxu0
  %v3100 = vadd.f32 0.0, %v3099
  %v3101 = vpop.f32.mrf.mxu0
  %3102 = vmatprep.mubr.f32.mxu0 0.0
  %3103 = vmatmul.mubr.f32.gmra.mxu0 %v201
  %v3104 = vpop.f32.mrf.mxu0
  %v3105 = vadd.f32 0.0, %v3104
  %v3106 = vpop.f32.mrf.mxu0
  %3107 = vmatprep.mubr.f32.mxu0 0.0
  %3108 = vmatmul.mubr.f32.gmra.mxu0 %v204
  %v3109 = vpop.f32.mrf.mxu0
  %v3110 = vadd.f32 0.0, %v3109
  %v3111 = vpop.f32.mrf.mxu0
  %3112 = vdwg.mxu0
  %3117 = vrot.lane.b32.xlu0 %v3010, 32
  %v3118 = vpop.permute.xlu0 %3117
  %3119 = vrot.lane.b32.xlu0 %v3015, 32
  %v3120 = vpop.permute.xlu0 %3119
  %3121 = vrot.lane.b32.xlu0 %v3020, 32
  %v3122 = vpop.permute.xlu0 %3121
  %3123 = vrot.lane.b32.xlu0 %v3025, 32
  %v3124 = vpop.permute.xlu0 %3123
  %3133 = vrot.lane.b32.xlu0 %v3095, 64
  %v3134 = vpop.permute.xlu0 %3133
  %3135 = vrot.lane.b32.xlu0 %v3100, 64
  %v3136 = vpop.permute.xlu0 %3135
  %3137 = vrot.lane.b32.xlu0 %v3105, 64
  %v3138 = vpop.permute.xlu0 %3137
  %3139 = vrot.lane.b32.xlu0 %v3110, 64
  %v3140 = vpop.permute.xlu0 %3139
  %v3145 = vsel %vm96, %v2939, %v3118
  %v3146 = vsel %vm96, %v2940, %v3120
  %v3147 = vsel %vm96, %v2941, %v3122
  %v3148 = vsel %vm96, %v2942, %v3124
  %v3149 = vsel %vm327, %v3145, %v3134
  %v3150 = vsel %vm327, %v3146, %v3136
  %v3151 = vsel %vm327, %v3147, %v3138
  %v3152 = vsel %vm327, %v3148, %v3140
  %v3154 = vsel %vm332, %v3149, 0
  %v3157 = vsel %vm332, %v3150, 0
  %v3160 = vsel %vm332, %v3151, 0
  %v3163 = vsel %vm332, %v3152, 0
  %3165 = vmatprep.subr.mxu0 0.0
  %3166 = vmatpush1.msra.mxu0 0.0
  %3167 = vmatprep.subr.mxu0 0.0
  %3168 = vmatpush1.msra.mxu0 0.0
  %3169 = vmatprep.subr.mxu0 0.0
  %3170 = vmatpush1.msra.mxu0 0.0
  %3171 = vmatprep.subr.mxu0 0.0
  %3172 = vmatpush1.msra.mxu0 0.0
  %3173 = vmatprep.subr.mxu0 0.0
  %3174 = vmatpush1.msra.mxu0 %v69
  %3175 = vmatprep.subr.mxu0 0.0
  %3176 = vmatpush1.msra.mxu0 %v68
  %3177 = vmatprep.subr.mxu0 0.0
  %3178 = vmatpush1.msra.mxu0 %v67
  %3179 = vmatprep.subr.mxu0 0.0
  %3180 = vmatpush1.msra.mxu0 %v66
  %3181 = vmatprep.subr.mxu0 0.0
  %3182 = vmatpush1.msra.mxu0 %v65
  %3183 = vmatprep.subr.mxu0 0.0
  %3184 = vmatpush1.msra.mxu0 %v64
  %3185 = vmatprep.subr.mxu0 0.0
  %3186 = vmatpush1.msra.mxu0 %v63
  %3187 = vmatprep.subr.mxu0 0.0
  %3188 = vmatpush1.msra.mxu0 %v62
  %3189 = vmatprep.subr.mxu0 0.0
  %3190 = vmatpush1.msra.mxu0 %v61
  %3191 = vmatprep.subr.mxu0 0.0
  %3192 = vmatpush1.msra.mxu0 %v60
  %3193 = vmatprep.subr.mxu0 0.0
  %3194 = vmatpush1.msra.mxu0 %v59
  %3195 = vmatprep.subr.mxu0 0.0
  %3196 = vmatpush1.msra.mxu0 %v58
  %3197 = vmatprep.subr.mxu0 0.0
  %3198 = vmatpush2.msra.mxu0 0.0
  %3199 = vmatprep.subr.mxu0 0.0
  %3200 = vmatpush2.msra.mxu0 0.0
  %3201 = vmatprep.subr.mxu0 0.0
  %3202 = vmatpush2.msra.mxu0 0.0
  %3203 = vmatprep.subr.mxu0 0.0
  %3204 = vmatpush2.msra.mxu0 0.0
  %3205 = vmatprep.subr.mxu0 0.0
  %3206 = vmatpush2.msra.mxu0 0.0
  %3207 = vmatprep.subr.mxu0 0.0
  %3208 = vmatpush2.msra.mxu0 0.0
  %3209 = vmatprep.subr.mxu0 0.0
  %3210 = vmatpush2.msra.mxu0 0.0
  %3211 = vmatprep.subr.mxu0 0.0
  %3212 = vmatpush2.msra.mxu0 0.0
  %3213 = vmatprep.subr.mxu0 0.0
  %3214 = vmatpush2.msra.mxu0 0.0
  %3215 = vmatprep.subr.mxu0 0.0
  %3216 = vmatpush2.msra.mxu0 0.0
  %3217 = vmatprep.subr.mxu0 0.0
  %3218 = vmatpush2.msra.mxu0 0.0
  %3219 = vmatprep.subr.mxu0 0.0
  %3220 = vmatpush2.msra.mxu0 0.0
  %3221 = vmatprep.subr.mxu0 0.0
  %3222 = vmatpush2.msra.mxu0 0.0
  %3223 = vmatprep.subr.mxu0 0.0
  %3224 = vmatpush2.msra.mxu0 0.0
  %3225 = vmatprep.subr.mxu0 0.0
  %3226 = vmatpush2.msra.mxu0 0.0
  %3227 = vmatprep.subr.mxu0 0.0
  %3228 = vmatpush2.msra.mxu0 0.0
  %3229 = vmatprep.mubr.f32.mxu0 0.0
  %3230 = vmatmul.mubr.f32.gmra.mxu0 %v3154
  %v3231 = vpop.f32.mrf.mxu0
  %v3232 = vadd.f32 %v815, %v3231
  %v3233 = vpop.f32.mrf.mxu0
  %3234 = vmatprep.mubr.f32.mxu0 0.0
  %3235 = vmatmul.mubr.f32.gmra.mxu0 %v3157
  %v3236 = vpop.f32.mrf.mxu0
  %v3237 = vadd.f32 %v820, %v3236
  %v3238 = vpop.f32.mrf.mxu0
  %3239 = vmatprep.mubr.f32.mxu0 0.0
  %3240 = vmatmul.mubr.f32.gmra.mxu0 %v3160
  %v3241 = vpop.f32.mrf.mxu0
  %v3242 = vadd.f32 %v825, %v3241
  %v3243 = vpop.f32.mrf.mxu0
  %3244 = vmatprep.mubr.f32.mxu0 0.0
  %3245 = vmatmul.mubr.f32.gmra.mxu0 %v3163
  %v3246 = vpop.f32.mrf.mxu0
  %v3247 = vadd.f32 %v830, %v3246
  %v3248 = vpop.f32.mrf.mxu0
  %3249 = vdwg.mxu0
  %v3250 = vxor.u32 %v3232, 2147483648
  %v3251 = vxor.u32 %v3237, 2147483648
  %v3252 = vxor.u32 %v3242, 2147483648
  %v3253 = vxor.u32 %v3247, 2147483648
  %v3254 = vmul.f32 %v3250, 1.442695
  %v3255 = vpow.pop %v3254
  %v3256 = vmul.f32 %v3251, 1.442695
  %v3257 = vpow.pop %v3256
  %v3258 = vmul.f32 %v3252, 1.442695
  %v3259 = vpow.pop %v3258
  %v3260 = vmul.f32 %v3253, 1.442695
  %v3261 = vpow.pop %v3260
  %v3262 = vadd.f32 %v3255, 1.0
  %v3263 = vadd.f32 %v3257, 1.0
  %v3264 = vadd.f32 %v3259, 1.0
  %v3265 = vadd.f32 %v3261, 1.0
  %v3266 = vrcp.pop %v3262
  %v3267 = vmul.f32 1.0, %v3266
  %v3268 = vrcp.pop %v3263
  %v3269 = vmul.f32 1.0, %v3268
  %v3270 = vrcp.pop %v3264
  %v3271 = vmul.f32 1.0, %v3270
  %v3272 = vrcp.pop %v3265
  %v3273 = vmul.f32 1.0, %v3272
  %3278 = vrot.lane.b32.xlu0 %v2939, 32
  %v3279 = vpop.permute.xlu0 %3278
  %3280 = vrot.lane.b32.xlu0 %v2940, 32
  %v3281 = vpop.permute.xlu0 %3280
  %3282 = vrot.lane.b32.xlu0 %v2941, 32
  %v3283 = vpop.permute.xlu0 %3282
  %3284 = vrot.lane.b32.xlu0 %v2942, 32
  %v3285 = vpop.permute.xlu0 %3284
  %v3290 = vmul.f32 %v3267, %v3279
  %v3291 = vmul.f32 %v3269, %v3281
  %v3292 = vmul.f32 %v3271, %v3283
  %v3293 = vmul.f32 %v3273, %v3285
  %3298 = vrot.lane.b32.xlu0 %v3290, 96
  %v3299 = vpop.permute.xlu0 %3298
  %3300 = vrot.lane.b32.xlu0 %v3291, 96
  %v3301 = vpop.permute.xlu0 %3300
  %3302 = vrot.lane.b32.xlu0 %v3292, 96
  %v3303 = vpop.permute.xlu0 %3302
  %3304 = vrot.lane.b32.xlu0 %v3293, 96
  %v3305 = vpop.permute.xlu0 %3304
  %3310 = vmatprep.subr.mxu0 0.0
  %3311 = vmatpush1.msra.mxu0 0.0
  %3312 = vmatprep.subr.mxu0 0.0
  %3313 = vmatpush1.msra.mxu0 0.0
  %3314 = vmatprep.subr.mxu0 0.0
  %3315 = vmatpush1.msra.mxu0 0.0
  %3316 = vmatprep.subr.mxu0 0.0
  %3317 = vmatpush1.msra.mxu0 0.0
  %3318 = vmatprep.subr.mxu0 0.0
  %3319 = vmatpush1.msra.mxu0 0.0
  %3320 = vmatprep.subr.mxu0 0.0
  %3321 = vmatpush1.msra.mxu0 0.0
  %3322 = vmatprep.subr.mxu0 0.0
  %3323 = vmatpush1.msra.mxu0 0.0
  %3324 = vmatprep.subr.mxu0 0.0
  %3325 = vmatpush1.msra.mxu0 0.0
  %3326 = vmatprep.subr.mxu0 0.0
  %3327 = vmatpush1.msra.mxu0 0.0
  %3328 = vmatprep.subr.mxu0 0.0
  %3329 = vmatpush1.msra.mxu0 0.0
  %3330 = vmatprep.subr.mxu0 0.0
  %3331 = vmatpush1.msra.mxu0 0.0
  %3332 = vmatprep.subr.mxu0 0.0
  %3333 = vmatpush1.msra.mxu0 0.0
  %3334 = vmatprep.subr.mxu0 0.0
  %3335 = vmatpush1.msra.mxu0 %v3305
  %3336 = vmatprep.subr.mxu0 0.0
  %3337 = vmatpush1.msra.mxu0 %v3303
  %3338 = vmatprep.subr.mxu0 0.0
  %3339 = vmatpush1.msra.mxu0 %v3301
  %3340 = vmatprep.subr.mxu0 0.0
  %3341 = vmatpush1.msra.mxu0 %v3299
  %3342 = vmatprep.subr.mxu0 0.0
  %3343 = vmatpush2.msra.mxu0 0.0
  %3344 = vmatprep.subr.mxu0 0.0
  %3345 = vmatpush2.msra.mxu0 0.0
  %3346 = vmatprep.subr.mxu0 0.0
  %3347 = vmatpush2.msra.mxu0 0.0
  %3348 = vmatprep.subr.mxu0 0.0
  %3349 = vmatpush2.msra.mxu0 0.0
  %3350 = vmatprep.subr.mxu0 0.0
  %3351 = vmatpush2.msra.mxu0 0.0
  %3352 = vmatprep.subr.mxu0 0.0
  %3353 = vmatpush2.msra.mxu0 0.0
  %3354 = vmatprep.subr.mxu0 0.0
  %3355 = vmatpush2.msra.mxu0 0.0
  %3356 = vmatprep.subr.mxu0 0.0
  %3357 = vmatpush2.msra.mxu0 0.0
  %3358 = vmatprep.subr.mxu0 0.0
  %3359 = vmatpush2.msra.mxu0 0.0
  %3360 = vmatprep.subr.mxu0 0.0
  %3361 = vmatpush2.msra.mxu0 0.0
  %3362 = vmatprep.subr.mxu0 0.0
  %3363 = vmatpush2.msra.mxu0 0.0
  %3364 = vmatprep.subr.mxu0 0.0
  %3365 = vmatpush2.msra.mxu0 0.0
  %3366 = vmatprep.subr.mxu0 0.0
  %3367 = vmatpush2.msra.mxu0 0.0
  %3368 = vmatprep.subr.mxu0 0.0
  %3369 = vmatpush2.msra.mxu0 0.0
  %3370 = vmatprep.subr.mxu0 0.0
  %3371 = vmatpush2.msra.mxu0 0.0
  %3372 = vmatprep.subr.mxu0 0.0
  %3373 = vmatpush2.msra.mxu0 0.0
  %3374 = vmatprep.mubr.f32.mxu0 0.0
  %3375 = vmatmul.mubr.f32.gmra.mxu0 %v98
  %v3376 = vpop.f32.mrf.mxu0
  %v3377 = vadd.f32 0.0, %v3376
  %v3378 = vpop.f32.mrf.mxu0
  %3379 = vmatprep.mubr.f32.mxu0 0.0
  %3380 = vmatmul.mubr.f32.gmra.mxu0 %v101
  %v3381 = vpop.f32.mrf.mxu0
  %v3382 = vadd.f32 0.0, %v3381
  %v3383 = vpop.f32.mrf.mxu0
  %3384 = vmatprep.mubr.f32.mxu0 0.0
  %3385 = vmatmul.mubr.f32.gmra.mxu0 %v104
  %v3386 = vpop.f32.mrf.mxu0
  %v3387 = vadd.f32 0.0, %v3386
  %v3388 = vpop.f32.mrf.mxu0
  %3389 = vmatprep.mubr.f32.mxu0 0.0
  %3390 = vmatmul.mubr.f32.gmra.mxu0 %v107
  %v3391 = vpop.f32.mrf.mxu0
  %v3392 = vadd.f32 0.0, %v3391
  %v3393 = vpop.f32.mrf.mxu0
  %3394 = vdwg.mxu0
  %3395 = vmatprep.subr.mxu0 0.0
  %3396 = vmatpush1.msra.mxu0 0.0
  %3397 = vmatprep.subr.mxu0 0.0
  %3398 = vmatpush1.msra.mxu0 0.0
  %3399 = vmatprep.subr.mxu0 0.0
  %3400 = vmatpush1.msra.mxu0 0.0
  %3401 = vmatprep.subr.mxu0 0.0
  %3402 = vmatpush1.msra.mxu0 0.0
  %3403 = vmatprep.subr.mxu0 0.0
  %3404 = vmatpush1.msra.mxu0 0.0
  %3405 = vmatprep.subr.mxu0 0.0
  %3406 = vmatpush1.msra.mxu0 0.0
  %3407 = vmatprep.subr.mxu0 0.0
  %3408 = vmatpush1.msra.mxu0 0.0
  %3409 = vmatprep.subr.mxu0 0.0
  %3410 = vmatpush1.msra.mxu0 0.0
  %3411 = vmatprep.subr.mxu0 0.0
  %3412 = vmatpush1.msra.mxu0 0.0
  %3413 = vmatprep.subr.mxu0 0.0
  %3414 = vmatpush1.msra.mxu0 0.0
  %3415 = vmatprep.subr.mxu0 0.0
  %3416 = vmatpush1.msra.mxu0 0.0
  %3417 = vmatprep.subr.mxu0 0.0
  %3418 = vmatpush1.msra.mxu0 0.0
  %3419 = vmatprep.subr.mxu0 0.0
  %3420 = vmatpush1.msra.mxu0 %v3305
  %3421 = vmatprep.subr.mxu0 0.0
  %3422 = vmatpush1.msra.mxu0 %v3303
  %3423 = vmatprep.subr.mxu0 0.0
  %3424 = vmatpush1.msra.mxu0 %v3301
  %3425 = vmatprep.subr.mxu0 0.0
  %3426 = vmatpush1.msra.mxu0 %v3299
  %3427 = vmatprep.subr.mxu0 0.0
  %3428 = vmatpush2.msra.mxu0 0.0
  %3429 = vmatprep.subr.mxu0 0.0
  %3430 = vmatpush2.msra.mxu0 0.0
  %3431 = vmatprep.subr.mxu0 0.0
  %3432 = vmatpush2.msra.mxu0 0.0
  %3433 = vmatprep.subr.mxu0 0.0
  %3434 = vmatpush2.msra.mxu0 0.0
  %3435 = vmatprep.subr.mxu0 0.0
  %3436 = vmatpush2.msra.mxu0 0.0
  %3437 = vmatprep.subr.mxu0 0.0
  %3438 = vmatpush2.msra.mxu0 0.0
  %3439 = vmatprep.subr.mxu0 0.0
  %3440 = vmatpush2.msra.mxu0 0.0
  %3441 = vmatprep.subr.mxu0 0.0
  %3442 = vmatpush2.msra.mxu0 0.0
  %3443 = vmatprep.subr.mxu0 0.0
  %3444 = vmatpush2.msra.mxu0 0.0
  %3445 = vmatprep.subr.mxu0 0.0
  %3446 = vmatpush2.msra.mxu0 0.0
  %3447 = vmatprep.subr.mxu0 0.0
  %3448 = vmatpush2.msra.mxu0 0.0
  %3449 = vmatprep.subr.mxu0 0.0
  %3450 = vmatpush2.msra.mxu0 0.0
  %3451 = vmatprep.subr.mxu0 0.0
  %3452 = vmatpush2.msra.mxu0 0.0
  %3453 = vmatprep.subr.mxu0 0.0
  %3454 = vmatpush2.msra.mxu0 0.0
  %3455 = vmatprep.subr.mxu0 0.0
  %3456 = vmatpush2.msra.mxu0 0.0
  %3457 = vmatprep.subr.mxu0 0.0
  %3458 = vmatpush2.msra.mxu0 0.0
  %3459 = vmatprep.mubr.f32.mxu0 0.0
  %3460 = vmatmul.mubr.f32.gmra.mxu0 %v195
  %v3461 = vpop.f32.mrf.mxu0
  %v3462 = vadd.f32 0.0, %v3461
  %v3463 = vpop.f32.mrf.mxu0
  %3464 = vmatprep.mubr.f32.mxu0 0.0
  %3465 = vmatmul.mubr.f32.gmra.mxu0 %v198
  %v3466 = vpop.f32.mrf.mxu0
  %v3467 = vadd.f32 0.0, %v3466
  %v3468 = vpop.f32.mrf.mxu0
  %3469 = vmatprep.mubr.f32.mxu0 0.0
  %3470 = vmatmul.mubr.f32.gmra.mxu0 %v201
  %v3471 = vpop.f32.mrf.mxu0
  %v3472 = vadd.f32 0.0, %v3471
  %v3473 = vpop.f32.mrf.mxu0
  %3474 = vmatprep.mubr.f32.mxu0 0.0
  %3475 = vmatmul.mubr.f32.gmra.mxu0 %v204
  %v3476 = vpop.f32.mrf.mxu0
  %v3477 = vadd.f32 0.0, %v3476
  %v3478 = vpop.f32.mrf.mxu0
  %3479 = vdwg.mxu0
  %3484 = vrot.lane.b32.xlu0 %v3377, 32
  %v3485 = vpop.permute.xlu0 %3484
  %3486 = vrot.lane.b32.xlu0 %v3382, 32
  %v3487 = vpop.permute.xlu0 %3486
  %3488 = vrot.lane.b32.xlu0 %v3387, 32
  %v3489 = vpop.permute.xlu0 %3488
  %3490 = vrot.lane.b32.xlu0 %v3392, 32
  %v3491 = vpop.permute.xlu0 %3490
  %3500 = vrot.lane.b32.xlu0 %v3462, 64
  %v3501 = vpop.permute.xlu0 %3500
  %3502 = vrot.lane.b32.xlu0 %v3467, 64
  %v3503 = vpop.permute.xlu0 %3502
  %3504 = vrot.lane.b32.xlu0 %v3472, 64
  %v3505 = vpop.permute.xlu0 %3504
  %3506 = vrot.lane.b32.xlu0 %v3477, 64
  %v3507 = vpop.permute.xlu0 %3506
  %v3512 = vsel %vm96, %v3299, %v3485
  %v3513 = vsel %vm96, %v3301, %v3487
  %v3514 = vsel %vm96, %v3303, %v3489
  %v3515 = vsel %vm96, %v3305, %v3491
  %v3516 = vsel %vm327, %v3512, %v3501
  %v3517 = vsel %vm327, %v3513, %v3503
  %v3518 = vsel %vm327, %v3514, %v3505
  %v3519 = vsel %vm327, %v3515, %v3507
  %3524 = vrot.lane.b32.xlu0 %v815, 64
  %v3525 = vpop.permute.xlu0 %3524
  %3526 = vrot.lane.b32.xlu0 %v820, 64
  %v3527 = vpop.permute.xlu0 %3526
  %3528 = vrot.lane.b32.xlu0 %v825, 64
  %v3529 = vpop.permute.xlu0 %3528
  %3530 = vrot.lane.b32.xlu0 %v830, 64
  %v3531 = vpop.permute.xlu0 %3530
  %v3537 = vsel %vm332, %v3516, 0
  %v3540 = vsel %vm332, %v3517, 0
  %v3543 = vsel %vm332, %v3518, 0
  %v3546 = vsel %vm332, %v3519, 0
  %3548 = vmatprep.subr.mxu0 0.0
  %3549 = vmatpush1.msra.mxu0 0.0
  %3550 = vmatprep.subr.mxu0 0.0
  %3551 = vmatpush1.msra.mxu0 0.0
  %3552 = vmatprep.subr.mxu0 0.0
  %3553 = vmatpush1.msra.mxu0 0.0
  %3554 = vmatprep.subr.mxu0 0.0
  %3555 = vmatpush1.msra.mxu0 0.0
  %3556 = vmatprep.subr.mxu0 0.0
  %3557 = vmatpush1.msra.mxu0 %v81
  %3558 = vmatprep.subr.mxu0 0.0
  %3559 = vmatpush1.msra.mxu0 %v80
  %3560 = vmatprep.subr.mxu0 0.0
  %3561 = vmatpush1.msra.mxu0 %v79
  %3562 = vmatprep.subr.mxu0 0.0
  %3563 = vmatpush1.msra.mxu0 %v78
  %3564 = vmatprep.subr.mxu0 0.0
  %3565 = vmatpush1.msra.mxu0 %v77
  %3566 = vmatprep.subr.mxu0 0.0
  %3567 = vmatpush1.msra.mxu0 %v76
  %3568 = vmatprep.subr.mxu0 0.0
  %3569 = vmatpush1.msra.mxu0 %v75
  %3570 = vmatprep.subr.mxu0 0.0
  %3571 = vmatpush1.msra.mxu0 %v74
  %3572 = vmatprep.subr.mxu0 0.0
  %3573 = vmatpush1.msra.mxu0 %v73
  %3574 = vmatprep.subr.mxu0 0.0
  %3575 = vmatpush1.msra.mxu0 %v72
  %3576 = vmatprep.subr.mxu0 0.0
  %3577 = vmatpush1.msra.mxu0 %v71
  %3578 = vmatprep.subr.mxu0 0.0
  %3579 = vmatpush1.msra.mxu0 %v70
  %3580 = vmatprep.subr.mxu0 0.0
  %3581 = vmatpush2.msra.mxu0 0.0
  %3582 = vmatprep.subr.mxu0 0.0
  %3583 = vmatpush2.msra.mxu0 0.0
  %3584 = vmatprep.subr.mxu0 0.0
  %3585 = vmatpush2.msra.mxu0 0.0
  %3586 = vmatprep.subr.mxu0 0.0
  %3587 = vmatpush2.msra.mxu0 0.0
  %3588 = vmatprep.subr.mxu0 0.0
  %3589 = vmatpush2.msra.mxu0 0.0
  %3590 = vmatprep.subr.mxu0 0.0
  %3591 = vmatpush2.msra.mxu0 0.0
  %3592 = vmatprep.subr.mxu0 0.0
  %3593 = vmatpush2.msra.mxu0 0.0
  %3594 = vmatprep.subr.mxu0 0.0
  %3595 = vmatpush2.msra.mxu0 0.0
  %3596 = vmatprep.subr.mxu0 0.0
  %3597 = vmatpush2.msra.mxu0 0.0
  %3598 = vmatprep.subr.mxu0 0.0
  %3599 = vmatpush2.msra.mxu0 0.0
  %3600 = vmatprep.subr.mxu0 0.0
  %3601 = vmatpush2.msra.mxu0 0.0
  %3602 = vmatprep.subr.mxu0 0.0
  %3603 = vmatpush2.msra.mxu0 0.0
  %3604 = vmatprep.subr.mxu0 0.0
  %3605 = vmatpush2.msra.mxu0 0.0
  %3606 = vmatprep.subr.mxu0 0.0
  %3607 = vmatpush2.msra.mxu0 0.0
  %3608 = vmatprep.subr.mxu0 0.0
  %3609 = vmatpush2.msra.mxu0 0.0
  %3610 = vmatprep.subr.mxu0 0.0
  %3611 = vmatpush2.msra.mxu0 0.0
  %3612 = vmatprep.mubr.f32.mxu0 0.0
  %3613 = vmatmul.mubr.f32.gmra.mxu0 %v3537
  %v3614 = vpop.f32.mrf.mxu0
  %v3615 = vadd.f32 %v3525, %v3614
  %v3616 = vpop.f32.mrf.mxu0
  %3617 = vmatprep.mubr.f32.mxu0 0.0
  %3618 = vmatmul.mubr.f32.gmra.mxu0 %v3540
  %v3619 = vpop.f32.mrf.mxu0
  %v3620 = vadd.f32 %v3527, %v3619
  %v3621 = vpop.f32.mrf.mxu0
  %3622 = vmatprep.mubr.f32.mxu0 0.0
  %3623 = vmatmul.mubr.f32.gmra.mxu0 %v3543
  %v3624 = vpop.f32.mrf.mxu0
  %v3625 = vadd.f32 %v3529, %v3624
  %v3626 = vpop.f32.mrf.mxu0
  %3627 = vmatprep.mubr.f32.mxu0 0.0
  %3628 = vmatmul.mubr.f32.gmra.mxu0 %v3546
  %v3629 = vpop.f32.mrf.mxu0
  %v3630 = vadd.f32 %v3531, %v3629
  %v3631 = vpop.f32.mrf.mxu0
  %3632 = vdwg.mxu0
  %v3633 = vtanh.pop %v3615
  %v3634 = vtanh.pop %v3620
  %v3635 = vtanh.pop %v3625
  %v3636 = vtanh.pop %v3630
  %v3637 = vmul.f32 %v3267, %v2939
  %v3638 = vmul.f32 %v3269, %v2940
  %v3639 = vmul.f32 %v3271, %v2941
  %v3640 = vmul.f32 %v3273, %v2942
  %v3641 = vsub.f32 1.0, %v3267
  %v3642 = vsub.f32 1.0, %v3269
  %v3643 = vsub.f32 1.0, %v3271
  %v3644 = vsub.f32 1.0, %v3273
  %v3645 = vmul.f32 %v3641, %v3633
  %v3646 = vmul.f32 %v3642, %v3634
  %v3647 = vmul.f32 %v3643, %v3635
  %v3648 = vmul.f32 %v3644, %v3636
  %v3649 = vadd.f32 %v3637, %v3645
  %v3650 = vadd.f32 %v3638, %v3646
  %v3651 = vadd.f32 %v3639, %v3647
  %v3652 = vadd.f32 %v3640, %v3648
  %3653 = vrot.lane.b32.xlu0 %v2939, 64
  %v3654 = vpop.permute.xlu0 %3653
  %3655 = vrot.lane.b32.xlu0 %v2940, 64
  %v3656 = vpop.permute.xlu0 %3655
  %3657 = vrot.lane.b32.xlu0 %v2941, 64
  %v3658 = vpop.permute.xlu0 %3657
  %3659 = vrot.lane.b32.xlu0 %v2942, 64
  %v3660 = vpop.permute.xlu0 %3659
  %3669 = vrot.lane.b32.xlu0 %v3649, 96
  %v3670 = vpop.permute.xlu0 %3669
  %3671 = vrot.lane.b32.xlu0 %v3650, 96
  %v3672 = vpop.permute.xlu0 %3671
  %3673 = vrot.lane.b32.xlu0 %v3651, 96
  %v3674 = vpop.permute.xlu0 %3673
  %3675 = vrot.lane.b32.xlu0 %v3652, 96
  %v3676 = vpop.permute.xlu0 %3675
  %v3681 = vsel %vm96, %v1519, %v2569
  %v3682 = vsel %vm96, %v1520, %v2571
  %v3683 = vsel %vm96, %v1521, %v2573
  %v3684 = vsel %vm96, %v1522, %v2575
  %v3685 = vsel %vm327, %v3681, %v3654
  %v3686 = vsel %vm327, %v3682, %v3656
  %v3687 = vsel %vm327, %v3683, %v3658
  %v3688 = vsel %vm327, %v3684, %v3660
  %v3689 = vsel %vm332, %v3685, %v3670
  %v3690 = vsel %vm332, %v3686, %v3672
  %v3691 = vsel %vm332, %v3687, %v3674
  %v3692 = vsel %vm332, %v3688, %v3676
  %v3693 = vld [vmem:[%s7] sm:$0xff]
  %v3694 = vld [vmem:[%s7 + $0x8] sm:$0xff]
  %v3695 = vld [vmem:[%s7 + $0x10] sm:$0xff]
  %v3696 = vld [vmem:[%s7 + $0x18] sm:$0xff]
  %v3697 = vld [vmem:[%s7 + $0x20] sm:$0xff]
  %v3698 = vld [vmem:[%s7 + $0x28] sm:$0xff]
  %v3699 = vld [vmem:[%s7 + $0x30] sm:$0xff]
  %v3700 = vld [vmem:[%s7 + $0x38] sm:$0xff]
  %v3701 = vld [vmem:[%s7 + $0x40] sm:$0xff]
  %v3702 = vld [vmem:[%s7 + $0x48] sm:$0xff]
  %v3703 = vld [vmem:[%s7 + $0x50] sm:$0xff]
  %v3704 = vld [vmem:[%s7 + $0x58] sm:$0xff]
  %v3705 = vld [vmem:[%s7 + $0x60] sm:$0xff]
  %v3706 = vld [vmem:[%s7 + $0x68] sm:$0xff]
  %v3707 = vld [vmem:[%s7 + $0x70] sm:$0xff]
  %v3708 = vld [vmem:[%s7 + $0x78] sm:$0xff]
  %3709 = vmatprep.subr.mxu0 0.0
  %3710 = vmatpush1.msra.mxu0 %v3708
  %3711 = vmatprep.subr.mxu0 0.0
  %3712 = vmatpush1.msra.mxu0 %v3707
  %3713 = vmatprep.subr.mxu0 0.0
  %3714 = vmatpush1.msra.mxu0 %v3706
  %3715 = vmatprep.subr.mxu0 0.0
  %3716 = vmatpush1.msra.mxu0 %v3705
  %3717 = vmatprep.subr.mxu0 0.0
  %3718 = vmatpush1.msra.mxu0 %v3704
  %3719 = vmatprep.subr.mxu0 0.0
  %3720 = vmatpush1.msra.mxu0 %v3703
  %3721 = vmatprep.subr.mxu0 0.0
  %3722 = vmatpush1.msra.mxu0 %v3702
  %3723 = vmatprep.subr.mxu0 0.0
  %3724 = vmatpush1.msra.mxu0 %v3701
  %3725 = vmatprep.subr.mxu0 0.0
  %3726 = vmatpush1.msra.mxu0 %v3700
  %3727 = vmatprep.subr.mxu0 0.0
  %3728 = vmatpush1.msra.mxu0 %v3699
  %3729 = vmatprep.subr.mxu0 0.0
  %3730 = vmatpush1.msra.mxu0 %v3698
  %3731 = vmatprep.subr.mxu0 0.0
  %3732 = vmatpush1.msra.mxu0 %v3697
  %3733 = vmatprep.subr.mxu0 0.0
  %3734 = vmatpush1.msra.mxu0 %v3696
  %3735 = vmatprep.subr.mxu0 0.0
  %3736 = vmatpush1.msra.mxu0 %v3695
  %3737 = vmatprep.subr.mxu0 0.0
  %3738 = vmatpush1.msra.mxu0 %v3694
  %3739 = vmatprep.subr.mxu0 0.0
  %3740 = vmatpush1.msra.mxu0 %v3693
  %3741 = vmatprep.subr.mxu0 0.0
  %3742 = vmatpush2.msra.mxu0 0.0
  %3743 = vmatprep.subr.mxu0 0.0
  %3744 = vmatpush2.msra.mxu0 0.0
  %3745 = vmatprep.subr.mxu0 0.0
  %3746 = vmatpush2.msra.mxu0 0.0
  %3747 = vmatprep.subr.mxu0 0.0
  %3748 = vmatpush2.msra.mxu0 0.0
  %3749 = vmatprep.subr.mxu0 0.0
  %3750 = vmatpush2.msra.mxu0 0.0
  %3751 = vmatprep.subr.mxu0 0.0
  %3752 = vmatpush2.msra.mxu0 0.0
  %3753 = vmatprep.subr.mxu0 0.0
  %3754 = vmatpush2.msra.mxu0 0.0
  %3755 = vmatprep.subr.mxu0 0.0
  %3756 = vmatpush2.msra.mxu0 0.0
  %3757 = vmatprep.subr.mxu0 0.0
  %3758 = vmatpush2.msra.mxu0 0.0
  %3759 = vmatprep.subr.mxu0 0.0
  %3760 = vmatpush2.msra.mxu0 0.0
  %3761 = vmatprep.subr.mxu0 0.0
  %3762 = vmatpush2.msra.mxu0 0.0
  %3763 = vmatprep.subr.mxu0 0.0
  %3764 = vmatpush2.msra.mxu0 0.0
  %3765 = vmatprep.subr.mxu0 0.0
  %3766 = vmatpush2.msra.mxu0 0.0
  %3767 = vmatprep.subr.mxu0 0.0
  %3768 = vmatpush2.msra.mxu0 0.0
  %3769 = vmatprep.subr.mxu0 0.0
  %3770 = vmatpush2.msra.mxu0 0.0
  %3771 = vmatprep.subr.mxu0 0.0
  %3772 = vmatpush2.msra.mxu0 0.0
  %3773 = vmatprep.mubr.f32.mxu0 0.0
  %3774 = vmatmul.mubr.f32.gmra.mxu0 %v3689
  %v3775 = vpop.f32.mrf.mxu0
  %v3776 = vadd.f32 %v94, %v3775
  %v3777 = vpop.f32.mrf.mxu0
  %3778 = vmatprep.mubr.f32.mxu0 0.0
  %3779 = vmatmul.mubr.f32.gmra.mxu0 %v3690
  %v3780 = vpop.f32.mrf.mxu0
  %v3781 = vadd.f32 %v94, %v3780
  %v3782 = vpop.f32.mrf.mxu0
  %3783 = vmatprep.mubr.f32.mxu0 0.0
  %3784 = vmatmul.mubr.f32.gmra.mxu0 %v3691
  %v3785 = vpop.f32.mrf.mxu0
  %v3786 = vadd.f32 %v94, %v3785
  %v3787 = vpop.f32.mrf.mxu0
  %3788 = vmatprep.mubr.f32.mxu0 0.0
  %3789 = vmatmul.mubr.f32.gmra.mxu0 %v3692
  %v3790 = vpop.f32.mrf.mxu0
  %v3791 = vadd.f32 %v94, %v3790
  %v3792 = vpop.f32.mrf.mxu0
  %3793 = vdwg.mxu0
  %v3794 = vmax.f32 %v3776, 0.0
  %v3795 = vmax.f32 %v3781, 0.0
  %v3796 = vmax.f32 %v3786, 0.0
  %v3797 = vmax.f32 %v3791, 0.0
  %3798 = vst [vmem:[%s9] sm:$0xff] %v3794
  %3799 = vst [vmem:[%s9 + $0x8] sm:$0xff] %v3795
  %3800 = vst [vmem:[%s9 + $0x10] sm:$0xff] %v3796
  %3801 = vst [vmem:[%s9 + $0x18] sm:$0xff] %v3797
  %3802 = vst [vmem:[%s10] sm:$0xff] %v3689
  %3803 = vst [vmem:[%s10 + $0x8] sm:$0xff] %v3690
  %3804 = vst [vmem:[%s10 + $0x10] sm:$0xff] %v3691
  %3805 = vst [vmem:[%s10 + $0x18] sm:$0xff] %v3692
  // Predicated region
  $region38: #{encoder_forward.1} parent=0 // pred_check
    _
  $region39: #{encoder_forward.1} parent=0 // pred_check_branch
    %3807 = sbr.rel (0) target = $region41
  $region40: #{encoder_forward.1} parent=0 // pred_region
    _
  $region41: #{encoder_forward.1} parent=0 // pred_fallthru
    _
  // Predicated region
  $region42: #{encoder_forward.1} parent=0 // pred_check
    _
  $region43: #{encoder_forward.1} parent=0 // pred_check_branch
    %3809 = sbr.rel (0) target = $region45
  $region44: #{encoder_forward.1} parent=0 // pred_region
    _
  $region45: #{encoder_forward.1} parent=0 // pred_fallthru
    _
  // Predicated region
  $region46: #{encoder_forward.1} parent=0 // pred_check
    _
  $region47: #{encoder_forward.1} parent=0 // pred_check_branch
    %3811 = sbr.rel (0) target = $region49
  $region48: #{encoder_forward.1} parent=0 // pred_region
    _
  $region49: #{encoder_forward.1} parent=0 // pred_fallthru
    _
  // Predicated region
  $region50: #{encoder_forward.1} parent=0 // pred_check
    _
  $region51: #{encoder_forward.1} parent=0 // pred_check_branch
    %3813 = sbr.rel (0) target = $region53
  $region52: #{encoder_forward.1} parent=0 // pred_region
    _
  $region53: #{encoder_forward.1} parent=0 // pred_fallthru
    _

</llo_original>
